<compile_context>
chip_gen: v5e
topology: v5e:2x2
jax: 0.10.0
libtpu: 0.0.40
codegen_flags: <defaults>
</compile_context>

<pallas_src>
import math

import jax
import jax.numpy as jnp
from jax import lax
from jax.experimental import pallas as pl
from jax.experimental.pallas import tpu as pltpu


_LC = 128    # lane chunk (keeps every slab a multiple of 128 lanes)
_HSUB = 8    # heads processed at once inside a block (sublane granularity)


def _sskernel_diag_kernel(dtA_re_ref, dtA_im_ref, ce_re_ref, ce_im_ref, k_ref):
    """One grid step: a (channels, h_block, l_tile) slab of K.

    K[c,h,l] = Re( sum_n Ceff[c,h,n] * exp(dtA[h,n]*l) )   (2x folded into Ceff).
    """
    Ch, Hb, L_tile = k_ref.shape
    n_chunks = L_tile // _LC
    n_sub = Hb // _HSUB

    # Absolute position of the first lane of this L tile.
    l0 = pl.program_id(1) * L_tile
    j = lax.broadcasted_iota(jnp.int32, (1, 1, _LC), 2)
    phase = (l0 + j).astype(jnp.float32)                       # (1, 1, LC)

    def h_body(s, carry):
        h0 = pl.multiple_of(s * _HSUB, _HSUB)
        a_re = dtA_re_ref[pl.ds(h0, _HSUB), :]                 # (8, Nh)
        a_im = dtA_im_ref[pl.ds(h0, _HSUB), :]
        c_re = ce_re_ref[:, pl.ds(h0, _HSUB), :]               # (Ch, 8, Nh)
        c_im = ce_im_ref[:, pl.ds(h0, _HSUB), :]

        # Exact base Vandermonde chunk: V[h,n,j] = exp(dtA*(l0+j)), j=0..127.
        p_re = a_re[:, :, None] * phase                        # (8, Nh, LC)
        p_im = a_im[:, :, None] * phase
        mag = jnp.exp(p_re)
        v_re = mag * jnp.cos(p_im)
        v_im = mag * jnp.sin(p_im)

        # Constant per-chunk advance factor exp(dtA * LC)  (tiny EUP cost).
        e = jnp.exp(a_re * float(_LC))
        s_re = (e * jnp.cos(a_im * float(_LC)))[None]          # (1, 8, Nh)
        s_im = (e * jnp.sin(a_im * float(_LC)))[None]

        def c_body(c, coeffs):
            cr, ci = coeffs                                    # (Ch, 8, Nh)
            # Re( sum_n coeff * V )  for this 128-lane chunk.
            prod = (cr[:, :, :, None] * v_re[None]
                    - ci[:, :, :, None] * v_im[None])          # (Ch, 8, Nh, LC)
            out = jnp.sum(prod, axis=2)                        # (Ch, 8, LC)
            off = pl.multiple_of(c * _LC, _LC)
            k_ref[:, pl.ds(h0, _HSUB), pl.ds(off, _LC)] = out
            # Advance coefficients by one chunk: coeff *= exp(dtA*LC).
            ncr = cr * s_re - ci * s_im
            nci = cr * s_im + ci * s_re
            return ncr, nci

        lax.fori_loop(0, n_chunks, c_body, (c_re, c_im), unroll=True)
        return carry

    lax.fori_loop(0, n_sub, h_body, 0, unroll=False)


def _pick_h_block(H):
    """Largest multiple-of-8 divisor of H up to 64 (amortizes per-step overhead)."""
    assert H % _HSUB == 0, "H must be a multiple of 8"
    hb = _HSUB
    for cand in range(_HSUB, min(H, 64) + 1, _HSUB):
        if H % cand == 0:
            hb = cand
    return hb


def sskernel_forward(log_dt, A, B, C, L, *, h_block=None, l_tile=None):
    """SSKernel.forward(L=L) for mode='diag' (S4D). Returns (K, K_state=None)."""
    channels, H, Nh = C.shape
    assert A.shape == (H, Nh) and B.shape == (H, Nh)
    assert H % _HSUB == 0

    # ---- ZOH / coefficient prologue: once, in plain JAX (O(channels*H*Nh)) ----
    dt = jnp.exp(log_dt.astype(jnp.float32)).reshape(H, 1)
    A = A.astype(jnp.complex64)
    dtA = A * dt                                                    # (H, Nh)
    # Factor 2 of "2*Re(...)" folded into the coefficients here.
    Ceff = 2.0 * (B.astype(jnp.complex64)[None] * C.astype(jnp.complex64)) \
        * (jnp.exp(dtA) - 1.0) / A                                  # (Ch, H, Nh)

    dtA_re = jnp.real(dtA).astype(jnp.float32)
    dtA_im = jnp.imag(dtA).astype(jnp.float32)
    ce_re = jnp.real(Ceff).astype(jnp.float32)
    ce_im = jnp.imag(Ceff).astype(jnp.float32)

    # ---- tiling ----
    if h_block is None:
        h_block = _pick_h_block(H)
    assert H % h_block == 0 and h_block % _HSUB == 0

    if l_tile is None:
        l_tile = min(pl.cdiv(L, _LC), 8) * _LC      # up to 1024 lanes per grid step
    assert l_tile % _LC == 0
    L_pad = pl.cdiv(L, l_tile) * l_tile             # lane-dense, 128-aligned output

    hn_spec = pl.BlockSpec((h_block, Nh), lambda i, l: (i, 0))
    chn_spec = pl.BlockSpec((channels, h_block, Nh), lambda i, l: (0, i, 0))

    K = pl.pallas_call(
        _sskernel_diag_kernel,
        out_shape=jax.ShapeDtypeStruct((channels, H, L_pad), jnp.float32),
        grid_spec=pltpu.PrefetchScalarGridSpec(
            num_scalar_prefetch=0,
            grid=(H // h_block, L_pad // l_tile),
            in_specs=[hn_spec, hn_spec, chn_spec, chn_spec],
            out_specs=pl.BlockSpec((channels, h_block, l_tile),
                                   lambda i, l: (0, i, l)),
        ),
        compiler_params=pltpu.CompilerParams(
            dimension_semantics=("parallel", "parallel")),
    )(dtA_re, dtA_im, ce_re, ce_im)

    if L_pad != L:
        K = K[:, :, :L]
    return K, None   # (K, K_state); K_state is None when no initial state is given
    # TODO(synk): state/rate arguments, step()/default_state() and the NPLR/shift/EMA
    # kernel modes are not implemented; only the diag (S4D) convolution kernel is.


def _reference_K(log_dt, A, B, C, L):
    """Pure-JAX SSKernelDiag.forward (disc='zoh', state=None, rate=1)."""
    dt = jnp.exp(log_dt)[:, None]
    dtA = A * dt
    Ce = (B[None] * C) * (jnp.exp(dtA) - 1.0) / A                           # (Ch,H,Nh)
    V = jnp.exp(dtA[:, :, None] * jnp.arange(L)[None, None, :])             # (H,Nh,L)
    return 2.0 * jnp.real(jnp.sum(Ce[:, :, :, None] * V[None], axis=2))     # (Ch,H,L)


def _make_params(key, H, Nh, channels, dt_min=0.001, dt_max=0.1):
    """Deterministic parameter setup mirroring SSKernel.__init__
    (mode='diag', measure='diag-lin', n_ssm=H)."""
    k1, k2, k3 = jax.random.split(key, 3)
    log_dt = (jax.random.uniform(k1, (H,), dtype=jnp.float32)
              * (math.log(dt_max) - math.log(dt_min)) + math.log(dt_min))
    # diag-lin: A = -1/2 + i*pi*n
    A = (-0.5 * jnp.ones((H, Nh))
         + 1j * (math.pi * jnp.arange(Nh))[None, :]).astype(jnp.complex64)
    B = jnp.ones((H, Nh), dtype=jnp.complex64)
    C0 = ((jax.random.normal(k2, (channels, H, Nh))
           + 1j * jax.random.normal(k3, (channels, H, Nh))) / math.sqrt(2)
          ).astype(jnp.complex64)
    C = C0 * B[None]   # SSKernel.__init__: C = C * B (B re-applied in forward())
    return log_dt, A, B, C


if __name__ == "__main__":
    key = jax.random.PRNGKey(0)
    k_a, k_b = jax.random.split(key)

    # --- test 1: module-consistent toy shapes (H=32, N=32 -> Nh=16, L=64, Ch=1) ---
    H, Nh, L, channels = 32, 16, 64, 1
    log_dt, A, B, C = _make_params(k_a, H, Nh, channels)
    K, _ = sskernel_forward(log_dt, A, B, C, L)
    K = jax.block_until_ready(K)
    K_ref = _reference_K(log_dt, A, B, C, L)
    assert K.shape == (channels, H, L) and K.dtype == jnp.float32
    err = float(jnp.max(jnp.abs(K - K_ref)))
    assert jnp.allclose(K, K_ref, atol=1e-3, rtol=1e-3), err

    # --- test 2: exercises multi-chunk recurrence, multiple h / L grid steps ---
    H2, Nh2, L2, channels2 = 32, 16, 600, 2
    log_dt2, A2, B2, C2 = _make_params(k_b, H2, Nh2, channels2)
    K2, _ = sskernel_forward(log_dt2, A2, B2, C2, L2, h_block=16, l_tile=256)
    K2 = jax.block_until_ready(K2)
    K2_ref = _reference_K(log_dt2, A2, B2, C2, L2)
    assert K2.shape == (channels2, H2, L2) and K2.dtype == jnp.float32
    err2 = float(jnp.max(jnp.abs(K2 - K2_ref)))
    assert jnp.allclose(K2, K2_ref, atol=2e-3, rtol=2e-3), err2

    print("KERNEL_OK")
</pallas_src>

<mosaic_0001>
module attributes {stable_mosaic.version = 11 : i64} {
  func.func @_sskernel_diag_kernel(%arg0: i32, %arg1: i32, %arg2: memref<32x16xf32, #tpu.memory_space<vmem>>, %arg3: memref<32x16xf32, #tpu.memory_space<vmem>>, %arg4: memref<1x32x16xf32, #tpu.memory_space<vmem>>, %arg5: memref<1x32x16xf32, #tpu.memory_space<vmem>>, %arg6: memref<1x32x128xf32, #tpu.memory_space<vmem>>) attributes {dimension_semantics = [#tpu.dimension_semantics<parallel>, #tpu.dimension_semantics<parallel>], iteration_bounds = array<i64: 1, 1>, scalar_prefetch = 0 : i64, scratch_operands = 0 : i64, tpu.core_type = #tpu.core_type<tc>, window_params = [{transform_indices = @transform_0, window_bounds = array<i64: 32, 16>}, {transform_indices = @transform_1, window_bounds = array<i64: 32, 16>}, {transform_indices = @transform_2, window_bounds = array<i64: 1, 32, 16>}, {transform_indices = @transform_3, window_bounds = array<i64: 1, 32, 16>}, {transform_indices = @transform_4, window_bounds = array<i64: 1, 32, 128>}]} {
    %c128_i32 = arith.constant 128 : i32
    %0 = arith.muli %arg1, %c128_i32 : i32
    %1 = tpu.iota {dimensions = array<i32: 2>} : vector<1x1x128xi32>
    %2 = vector.broadcast %0 : i32 to vector<1x1x128xi32>
    %3 = arith.addi %2, %1 : vector<1x1x128xi32>
    %4 = arith.sitofp %3 : vector<1x1x128xi32> to vector<1x1x128xf32>
    %c0_i32 = arith.constant 0 : i32
    %c4_i32 = arith.constant 4 : i32
    %5 = arith.addi %c0_i32, %c4_i32 : i32
    %c1_i32 = arith.constant 1 : i32
    scf.for %arg7 = %c0_i32 to %5 step %c1_i32  : i32 {
      %c8_i32 = arith.constant 8 : i32
      %6 = arith.muli %arg7, %c8_i32 : i32
      %7 = tpu.assume_multiple %6, 8 : i32
      %8 = arith.index_cast %7 : i32 to index
      %c0 = arith.constant 0 : index
      %9 = vector.load %arg2[%8, %c0] : memref<32x16xf32, #tpu.memory_space<vmem>>, vector<8x16xf32>
      %10 = arith.index_cast %7 : i32 to index
      %c0_1 = arith.constant 0 : index
      %11 = vector.load %arg3[%10, %c0_1] : memref<32x16xf32, #tpu.memory_space<vmem>>, vector<8x16xf32>
      %c0_2 = arith.constant 0 : index
      %12 = arith.index_cast %7 : i32 to index
      %c0_3 = arith.constant 0 : index
      %13 = vector.load %arg4[%c0_2, %12, %c0_3] : memref<1x32x16xf32, #tpu.memory_space<vmem>>, vector<1x8x16xf32>
      %c0_4 = arith.constant 0 : index
      %14 = arith.index_cast %7 : i32 to index
      %c0_5 = arith.constant 0 : index
      %15 = vector.load %arg5[%c0_4, %14, %c0_5] : memref<1x32x16xf32, #tpu.memory_space<vmem>>, vector<1x8x16xf32>
      %16 = vector.shape_cast %9 : vector<8x16xf32> to vector<8x16x1xf32>
      %17 = vector.broadcast %16 : vector<8x16x1xf32> to vector<8x16x128xf32>
      %18 = vector.broadcast %4 : vector<1x1x128xf32> to vector<8x16x128xf32>
      %19 = arith.mulf %17, %18 : vector<8x16x128xf32>
      %20 = vector.shape_cast %11 : vector<8x16xf32> to vector<8x16x1xf32>
      %21 = vector.broadcast %20 : vector<8x16x1xf32> to vector<8x16x128xf32>
      %22 = vector.broadcast %4 : vector<1x1x128xf32> to vector<8x16x128xf32>
      %23 = arith.mulf %21, %22 : vector<8x16x128xf32>
      %24 = math.exp %19 : vector<8x16x128xf32>
      %25 = math.cos %23 : vector<8x16x128xf32>
      %26 = arith.mulf %24, %25 : vector<8x16x128xf32>
      %27 = math.sin %23 : vector<8x16x128xf32>
      %28 = arith.mulf %24, %27 : vector<8x16x128xf32>
      %cst = arith.constant 1.280000e+02 : f32
      %29 = vector.broadcast %cst : f32 to vector<8x16xf32>
      %30 = arith.mulf %9, %29 : vector<8x16xf32>
      %31 = math.exp %30 : vector<8x16xf32>
      %cst_6 = arith.constant 1.280000e+02 : f32
      %32 = vector.broadcast %cst_6 : f32 to vector<8x16xf32>
      %33 = arith.mulf %11, %32 : vector<8x16xf32>
      %34 = math.cos %33 : vector<8x16xf32>
      %35 = arith.mulf %31, %34 : vector<8x16xf32>
      %36 = vector.shape_cast %35 : vector<8x16xf32> to vector<1x8x16xf32>
      %cst_7 = arith.constant 1.280000e+02 : f32
      %37 = vector.broadcast %cst_7 : f32 to vector<8x16xf32>
      %38 = arith.mulf %11, %37 : vector<8x16xf32>
      %39 = math.sin %38 : vector<8x16xf32>
      %40 = arith.mulf %31, %39 : vector<8x16xf32>
      %41 = vector.shape_cast %40 : vector<8x16xf32> to vector<1x8x16xf32>
      %c0_i32_8 = arith.constant 0 : i32
      %42 = vector.shape_cast %13 : vector<1x8x16xf32> to vector<1x8x16x1xf32>
      %43 = vector.shape_cast %26 : vector<8x16x128xf32> to vector<1x8x16x128xf32>
      %44 = vector.broadcast %42 : vector<1x8x16x1xf32> to vector<1x8x16x128xf32>
      %45 = arith.mulf %44, %43 : vector<1x8x16x128xf32>
      %46 = vector.shape_cast %15 : vector<1x8x16xf32> to vector<1x8x16x1xf32>
      %47 = vector.shape_cast %28 : vector<8x16x128xf32> to vector<1x8x16x128xf32>
      %48 = vector.broadcast %46 : vector<1x8x16x1xf32> to vector<1x8x16x128xf32>
      %49 = arith.mulf %48, %47 : vector<1x8x16x128xf32>
      %50 = arith.subf %45, %49 : vector<1x8x16x128xf32>
      %cst_9 = arith.constant dense<0.000000e+00> : vector<1x8x128xf32>
      %51 = vector.multi_reduction <add>, %50, %cst_9 [2] : vector<1x8x16x128xf32> to vector<1x8x128xf32>
      %c128_i32_10 = arith.constant 128 : i32
      %52 = arith.muli %c0_i32_8, %c128_i32_10 : i32
      %53 = tpu.assume_multiple %52, 128 : i32
      %c0_11 = arith.constant 0 : index
      %54 = arith.index_cast %7 : i32 to index
      %55 = arith.index_cast %53 : i32 to index
      %56 = vector.load %arg6[%c0_11, %54, %55] : memref<1x32x128xf32, #tpu.memory_space<vmem>>, vector<1x8x128xf32>
      tpu.vector_store %arg6[%c0_11, %54, %55], %51 {strides = array<i32>} : memref<1x32x128xf32, #tpu.memory_space<vmem>>, vector<1x8x128xf32>,
      %57 = arith.mulf %13, %36 : vector<1x8x16xf32>
      %58 = arith.mulf %15, %41 : vector<1x8x16xf32>
      %59 = arith.subf %57, %58 : vector<1x8x16xf32>
      %60 = arith.mulf %13, %41 : vector<1x8x16xf32>
      %61 = arith.mulf %15, %36 : vector<1x8x16xf32>
      %62 = arith.addf %60, %61 : vector<1x8x16xf32>
      %c1_i32_12 = arith.constant 1 : i32
    }
    %c4_i32_0 = arith.constant 4 : i32
    return
  }
  func.func @transform_0(%arg0: i32, %arg1: i32) -> (i32, i32) {
    %c0_i32 = arith.constant 0 : i32
    %c0_i32_0 = arith.constant 0 : i32
    return %arg0, %c0_i32 : i32, i32
  }
  func.func @transform_1(%arg0: i32, %arg1: i32) -> (i32, i32) {
    %c0_i32 = arith.constant 0 : i32
    %c0_i32_0 = arith.constant 0 : i32
    return %arg0, %c0_i32 : i32, i32
  }
  func.func @transform_2(%arg0: i32, %arg1: i32) -> (i32, i32, i32) {
    %c0_i32 = arith.constant 0 : i32
    %c0_i32_0 = arith.constant 0 : i32
    %c0_i32_1 = arith.constant 0 : i32
    return %c0_i32, %arg0, %c0_i32_0 : i32, i32, i32
  }
  func.func @transform_3(%arg0: i32, %arg1: i32) -> (i32, i32, i32) {
    %c0_i32 = arith.constant 0 : i32
    %c0_i32_0 = arith.constant 0 : i32
    %c0_i32_1 = arith.constant 0 : i32
    return %c0_i32, %arg0, %c0_i32_0 : i32, i32, i32
  }
  func.func @transform_4(%arg0: i32, %arg1: i32) -> (i32, i32, i32) {
    %c0_i32 = arith.constant 0 : i32
    %c0_i32_0 = arith.constant 0 : i32
    return %c0_i32, %arg0, %arg1 : i32, i32, i32
  }
}

</mosaic_0001>

<llo_original>
// kernel: tpu_custom_call.1
$region0: #{tpu_custom_call.1}
  #allocation0 [shape = 'u32[]', space=smem, size = 0x4, offset = 0x4, fixed_abs, tag = 'smem constant byte address 0x4 - core index']
  #allocation1 [shape = 'u32[72,128]{1,0:T(1,128)}', space=vmem, size = 0x9000, scoped, tag = 'internal scratch']
  %s0 = inlined_call_operand.vmem [shape: f32[32,16], index: 0, kind: input, shape index: {}]
  %s1 = inlined_call_operand.vmem [shape: f32[32,16], index: 1, kind: input, shape index: {}]
  %s2 = inlined_call_operand.vmem [shape: f32[1,32,16], index: 2, kind: input, shape index: {}]
  %s3 = inlined_call_operand.vmem [shape: f32[1,32,16], index: 3, kind: input, shape index: {}]
  %s4 = inlined_call_operand.hbm [shape: f32[1,32,128], index: 4, kind: output, shape index: {}]
  %s5 = sld [smem:[#allocation0]]
  $region33: #{tpu_custom_call.1} parent=0
    _
  %s7 = ssub.s32 1, %s5
  %s8 = scalar_select 0, %s7, %s5
  $region1: #{tpu_custom_call.1} parent=0
    #allocation2 [shape = 'u8[16384]{0}', space=vmem, size = 0x4000, scoped, tag = 'output window, operand 0, single buffered']
    #allocation3 [shape = 's32[1]{0}', space=sflag, size = 0x4, scoped, tag = 'scoped memory for tpu_custom_call.1']
    %9 = vsyncpa [#allocation3], 0
    // Predicated region
    $region2: #{tpu_custom_call.1} parent=1 // pred_check
      _
    $region3: #{tpu_custom_call.1} parent=1 // pred_check_branch
      %11 = sbr.rel (0) target = $region5
    $region4: #{tpu_custom_call.1} parent=1 // pred_region
      _
    $region5: #{tpu_custom_call.1} parent=1 // pred_fallthru
      _
    // Predicated region
    $region6: #{tpu_custom_call.1} parent=1 // pred_check
      _
    $region7: #{tpu_custom_call.1} parent=1 // pred_check_branch
      %13 = sbr.rel (0) target = $region9
    $region8: #{tpu_custom_call.1} parent=1 // pred_region
      _
    $region9: #{tpu_custom_call.1} parent=1 // pred_fallthru
      _
    // Predicated region
    $region10: #{tpu_custom_call.1} parent=1 // pred_check
      _
    $region11: #{tpu_custom_call.1} parent=1 // pred_check_branch
      %15 = sbr.rel (0) target = $region13
    $region12: #{tpu_custom_call.1} parent=1 // pred_region
      _
    $region13: #{tpu_custom_call.1} parent=1 // pred_fallthru
      _
    // Predicated region
    $region14: #{tpu_custom_call.1} parent=1 // pred_check
      _
    $region15: #{tpu_custom_call.1} parent=1 // pred_check_branch
      %17 = sbr.rel (0) target = $region17
    $region16: #{tpu_custom_call.1} parent=1 // pred_region
      _
    $region17: #{tpu_custom_call.1} parent=1 // pred_fallthru
      _
    %s18 = smul.u32 0, 128
    %v19 = vlaneseq
    %v20 = vand.u32 %v19, 127
    %v21 = vstv %s18
    %v22 = vadd.s32 %v21, %v20
    %v23 = vcvt.s32.f32 %v22
    loop: start=0, step=1, limit=4
    $region18: #{tpu_custom_call.1} parent=1 // loop_pre_header
      _
    $region19: #{tpu_custom_call.1} parent=1 // loop_header
      %s25 = sphi 0, %s29
      %p26 = scmp.ge.s32.totalorder %s25, 4
    $region20: #{tpu_custom_call.1} parent=1 // loop_header_branch
      %28 = sbr.rel (%p26) target = $region24
    $region21: #{tpu_custom_call.1} parent=1 // loop_body
      %s30 = smul.u32 %s25, 8
      %s31 = scalar_lea.vmem %s0, %s30
      %v32 = vld [vmem:[%s31] sm:$0xff]
      %s33 = scalar_lea.vmem %s1, %s30
      %v34 = vld [vmem:[%s33] sm:$0xff]
      %s35 = scalar_lea.vmem %s2, %s30
      %v36 = vld [vmem:[%s35] sm:$0xff]
      %s37 = scalar_lea.vmem %s3, %s30
      %v38 = vld [vmem:[%s37] sm:$0xff]
      %v39 = vperm.slane %v32, 0
      %v40 = vlaneseq
      %v41 = vshrl.u32 %v40, 7
      %43 = vset.pattern.permute.xlu0 %v41
      %44 = vperm.xlu0 %43, %v39
      %v45 = vpop.permute.xlu0 %44
      %v46 = vlaneseq
      %v47 = vshrl.u32 %v46, 7
      %v48 = vadd.s32 %v47, 8
      %49 = vset.pattern.permute.xlu0 %v48
      %50 = vperm.xlu0 %49, %v39
      %v51 = vpop.permute.xlu0 %50
      %v52 = vperm.slane %v32, 1
      %v53 = vlaneseq
      %v54 = vshrl.u32 %v53, 7
      %56 = vset.pattern.permute.xlu0 %v54
      %57 = vperm.xlu0 %56, %v52
      %v58 = vpop.permute.xlu0 %57
      %v59 = vlaneseq
      %v60 = vshrl.u32 %v59, 7
      %v61 = vadd.s32 %v60, 8
      %62 = vset.pattern.permute.xlu0 %v61
      %63 = vperm.xlu0 %62, %v52
      %v64 = vpop.permute.xlu0 %63
      %v65 = vperm.slane %v32, 2
      %v66 = vlaneseq
      %v67 = vshrl.u32 %v66, 7
      %69 = vset.pattern.permute.xlu0 %v67
      %70 = vperm.xlu0 %69, %v65
      %v71 = vpop.permute.xlu0 %70
      %v72 = vlaneseq
      %v73 = vshrl.u32 %v72, 7
      %v74 = vadd.s32 %v73, 8
      %75 = vset.pattern.permute.xlu0 %v74
      %76 = vperm.xlu0 %75, %v65
      %v77 = vpop.permute.xlu0 %76
      %v78 = vperm.slane %v32, 3
      %v79 = vlaneseq
      %v80 = vshrl.u32 %v79, 7
      %82 = vset.pattern.permute.xlu0 %v80
      %83 = vperm.xlu0 %82, %v78
      %v84 = vpop.permute.xlu0 %83
      %v85 = vlaneseq
      %v86 = vshrl.u32 %v85, 7
      %v87 = vadd.s32 %v86, 8
      %88 = vset.pattern.permute.xlu0 %v87
      %89 = vperm.xlu0 %88, %v78
      %v90 = vpop.permute.xlu0 %89
      %v91 = vperm.slane %v32, 4
      %v92 = vlaneseq
      %v93 = vshrl.u32 %v92, 7
      %95 = vset.pattern.permute.xlu0 %v93
      %96 = vperm.xlu0 %95, %v91
      %v97 = vpop.permute.xlu0 %96
      %v98 = vlaneseq
      %v99 = vshrl.u32 %v98, 7
      %v100 = vadd.s32 %v99, 8
      %101 = vset.pattern.permute.xlu0 %v100
      %102 = vperm.xlu0 %101, %v91
      %v103 = vpop.permute.xlu0 %102
      %v104 = vperm.slane %v32, 5
      %v105 = vlaneseq
      %v106 = vshrl.u32 %v105, 7
      %108 = vset.pattern.permute.xlu0 %v106
      %109 = vperm.xlu0 %108, %v104
      %v110 = vpop.permute.xlu0 %109
      %v111 = vlaneseq
      %v112 = vshrl.u32 %v111, 7
      %v113 = vadd.s32 %v112, 8
      %114 = vset.pattern.permute.xlu0 %v113
      %115 = vperm.xlu0 %114, %v104
      %v116 = vpop.permute.xlu0 %115
      %v117 = vperm.slane %v32, 6
      %v118 = vlaneseq
      %v119 = vshrl.u32 %v118, 7
      %121 = vset.pattern.permute.xlu0 %v119
      %122 = vperm.xlu0 %121, %v117
      %v123 = vpop.permute.xlu0 %122
      %v124 = vlaneseq
      %v125 = vshrl.u32 %v124, 7
      %v126 = vadd.s32 %v125, 8
      %127 = vset.pattern.permute.xlu0 %v126
      %128 = vperm.xlu0 %127, %v117
      %v129 = vpop.permute.xlu0 %128
      %v130 = vperm.slane %v32, 7
      %v131 = vlaneseq
      %v132 = vshrl.u32 %v131, 7
      %134 = vset.pattern.permute.xlu0 %v132
      %135 = vperm.xlu0 %134, %v130
      %v136 = vpop.permute.xlu0 %135
      %v137 = vlaneseq
      %v138 = vshrl.u32 %v137, 7
      %v139 = vadd.s32 %v138, 8
      %140 = vset.pattern.permute.xlu0 %v139
      %141 = vperm.xlu0 %140, %v130
      %v142 = vpop.permute.xlu0 %141
      %v143 = vmul.f32 %v45, %v23
      %v144 = vmul.f32 %v51, %v23
      %v145 = vmul.f32 %v58, %v23
      %v146 = vmul.f32 %v64, %v23
      %v147 = vmul.f32 %v71, %v23
      %v148 = vmul.f32 %v77, %v23
      %v149 = vmul.f32 %v84, %v23
      %v150 = vmul.f32 %v90, %v23
      %v151 = vmul.f32 %v97, %v23
      %v152 = vmul.f32 %v103, %v23
      %v153 = vmul.f32 %v110, %v23
      %v154 = vmul.f32 %v116, %v23
      %v155 = vmul.f32 %v123, %v23
      %v156 = vmul.f32 %v129, %v23
      %v157 = vmul.f32 %v136, %v23
      %v158 = vmul.f32 %v142, %v23
      %v159 = vperm.slane %v34, 0
      %v160 = vlaneseq
      %v161 = vshrl.u32 %v160, 7
      %163 = vset.pattern.permute.xlu0 %v161
      %164 = vperm.xlu0 %163, %v159
      %v165 = vpop.permute.xlu0 %164
      %v166 = vlaneseq
      %v167 = vshrl.u32 %v166, 7
      %v168 = vadd.s32 %v167, 8
      %169 = vset.pattern.permute.xlu0 %v168
      %170 = vperm.xlu0 %169, %v159
      %v171 = vpop.permute.xlu0 %170
      %v172 = vperm.slane %v34, 1
      %v173 = vlaneseq
      %v174 = vshrl.u32 %v173, 7
      %176 = vset.pattern.permute.xlu0 %v174
      %177 = vperm.xlu0 %176, %v172
      %v178 = vpop.permute.xlu0 %177
      %v179 = vlaneseq
      %v180 = vshrl.u32 %v179, 7
      %v181 = vadd.s32 %v180, 8
      %182 = vset.pattern.permute.xlu0 %v181
      %183 = vperm.xlu0 %182, %v172
      %v184 = vpop.permute.xlu0 %183
      %v185 = vperm.slane %v34, 2
      %v186 = vlaneseq
      %v187 = vshrl.u32 %v186, 7
      %189 = vset.pattern.permute.xlu0 %v187
      %190 = vperm.xlu0 %189, %v185
      %v191 = vpop.permute.xlu0 %190
      %v192 = vlaneseq
      %v193 = vshrl.u32 %v192, 7
      %v194 = vadd.s32 %v193, 8
      %195 = vset.pattern.permute.xlu0 %v194
      %196 = vperm.xlu0 %195, %v185
      %v197 = vpop.permute.xlu0 %196
      %v198 = vperm.slane %v34, 3
      %v199 = vlaneseq
      %v200 = vshrl.u32 %v199, 7
      %202 = vset.pattern.permute.xlu0 %v200
      %203 = vperm.xlu0 %202, %v198
      %v204 = vpop.permute.xlu0 %203
      %v205 = vlaneseq
      %v206 = vshrl.u32 %v205, 7
      %v207 = vadd.s32 %v206, 8
      %208 = vset.pattern.permute.xlu0 %v207
      %209 = vperm.xlu0 %208, %v198
      %v210 = vpop.permute.xlu0 %209
      %v211 = vperm.slane %v34, 4
      %v212 = vlaneseq
      %v213 = vshrl.u32 %v212, 7
      %215 = vset.pattern.permute.xlu0 %v213
      %216 = vperm.xlu0 %215, %v211
      %v217 = vpop.permute.xlu0 %216
      %v218 = vlaneseq
      %v219 = vshrl.u32 %v218, 7
      %v220 = vadd.s32 %v219, 8
      %221 = vset.pattern.permute.xlu0 %v220
      %222 = vperm.xlu0 %221, %v211
      %v223 = vpop.permute.xlu0 %222
      %v224 = vperm.slane %v34, 5
      %v225 = vlaneseq
      %v226 = vshrl.u32 %v225, 7
      %228 = vset.pattern.permute.xlu0 %v226
      %229 = vperm.xlu0 %228, %v224
      %v230 = vpop.permute.xlu0 %229
      %v231 = vlaneseq
      %v232 = vshrl.u32 %v231, 7
      %v233 = vadd.s32 %v232, 8
      %234 = vset.pattern.permute.xlu0 %v233
      %235 = vperm.xlu0 %234, %v224
      %v236 = vpop.permute.xlu0 %235
      %v237 = vperm.slane %v34, 6
      %v238 = vlaneseq
      %v239 = vshrl.u32 %v238, 7
      %241 = vset.pattern.permute.xlu0 %v239
      %242 = vperm.xlu0 %241, %v237
      %v243 = vpop.permute.xlu0 %242
      %v244 = vlaneseq
      %v245 = vshrl.u32 %v244, 7
      %v246 = vadd.s32 %v245, 8
      %247 = vset.pattern.permute.xlu0 %v246
      %248 = vperm.xlu0 %247, %v237
      %v249 = vpop.permute.xlu0 %248
      %v250 = vperm.slane %v34, 7
      %v251 = vlaneseq
      %v252 = vshrl.u32 %v251, 7
      %254 = vset.pattern.permute.xlu0 %v252
      %255 = vperm.xlu0 %254, %v250
      %v256 = vpop.permute.xlu0 %255
      %v257 = vlaneseq
      %v258 = vshrl.u32 %v257, 7
      %v259 = vadd.s32 %v258, 8
      %260 = vset.pattern.permute.xlu0 %v259
      %261 = vperm.xlu0 %260, %v250
      %v262 = vpop.permute.xlu0 %261
      %v263 = vmul.f32 %v165, %v23
      %v264 = vmul.f32 %v171, %v23
      %v265 = vmul.f32 %v178, %v23
      %v266 = vmul.f32 %v184, %v23
      %v267 = vmul.f32 %v191, %v23
      %v268 = vmul.f32 %v197, %v23
      %v269 = vmul.f32 %v204, %v23
      %v270 = vmul.f32 %v210, %v23
      %v271 = vmul.f32 %v217, %v23
      %v272 = vmul.f32 %v223, %v23
      %v273 = vmul.f32 %v230, %v23
      %v274 = vmul.f32 %v236, %v23
      %v275 = vmul.f32 %v243, %v23
      %v276 = vmul.f32 %v249, %v23
      %v277 = vmul.f32 %v256, %v23
      %v278 = vmul.f32 %v262, %v23
      %v279 = vmul.f32 %v143, 1.442695
      %v280 = vpow.pop %v279
      %v281 = vmul.f32 %v144, 1.442695
      %v282 = vpow.pop %v281
      %v283 = vmul.f32 %v145, 1.442695
      %v284 = vpow.pop %v283
      %v285 = vmul.f32 %v146, 1.442695
      %v286 = vpow.pop %v285
      %v287 = vmul.f32 %v147, 1.442695
      %v288 = vpow.pop %v287
      %v289 = vmul.f32 %v148, 1.442695
      %v290 = vpow.pop %v289
      %v291 = vmul.f32 %v149, 1.442695
      %v292 = vpow.pop %v291
      %v293 = vmul.f32 %v150, 1.442695
      %v294 = vpow.pop %v293
      %v295 = vmul.f32 %v151, 1.442695
      %v296 = vpow.pop %v295
      %v297 = vmul.f32 %v152, 1.442695
      %v298 = vpow.pop %v297
      %v299 = vmul.f32 %v153, 1.442695
      %v300 = vpow.pop %v299
      %v301 = vmul.f32 %v154, 1.442695
      %v302 = vpow.pop %v301
      %v303 = vmul.f32 %v155, 1.442695
      %v304 = vpow.pop %v303
      %v305 = vmul.f32 %v156, 1.442695
      %v306 = vpow.pop %v305
      %v307 = vmul.f32 %v157, 1.442695
      %v308 = vpow.pop %v307
      %v309 = vmul.f32 %v158, 1.442695
      %v310 = vpow.pop %v309
      %v311 = vand.u32 2147483647, %v263
      %vm312 = vcmp.le.f32.partialorder %v311, 0.7853982
      %vm313 = vcmp.lt.s32.totalorder %v263, 0
      %v314 = vand.u32 %v263, 2139095040
      %v315 = vshrl.u32 %v314, 23
      %v316 = vsub.s32 %v315, 127
      %v317 = vand.u32 2147483647, %v263
      %v318 = vand.u32 %v317, 8388607
      %v319 = vor.u32 %v318, 8388608
      %v320 = vsub.s32 0, %v319
      %v321 = vadd.s32 %v316, 1
      %vm322 = vcmp.gt.s32.totalorder %v321, 0
      %v323 = vsel %vm322, %v321, 0
      %v324 = vshrl.u32 %v323, 5
      %v325 = vand.u32 %v323, 31
      %v326 = vsub.s32 32, %v325
      %v327 = vshrl.u32 683565275, %v326
      %v328 = vshll.u32 683565275, %v325
      %v329 = vshrl.u32 2475754826, %v326
      %v330 = vor.u32 %v328, %v329
      %v331 = vshll.u32 2475754826, %v325
      %v332 = vshrl.u32 2131351028, %v326
      %v333 = vor.u32 %v331, %v332
      %v334 = vshll.u32 2131351028, %v325
      %v335 = vshrl.u32 2102212464, %v326
      %v336 = vor.u32 %v334, %v335
      %v337 = vshll.u32 2102212464, %v325
      %v338 = vshrl.u32 920167782, %v326
      %v339 = vor.u32 %v337, %v338
      %v340 = vshll.u32 920167782, %v325
      %v341 = vshrl.u32 1326507024, %v326
      %v342 = vor.u32 %v340, %v341
      %vm343 = vcmp.lt.s32.totalorder %v324, 1
      %vm344 = vcmp.lt.s32.totalorder %v324, 2
      %vm345 = vcmp.lt.s32.totalorder %v324, 3
      %vm346 = vcmp.lt.s32.totalorder %v324, 4
      %v347 = vsel %vm343, %v327, %v330
      %v348 = vsel %vm346, %v336, 2102212464
      %v349 = vsel %vm345, %v333, %v348
      %v350 = vsel %vm344, %v347, %v349
      %v351 = vsel %vm343, %v330, %v333
      %v352 = vsel %vm346, %v339, 920167782
      %v353 = vsel %vm345, %v336, %v352
      %v354 = vsel %vm344, %v351, %v353
      %v355 = vsel %vm343, %v333, %v336
      %v356 = vsel %vm346, %v342, 1326507024
      %v357 = vsel %vm345, %v339, %v356
      %v358 = vsel %vm344, %v355, %v357
      %v359 = vshll.u32 %v319, 8
      %v360 = vand.u32 %v359, 65535
      %v361 = vshrl.u32 %v359, 16
      %v362 = vand.u32 %v358, 65535
      %v363 = vshrl.u32 %v358, 16
      %v364 = vmul.u32 %v360, %v362
      %v365 = vmul.u32 %v360, %v363
      %v366 = vmul.u32 %v361, %v362
      %v367 = vmul.u32 %v361, %v363
      %v368 = vshll.u32 %v365, 16
      %v369 = vshrl.u32 %v365, 16
      %v370 = vshll.u32 %v366, 16
      %v371 = vshrl.u32 %v366, 16
      %vm372 = vc.u32 %v364, %v368
      %v373 = vsel %vm372, 1, 0
      %v374 = vadd.s32 %v364, %v368
      %v375 = vadd.s32 %v367, %v373
      %vm376 = vc.u32 %v374, %v370
      %v377 = vsel %vm376, 1, 0
      %v378 = vadd.s32 %v374, %v370
      %v379 = vadd.s32 %v375, %v377
      %v380 = vadd.s32 %v379, %v369
      %v381 = vadd.s32 %v380, %v371
      %v382 = vand.u32 %v359, 65535
      %v383 = vshrl.u32 %v359, 16
      %v384 = vand.u32 %v354, 65535
      %v385 = vshrl.u32 %v354, 16
      %v386 = vmul.u32 %v382, %v384
      %v387 = vmul.u32 %v382, %v385
      %v388 = vmul.u32 %v383, %v384
      %v389 = vmul.u32 %v383, %v385
      %v390 = vshll.u32 %v387, 16
      %v391 = vshrl.u32 %v387, 16
      %v392 = vshll.u32 %v388, 16
      %v393 = vshrl.u32 %v388, 16
      %vm394 = vc.u32 %v386, %v390
      %v395 = vsel %vm394, 1, 0
      %v396 = vadd.s32 %v386, %v390
      %v397 = vadd.s32 %v389, %v395
      %vm398 = vc.u32 %v396, %v392
      %v399 = vsel %vm398, 1, 0
      %v400 = vadd.s32 %v396, %v392
      %v401 = vadd.s32 %v397, %v399
      %v402 = vadd.s32 %v401, %v391
      %v403 = vadd.s32 %v402, %v393
      %v404 = vmul.u32 %v359, %v350
      %v405 = vadd.s32 %v381, %v400
      %vm406 = vc.u32 %v381, %v400
      %v407 = vadd.s32 %v403, 1
      %v408 = vsel %vm406, %v407, %v403
      %v409 = vadd.s32 %v404, %v408
      %v410 = vadd.s32 %v409, 536870912
      %v411 = vshrl.u32 %v410, 30
      %v412 = vshll.u32 %v411, 30
      %v413 = vsub.s32 %v409, %v412
      %vm414 = vcmp.lt.s32.totalorder %v413, 0
      %v415 = vsub.s32 0, %v413
      %v416 = vsel %vm414, %v415, %v413
      %v417 = vclz %v416
      %v418 = vsub.s32 %v417, 2
      %vm419 = vcmp.gt.s32.totalorder 0, %v418
      %v420 = vsel %vm419, 0, %v418
      %v421 = vsub.s32 32, %v420
      %v422 = vshll.u32 %v413, %v420
      %v423 = vshrl.u32 %v405, %v421
      %v424 = vor.u32 %v422, %v423
      %v425 = vsub.s32 4294967266, %v420
      %v426 = vadd.s32 %v425, 127
      %v427 = vshll.u32 %v426, 23
      %v428 = vor.u32 4788187, %v427
      %v429 = vand.u32 2147483647, %v428
      %v431 = vcvt.s32.f32 %v424
      %v432 = vmul.f32 %v431, %v429
      %v433 = vxor.u32 %v432, 2147483648
      %v434 = vsel %vm313, %v433, %v432
      %v435 = vsub.s32 4, %v411
      %v436 = vsel %vm313, %v435, %v411
      %v437 = vsel %vm312, %v263, %v434
      %v438 = vsel %vm312, 0, %v436
      %v439 = vmul.f32 %v437, %v437
      %v440 = vmul.f32 %v439, -0.001358992
      %v441 = vadd.f32 %v440, 0.041655596
      %v442 = vmul.f32 %v439, %v441
      %v443 = vadd.f32 %v442, -0.4999988
      %v444 = vmul.f32 %v439, %v443
      %v445 = vadd.f32 1.0, %v444
      %v446 = vmul.f32 %v437, %v437
      %v447 = vmul.f32 %v446, -0.00019511016
      %v448 = vadd.f32 %v447, 0.008332121
      %v449 = vmul.f32 %v446, %v448
      %v450 = vadd.f32 %v449, -0.16666654
      %v451 = vmul.f32 %v446, %v450
      %v452 = vadd.f32 %v451, 1.0
      %v453 = vmul.f32 %v452, %v437
      %vm454 = vweird.f32 %v263
      %v455 = vand.u32 %v438, 3
      %vm456 = vcmp.lt.s32.totalorder %v455, 2
      %vm457 = vcmp.eq.s32.totalorder %v455, 0
      %v458 = vxor.u32 %v453, 2147483648
      %v459 = vsel %vm457, %v445, %v458
      %vm460 = vcmp.eq.s32.totalorder %v455, 2
      %v461 = vxor.u32 %v445, 2147483648
      %v462 = vsel %vm460, %v461, %v453
      %v463 = vsel %vm456, %v459, %v462
      %v464 = vsel %vm454, nan, %v463
      %v465 = vand.u32 2147483647, %v264
      %vm466 = vcmp.le.f32.partialorder %v465, 0.7853982
      %vm467 = vcmp.lt.s32.totalorder %v264, 0
      %v468 = vand.u32 %v264, 2139095040
      %v469 = vshrl.u32 %v468, 23
      %v470 = vsub.s32 %v469, 127
      %v471 = vand.u32 2147483647, %v264
      %v472 = vand.u32 %v471, 8388607
      %v473 = vor.u32 %v472, 8388608
      %v474 = vsub.s32 0, %v473
      %v475 = vadd.s32 %v470, 1
      %vm476 = vcmp.gt.s32.totalorder %v475, 0
      %v477 = vsel %vm476, %v475, 0
      %v478 = vshrl.u32 %v477, 5
      %v479 = vand.u32 %v477, 31
      %v480 = vsub.s32 32, %v479
      %v481 = vshrl.u32 683565275, %v480
      %v482 = vshll.u32 683565275, %v479
      %v483 = vshrl.u32 2475754826, %v480
      %v484 = vor.u32 %v482, %v483
      %v485 = vshll.u32 2475754826, %v479
      %v486 = vshrl.u32 2131351028, %v480
      %v487 = vor.u32 %v485, %v486
      %v488 = vshll.u32 2131351028, %v479
      %v489 = vshrl.u32 2102212464, %v480
      %v490 = vor.u32 %v488, %v489
      %v491 = vshll.u32 2102212464, %v479
      %v492 = vshrl.u32 920167782, %v480
      %v493 = vor.u32 %v491, %v492
      %v494 = vshll.u32 920167782, %v479
      %v495 = vshrl.u32 1326507024, %v480
      %v496 = vor.u32 %v494, %v495
      %vm497 = vcmp.lt.s32.totalorder %v478, 1
      %vm498 = vcmp.lt.s32.totalorder %v478, 2
      %vm499 = vcmp.lt.s32.totalorder %v478, 3
      %vm500 = vcmp.lt.s32.totalorder %v478, 4
      %v501 = vsel %vm497, %v481, %v484
      %v502 = vsel %vm500, %v490, 2102212464
      %v503 = vsel %vm499, %v487, %v502
      %v504 = vsel %vm498, %v501, %v503
      %v505 = vsel %vm497, %v484, %v487
      %v506 = vsel %vm500, %v493, 920167782
      %v507 = vsel %vm499, %v490, %v506
      %v508 = vsel %vm498, %v505, %v507
      %v509 = vsel %vm497, %v487, %v490
      %v510 = vsel %vm500, %v496, 1326507024
      %v511 = vsel %vm499, %v493, %v510
      %v512 = vsel %vm498, %v509, %v511
      %v513 = vshll.u32 %v473, 8
      %v514 = vand.u32 %v513, 65535
      %v515 = vshrl.u32 %v513, 16
      %v516 = vand.u32 %v512, 65535
      %v517 = vshrl.u32 %v512, 16
      %v518 = vmul.u32 %v514, %v516
      %v519 = vmul.u32 %v514, %v517
      %v520 = vmul.u32 %v515, %v516
      %v521 = vmul.u32 %v515, %v517
      %v522 = vshll.u32 %v519, 16
      %v523 = vshrl.u32 %v519, 16
      %v524 = vshll.u32 %v520, 16
      %v525 = vshrl.u32 %v520, 16
      %vm526 = vc.u32 %v518, %v522
      %v527 = vsel %vm526, 1, 0
      %v528 = vadd.s32 %v518, %v522
      %v529 = vadd.s32 %v521, %v527
      %vm530 = vc.u32 %v528, %v524
      %v531 = vsel %vm530, 1, 0
      %v532 = vadd.s32 %v528, %v524
      %v533 = vadd.s32 %v529, %v531
      %v534 = vadd.s32 %v533, %v523
      %v535 = vadd.s32 %v534, %v525
      %v536 = vand.u32 %v513, 65535
      %v537 = vshrl.u32 %v513, 16
      %v538 = vand.u32 %v508, 65535
      %v539 = vshrl.u32 %v508, 16
      %v540 = vmul.u32 %v536, %v538
      %v541 = vmul.u32 %v536, %v539
      %v542 = vmul.u32 %v537, %v538
      %v543 = vmul.u32 %v537, %v539
      %v544 = vshll.u32 %v541, 16
      %v545 = vshrl.u32 %v541, 16
      %v546 = vshll.u32 %v542, 16
      %v547 = vshrl.u32 %v542, 16
      %vm548 = vc.u32 %v540, %v544
      %v549 = vsel %vm548, 1, 0
      %v550 = vadd.s32 %v540, %v544
      %v551 = vadd.s32 %v543, %v549
      %vm552 = vc.u32 %v550, %v546
      %v553 = vsel %vm552, 1, 0
      %v554 = vadd.s32 %v550, %v546
      %v555 = vadd.s32 %v551, %v553
      %v556 = vadd.s32 %v555, %v545
      %v557 = vadd.s32 %v556, %v547
      %v558 = vmul.u32 %v513, %v504
      %v559 = vadd.s32 %v535, %v554
      %vm560 = vc.u32 %v535, %v554
      %v561 = vadd.s32 %v557, 1
      %v562 = vsel %vm560, %v561, %v557
      %v563 = vadd.s32 %v558, %v562
      %v564 = vadd.s32 %v563, 536870912
      %v565 = vshrl.u32 %v564, 30
      %v566 = vshll.u32 %v565, 30
      %v567 = vsub.s32 %v563, %v566
      %vm568 = vcmp.lt.s32.totalorder %v567, 0
      %v569 = vsub.s32 0, %v567
      %v570 = vsel %vm568, %v569, %v567
      %v571 = vclz %v570
      %v572 = vsub.s32 %v571, 2
      %vm573 = vcmp.gt.s32.totalorder 0, %v572
      %v574 = vsel %vm573, 0, %v572
      %v575 = vsub.s32 32, %v574
      %v576 = vshll.u32 %v567, %v574
      %v577 = vshrl.u32 %v559, %v575
      %v578 = vor.u32 %v576, %v577
      %v579 = vsub.s32 4294967266, %v574
      %v580 = vadd.s32 %v579, 127
      %v581 = vshll.u32 %v580, 23
      %v582 = vor.u32 4788187, %v581
      %v583 = vand.u32 2147483647, %v582
      %v585 = vcvt.s32.f32 %v578
      %v586 = vmul.f32 %v585, %v583
      %v587 = vxor.u32 %v586, 2147483648
      %v588 = vsel %vm467, %v587, %v586
      %v589 = vsub.s32 4, %v565
      %v590 = vsel %vm467, %v589, %v565
      %v591 = vsel %vm466, %v264, %v588
      %v592 = vsel %vm466, 0, %v590
      %v593 = vmul.f32 %v591, %v591
      %v594 = vmul.f32 %v593, -0.001358992
      %v595 = vadd.f32 %v594, 0.041655596
      %v596 = vmul.f32 %v593, %v595
      %v597 = vadd.f32 %v596, -0.4999988
      %v598 = vmul.f32 %v593, %v597
      %v599 = vadd.f32 1.0, %v598
      %v600 = vmul.f32 %v591, %v591
      %v601 = vmul.f32 %v600, -0.00019511016
      %v602 = vadd.f32 %v601, 0.008332121
      %v603 = vmul.f32 %v600, %v602
      %v604 = vadd.f32 %v603, -0.16666654
      %v605 = vmul.f32 %v600, %v604
      %v606 = vadd.f32 %v605, 1.0
      %v607 = vmul.f32 %v606, %v591
      %vm608 = vweird.f32 %v264
      %v609 = vand.u32 %v592, 3
      %vm610 = vcmp.lt.s32.totalorder %v609, 2
      %vm611 = vcmp.eq.s32.totalorder %v609, 0
      %v612 = vxor.u32 %v607, 2147483648
      %v613 = vsel %vm611, %v599, %v612
      %vm614 = vcmp.eq.s32.totalorder %v609, 2
      %v615 = vxor.u32 %v599, 2147483648
      %v616 = vsel %vm614, %v615, %v607
      %v617 = vsel %vm610, %v613, %v616
      %v618 = vsel %vm608, nan, %v617
      %v619 = vand.u32 2147483647, %v265
      %vm620 = vcmp.le.f32.partialorder %v619, 0.7853982
      %vm621 = vcmp.lt.s32.totalorder %v265, 0
      %v622 = vand.u32 %v265, 2139095040
      %v623 = vshrl.u32 %v622, 23
      %v624 = vsub.s32 %v623, 127
      %v625 = vand.u32 2147483647, %v265
      %v626 = vand.u32 %v625, 8388607
      %v627 = vor.u32 %v626, 8388608
      %v628 = vsub.s32 0, %v627
      %v629 = vadd.s32 %v624, 1
      %vm630 = vcmp.gt.s32.totalorder %v629, 0
      %v631 = vsel %vm630, %v629, 0
      %v632 = vshrl.u32 %v631, 5
      %v633 = vand.u32 %v631, 31
      %v634 = vsub.s32 32, %v633
      %v635 = vshrl.u32 683565275, %v634
      %v636 = vshll.u32 683565275, %v633
      %v637 = vshrl.u32 2475754826, %v634
      %v638 = vor.u32 %v636, %v637
      %v639 = vshll.u32 2475754826, %v633
      %v640 = vshrl.u32 2131351028, %v634
      %v641 = vor.u32 %v639, %v640
      %v642 = vshll.u32 2131351028, %v633
      %v643 = vshrl.u32 2102212464, %v634
      %v644 = vor.u32 %v642, %v643
      %v645 = vshll.u32 2102212464, %v633
      %v646 = vshrl.u32 920167782, %v634
      %v647 = vor.u32 %v645, %v646
      %v648 = vshll.u32 920167782, %v633
      %v649 = vshrl.u32 1326507024, %v634
      %v650 = vor.u32 %v648, %v649
      %vm651 = vcmp.lt.s32.totalorder %v632, 1
      %vm652 = vcmp.lt.s32.totalorder %v632, 2
      %vm653 = vcmp.lt.s32.totalorder %v632, 3
      %vm654 = vcmp.lt.s32.totalorder %v632, 4
      %v655 = vsel %vm651, %v635, %v638
      %v656 = vsel %vm654, %v644, 2102212464
      %v657 = vsel %vm653, %v641, %v656
      %v658 = vsel %vm652, %v655, %v657
      %v659 = vsel %vm651, %v638, %v641
      %v660 = vsel %vm654, %v647, 920167782
      %v661 = vsel %vm653, %v644, %v660
      %v662 = vsel %vm652, %v659, %v661
      %v663 = vsel %vm651, %v641, %v644
      %v664 = vsel %vm654, %v650, 1326507024
      %v665 = vsel %vm653, %v647, %v664
      %v666 = vsel %vm652, %v663, %v665
      %v667 = vshll.u32 %v627, 8
      %v668 = vand.u32 %v667, 65535
      %v669 = vshrl.u32 %v667, 16
      %v670 = vand.u32 %v666, 65535
      %v671 = vshrl.u32 %v666, 16
      %v672 = vmul.u32 %v668, %v670
      %v673 = vmul.u32 %v668, %v671
      %v674 = vmul.u32 %v669, %v670
      %v675 = vmul.u32 %v669, %v671
      %v676 = vshll.u32 %v673, 16
      %v677 = vshrl.u32 %v673, 16
      %v678 = vshll.u32 %v674, 16
      %v679 = vshrl.u32 %v674, 16
      %vm680 = vc.u32 %v672, %v676
      %v681 = vsel %vm680, 1, 0
      %v682 = vadd.s32 %v672, %v676
      %v683 = vadd.s32 %v675, %v681
      %vm684 = vc.u32 %v682, %v678
      %v685 = vsel %vm684, 1, 0
      %v686 = vadd.s32 %v682, %v678
      %v687 = vadd.s32 %v683, %v685
      %v688 = vadd.s32 %v687, %v677
      %v689 = vadd.s32 %v688, %v679
      %v690 = vand.u32 %v667, 65535
      %v691 = vshrl.u32 %v667, 16
      %v692 = vand.u32 %v662, 65535
      %v693 = vshrl.u32 %v662, 16
      %v694 = vmul.u32 %v690, %v692
      %v695 = vmul.u32 %v690, %v693
      %v696 = vmul.u32 %v691, %v692
      %v697 = vmul.u32 %v691, %v693
      %v698 = vshll.u32 %v695, 16
      %v699 = vshrl.u32 %v695, 16
      %v700 = vshll.u32 %v696, 16
      %v701 = vshrl.u32 %v696, 16
      %vm702 = vc.u32 %v694, %v698
      %v703 = vsel %vm702, 1, 0
      %v704 = vadd.s32 %v694, %v698
      %v705 = vadd.s32 %v697, %v703
      %vm706 = vc.u32 %v704, %v700
      %v707 = vsel %vm706, 1, 0
      %v708 = vadd.s32 %v704, %v700
      %v709 = vadd.s32 %v705, %v707
      %v710 = vadd.s32 %v709, %v699
      %v711 = vadd.s32 %v710, %v701
      %v712 = vmul.u32 %v667, %v658
      %v713 = vadd.s32 %v689, %v708
      %vm714 = vc.u32 %v689, %v708
      %v715 = vadd.s32 %v711, 1
      %v716 = vsel %vm714, %v715, %v711
      %v717 = vadd.s32 %v712, %v716
      %v718 = vadd.s32 %v717, 536870912
      %v719 = vshrl.u32 %v718, 30
      %v720 = vshll.u32 %v719, 30
      %v721 = vsub.s32 %v717, %v720
      %vm722 = vcmp.lt.s32.totalorder %v721, 0
      %v723 = vsub.s32 0, %v721
      %v724 = vsel %vm722, %v723, %v721
      %v725 = vclz %v724
      %v726 = vsub.s32 %v725, 2
      %vm727 = vcmp.gt.s32.totalorder 0, %v726
      %v728 = vsel %vm727, 0, %v726
      %v729 = vsub.s32 32, %v728
      %v730 = vshll.u32 %v721, %v728
      %v731 = vshrl.u32 %v713, %v729
      %v732 = vor.u32 %v730, %v731
      %v733 = vsub.s32 4294967266, %v728
      %v734 = vadd.s32 %v733, 127
      %v735 = vshll.u32 %v734, 23
      %v736 = vor.u32 4788187, %v735
      %v737 = vand.u32 2147483647, %v736
      %v739 = vcvt.s32.f32 %v732
      %v740 = vmul.f32 %v739, %v737
      %v741 = vxor.u32 %v740, 2147483648
      %v742 = vsel %vm621, %v741, %v740
      %v743 = vsub.s32 4, %v719
      %v744 = vsel %vm621, %v743, %v719
      %v745 = vsel %vm620, %v265, %v742
      %v746 = vsel %vm620, 0, %v744
      %v747 = vmul.f32 %v745, %v745
      %v748 = vmul.f32 %v747, -0.001358992
      %v749 = vadd.f32 %v748, 0.041655596
      %v750 = vmul.f32 %v747, %v749
      %v751 = vadd.f32 %v750, -0.4999988
      %v752 = vmul.f32 %v747, %v751
      %v753 = vadd.f32 1.0, %v752
      %v754 = vmul.f32 %v745, %v745
      %v755 = vmul.f32 %v754, -0.00019511016
      %v756 = vadd.f32 %v755, 0.008332121
      %v757 = vmul.f32 %v754, %v756
      %v758 = vadd.f32 %v757, -0.16666654
      %v759 = vmul.f32 %v754, %v758
      %v760 = vadd.f32 %v759, 1.0
      %v761 = vmul.f32 %v760, %v745
      %vm762 = vweird.f32 %v265
      %v763 = vand.u32 %v746, 3
      %vm764 = vcmp.lt.s32.totalorder %v763, 2
      %vm765 = vcmp.eq.s32.totalorder %v763, 0
      %v766 = vxor.u32 %v761, 2147483648
      %v767 = vsel %vm765, %v753, %v766
      %vm768 = vcmp.eq.s32.totalorder %v763, 2
      %v769 = vxor.u32 %v753, 2147483648
      %v770 = vsel %vm768, %v769, %v761
      %v771 = vsel %vm764, %v767, %v770
      %v772 = vsel %vm762, nan, %v771
      %v773 = vand.u32 2147483647, %v266
      %vm774 = vcmp.le.f32.partialorder %v773, 0.7853982
      %vm775 = vcmp.lt.s32.totalorder %v266, 0
      %v776 = vand.u32 %v266, 2139095040
      %v777 = vshrl.u32 %v776, 23
      %v778 = vsub.s32 %v777, 127
      %v779 = vand.u32 2147483647, %v266
      %v780 = vand.u32 %v779, 8388607
      %v781 = vor.u32 %v780, 8388608
      %v782 = vsub.s32 0, %v781
      %v783 = vadd.s32 %v778, 1
      %vm784 = vcmp.gt.s32.totalorder %v783, 0
      %v785 = vsel %vm784, %v783, 0
      %v786 = vshrl.u32 %v785, 5
      %v787 = vand.u32 %v785, 31
      %v788 = vsub.s32 32, %v787
      %v789 = vshrl.u32 683565275, %v788
      %v790 = vshll.u32 683565275, %v787
      %v791 = vshrl.u32 2475754826, %v788
      %v792 = vor.u32 %v790, %v791
      %v793 = vshll.u32 2475754826, %v787
      %v794 = vshrl.u32 2131351028, %v788
      %v795 = vor.u32 %v793, %v794
      %v796 = vshll.u32 2131351028, %v787
      %v797 = vshrl.u32 2102212464, %v788
      %v798 = vor.u32 %v796, %v797
      %v799 = vshll.u32 2102212464, %v787
      %v800 = vshrl.u32 920167782, %v788
      %v801 = vor.u32 %v799, %v800
      %v802 = vshll.u32 920167782, %v787
      %v803 = vshrl.u32 1326507024, %v788
      %v804 = vor.u32 %v802, %v803
      %vm805 = vcmp.lt.s32.totalorder %v786, 1
      %vm806 = vcmp.lt.s32.totalorder %v786, 2
      %vm807 = vcmp.lt.s32.totalorder %v786, 3
      %vm808 = vcmp.lt.s32.totalorder %v786, 4
      %v809 = vsel %vm805, %v789, %v792
      %v810 = vsel %vm808, %v798, 2102212464
      %v811 = vsel %vm807, %v795, %v810
      %v812 = vsel %vm806, %v809, %v811
      %v813 = vsel %vm805, %v792, %v795
      %v814 = vsel %vm808, %v801, 920167782
      %v815 = vsel %vm807, %v798, %v814
      %v816 = vsel %vm806, %v813, %v815
      %v817 = vsel %vm805, %v795, %v798
      %v818 = vsel %vm808, %v804, 1326507024
      %v819 = vsel %vm807, %v801, %v818
      %v820 = vsel %vm806, %v817, %v819
      %v821 = vshll.u32 %v781, 8
      %v822 = vand.u32 %v821, 65535
      %v823 = vshrl.u32 %v821, 16
      %v824 = vand.u32 %v820, 65535
      %v825 = vshrl.u32 %v820, 16
      %v826 = vmul.u32 %v822, %v824
      %v827 = vmul.u32 %v822, %v825
      %v828 = vmul.u32 %v823, %v824
      %v829 = vmul.u32 %v823, %v825
      %v830 = vshll.u32 %v827, 16
      %v831 = vshrl.u32 %v827, 16
      %v832 = vshll.u32 %v828, 16
      %v833 = vshrl.u32 %v828, 16
      %vm834 = vc.u32 %v826, %v830
      %v835 = vsel %vm834, 1, 0
      %v836 = vadd.s32 %v826, %v830
      %v837 = vadd.s32 %v829, %v835
      %vm838 = vc.u32 %v836, %v832
      %v839 = vsel %vm838, 1, 0
      %v840 = vadd.s32 %v836, %v832
      %v841 = vadd.s32 %v837, %v839
      %v842 = vadd.s32 %v841, %v831
      %v843 = vadd.s32 %v842, %v833
      %v844 = vand.u32 %v821, 65535
      %v845 = vshrl.u32 %v821, 16
      %v846 = vand.u32 %v816, 65535
      %v847 = vshrl.u32 %v816, 16
      %v848 = vmul.u32 %v844, %v846
      %v849 = vmul.u32 %v844, %v847
      %v850 = vmul.u32 %v845, %v846
      %v851 = vmul.u32 %v845, %v847
      %v852 = vshll.u32 %v849, 16
      %v853 = vshrl.u32 %v849, 16
      %v854 = vshll.u32 %v850, 16
      %v855 = vshrl.u32 %v850, 16
      %vm856 = vc.u32 %v848, %v852
      %v857 = vsel %vm856, 1, 0
      %v858 = vadd.s32 %v848, %v852
      %v859 = vadd.s32 %v851, %v857
      %vm860 = vc.u32 %v858, %v854
      %v861 = vsel %vm860, 1, 0
      %v862 = vadd.s32 %v858, %v854
      %v863 = vadd.s32 %v859, %v861
      %v864 = vadd.s32 %v863, %v853
      %v865 = vadd.s32 %v864, %v855
      %v866 = vmul.u32 %v821, %v812
      %v867 = vadd.s32 %v843, %v862
      %vm868 = vc.u32 %v843, %v862
      %v869 = vadd.s32 %v865, 1
      %v870 = vsel %vm868, %v869, %v865
      %v871 = vadd.s32 %v866, %v870
      %v872 = vadd.s32 %v871, 536870912
      %v873 = vshrl.u32 %v872, 30
      %v874 = vshll.u32 %v873, 30
      %v875 = vsub.s32 %v871, %v874
      %vm876 = vcmp.lt.s32.totalorder %v875, 0
      %v877 = vsub.s32 0, %v875
      %v878 = vsel %vm876, %v877, %v875
      %v879 = vclz %v878
      %v880 = vsub.s32 %v879, 2
      %vm881 = vcmp.gt.s32.totalorder 0, %v880
      %v882 = vsel %vm881, 0, %v880
      %v883 = vsub.s32 32, %v882
      %v884 = vshll.u32 %v875, %v882
      %v885 = vshrl.u32 %v867, %v883
      %v886 = vor.u32 %v884, %v885
      %v887 = vsub.s32 4294967266, %v882
      %v888 = vadd.s32 %v887, 127
      %v889 = vshll.u32 %v888, 23
      %v890 = vor.u32 4788187, %v889
      %v891 = vand.u32 2147483647, %v890
      %v893 = vcvt.s32.f32 %v886
      %v894 = vmul.f32 %v893, %v891
      %v895 = vxor.u32 %v894, 2147483648
      %v896 = vsel %vm775, %v895, %v894
      %v897 = vsub.s32 4, %v873
      %v898 = vsel %vm775, %v897, %v873
      %v899 = vsel %vm774, %v266, %v896
      %v900 = vsel %vm774, 0, %v898
      %v901 = vmul.f32 %v899, %v899
      %v902 = vmul.f32 %v901, -0.001358992
      %v903 = vadd.f32 %v902, 0.041655596
      %v904 = vmul.f32 %v901, %v903
      %v905 = vadd.f32 %v904, -0.4999988
      %v906 = vmul.f32 %v901, %v905
      %v907 = vadd.f32 1.0, %v906
      %v908 = vmul.f32 %v899, %v899
      %v909 = vmul.f32 %v908, -0.00019511016
      %v910 = vadd.f32 %v909, 0.008332121
      %v911 = vmul.f32 %v908, %v910
      %v912 = vadd.f32 %v911, -0.16666654
      %v913 = vmul.f32 %v908, %v912
      %v914 = vadd.f32 %v913, 1.0
      %v915 = vmul.f32 %v914, %v899
      %vm916 = vweird.f32 %v266
      %v917 = vand.u32 %v900, 3
      %vm918 = vcmp.lt.s32.totalorder %v917, 2
      %vm919 = vcmp.eq.s32.totalorder %v917, 0
      %v920 = vxor.u32 %v915, 2147483648
      %v921 = vsel %vm919, %v907, %v920
      %vm922 = vcmp.eq.s32.totalorder %v917, 2
      %v923 = vxor.u32 %v907, 2147483648
      %v924 = vsel %vm922, %v923, %v915
      %v925 = vsel %vm918, %v921, %v924
      %v926 = vsel %vm916, nan, %v925
      %v927 = vand.u32 2147483647, %v267
      %vm928 = vcmp.le.f32.partialorder %v927, 0.7853982
      %vm929 = vcmp.lt.s32.totalorder %v267, 0
      %v930 = vand.u32 %v267, 2139095040
      %v931 = vshrl.u32 %v930, 23
      %v932 = vsub.s32 %v931, 127
      %v933 = vand.u32 2147483647, %v267
      %v934 = vand.u32 %v933, 8388607
      %v935 = vor.u32 %v934, 8388608
      %v936 = vsub.s32 0, %v935
      %v937 = vadd.s32 %v932, 1
      %vm938 = vcmp.gt.s32.totalorder %v937, 0
      %v939 = vsel %vm938, %v937, 0
      %v940 = vshrl.u32 %v939, 5
      %v941 = vand.u32 %v939, 31
      %v942 = vsub.s32 32, %v941
      %v943 = vshrl.u32 683565275, %v942
      %v944 = vshll.u32 683565275, %v941
      %v945 = vshrl.u32 2475754826, %v942
      %v946 = vor.u32 %v944, %v945
      %v947 = vshll.u32 2475754826, %v941
      %v948 = vshrl.u32 2131351028, %v942
      %v949 = vor.u32 %v947, %v948
      %v950 = vshll.u32 2131351028, %v941
      %v951 = vshrl.u32 2102212464, %v942
      %v952 = vor.u32 %v950, %v951
      %v953 = vshll.u32 2102212464, %v941
      %v954 = vshrl.u32 920167782, %v942
      %v955 = vor.u32 %v953, %v954
      %v956 = vshll.u32 920167782, %v941
      %v957 = vshrl.u32 1326507024, %v942
      %v958 = vor.u32 %v956, %v957
      %vm959 = vcmp.lt.s32.totalorder %v940, 1
      %vm960 = vcmp.lt.s32.totalorder %v940, 2
      %vm961 = vcmp.lt.s32.totalorder %v940, 3
      %vm962 = vcmp.lt.s32.totalorder %v940, 4
      %v963 = vsel %vm959, %v943, %v946
      %v964 = vsel %vm962, %v952, 2102212464
      %v965 = vsel %vm961, %v949, %v964
      %v966 = vsel %vm960, %v963, %v965
      %v967 = vsel %vm959, %v946, %v949
      %v968 = vsel %vm962, %v955, 920167782
      %v969 = vsel %vm961, %v952, %v968
      %v970 = vsel %vm960, %v967, %v969
      %v971 = vsel %vm959, %v949, %v952
      %v972 = vsel %vm962, %v958, 1326507024
      %v973 = vsel %vm961, %v955, %v972
      %v974 = vsel %vm960, %v971, %v973
      %v975 = vshll.u32 %v935, 8
      %v976 = vand.u32 %v975, 65535
      %v977 = vshrl.u32 %v975, 16
      %v978 = vand.u32 %v974, 65535
      %v979 = vshrl.u32 %v974, 16
      %v980 = vmul.u32 %v976, %v978
      %v981 = vmul.u32 %v976, %v979
      %v982 = vmul.u32 %v977, %v978
      %v983 = vmul.u32 %v977, %v979
      %v984 = vshll.u32 %v981, 16
      %v985 = vshrl.u32 %v981, 16
      %v986 = vshll.u32 %v982, 16
      %v987 = vshrl.u32 %v982, 16
      %vm988 = vc.u32 %v980, %v984
      %v989 = vsel %vm988, 1, 0
      %v990 = vadd.s32 %v980, %v984
      %v991 = vadd.s32 %v983, %v989
      %vm992 = vc.u32 %v990, %v986
      %v993 = vsel %vm992, 1, 0
      %v994 = vadd.s32 %v990, %v986
      %v995 = vadd.s32 %v991, %v993
      %v996 = vadd.s32 %v995, %v985
      %v997 = vadd.s32 %v996, %v987
      %v998 = vand.u32 %v975, 65535
      %v999 = vshrl.u32 %v975, 16
      %v1000 = vand.u32 %v970, 65535
      %v1001 = vshrl.u32 %v970, 16
      %v1002 = vmul.u32 %v998, %v1000
      %v1003 = vmul.u32 %v998, %v1001
      %v1004 = vmul.u32 %v999, %v1000
      %v1005 = vmul.u32 %v999, %v1001
      %v1006 = vshll.u32 %v1003, 16
      %v1007 = vshrl.u32 %v1003, 16
      %v1008 = vshll.u32 %v1004, 16
      %v1009 = vshrl.u32 %v1004, 16
      %vm1010 = vc.u32 %v1002, %v1006
      %v1011 = vsel %vm1010, 1, 0
      %v1012 = vadd.s32 %v1002, %v1006
      %v1013 = vadd.s32 %v1005, %v1011
      %vm1014 = vc.u32 %v1012, %v1008
      %v1015 = vsel %vm1014, 1, 0
      %v1016 = vadd.s32 %v1012, %v1008
      %v1017 = vadd.s32 %v1013, %v1015
      %v1018 = vadd.s32 %v1017, %v1007
      %v1019 = vadd.s32 %v1018, %v1009
      %v1020 = vmul.u32 %v975, %v966
      %v1021 = vadd.s32 %v997, %v1016
      %vm1022 = vc.u32 %v997, %v1016
      %v1023 = vadd.s32 %v1019, 1
      %v1024 = vsel %vm1022, %v1023, %v1019
      %v1025 = vadd.s32 %v1020, %v1024
      %v1026 = vadd.s32 %v1025, 536870912
      %v1027 = vshrl.u32 %v1026, 30
      %v1028 = vshll.u32 %v1027, 30
      %v1029 = vsub.s32 %v1025, %v1028
      %vm1030 = vcmp.lt.s32.totalorder %v1029, 0
      %v1031 = vsub.s32 0, %v1029
      %v1032 = vsel %vm1030, %v1031, %v1029
      %v1033 = vclz %v1032
      %v1034 = vsub.s32 %v1033, 2
      %vm1035 = vcmp.gt.s32.totalorder 0, %v1034
      %v1036 = vsel %vm1035, 0, %v1034
      %v1037 = vsub.s32 32, %v1036
      %v1038 = vshll.u32 %v1029, %v1036
      %v1039 = vshrl.u32 %v1021, %v1037
      %v1040 = vor.u32 %v1038, %v1039
      %v1041 = vsub.s32 4294967266, %v1036
      %v1042 = vadd.s32 %v1041, 127
      %v1043 = vshll.u32 %v1042, 23
      %v1044 = vor.u32 4788187, %v1043
      %v1045 = vand.u32 2147483647, %v1044
      %v1047 = vcvt.s32.f32 %v1040
      %v1048 = vmul.f32 %v1047, %v1045
      %v1049 = vxor.u32 %v1048, 2147483648
      %v1050 = vsel %vm929, %v1049, %v1048
      %v1051 = vsub.s32 4, %v1027
      %v1052 = vsel %vm929, %v1051, %v1027
      %v1053 = vsel %vm928, %v267, %v1050
      %v1054 = vsel %vm928, 0, %v1052
      %v1055 = vmul.f32 %v1053, %v1053
      %v1056 = vmul.f32 %v1055, -0.001358992
      %v1057 = vadd.f32 %v1056, 0.041655596
      %v1058 = vmul.f32 %v1055, %v1057
      %v1059 = vadd.f32 %v1058, -0.4999988
      %v1060 = vmul.f32 %v1055, %v1059
      %v1061 = vadd.f32 1.0, %v1060
      %v1062 = vmul.f32 %v1053, %v1053
      %v1063 = vmul.f32 %v1062, -0.00019511016
      %v1064 = vadd.f32 %v1063, 0.008332121
      %v1065 = vmul.f32 %v1062, %v1064
      %v1066 = vadd.f32 %v1065, -0.16666654
      %v1067 = vmul.f32 %v1062, %v1066
      %v1068 = vadd.f32 %v1067, 1.0
      %v1069 = vmul.f32 %v1068, %v1053
      %vm1070 = vweird.f32 %v267
      %v1071 = vand.u32 %v1054, 3
      %vm1072 = vcmp.lt.s32.totalorder %v1071, 2
      %vm1073 = vcmp.eq.s32.totalorder %v1071, 0
      %v1074 = vxor.u32 %v1069, 2147483648
      %v1075 = vsel %vm1073, %v1061, %v1074
      %vm1076 = vcmp.eq.s32.totalorder %v1071, 2
      %v1077 = vxor.u32 %v1061, 2147483648
      %v1078 = vsel %vm1076, %v1077, %v1069
      %v1079 = vsel %vm1072, %v1075, %v1078
      %v1080 = vsel %vm1070, nan, %v1079
      %v1081 = vand.u32 2147483647, %v268
      %vm1082 = vcmp.le.f32.partialorder %v1081, 0.7853982
      %vm1083 = vcmp.lt.s32.totalorder %v268, 0
      %v1084 = vand.u32 %v268, 2139095040
      %v1085 = vshrl.u32 %v1084, 23
      %v1086 = vsub.s32 %v1085, 127
      %v1087 = vand.u32 2147483647, %v268
      %v1088 = vand.u32 %v1087, 8388607
      %v1089 = vor.u32 %v1088, 8388608
      %v1090 = vsub.s32 0, %v1089
      %v1091 = vadd.s32 %v1086, 1
      %vm1092 = vcmp.gt.s32.totalorder %v1091, 0
      %v1093 = vsel %vm1092, %v1091, 0
      %v1094 = vshrl.u32 %v1093, 5
      %v1095 = vand.u32 %v1093, 31
      %v1096 = vsub.s32 32, %v1095
      %v1097 = vshrl.u32 683565275, %v1096
      %v1098 = vshll.u32 683565275, %v1095
      %v1099 = vshrl.u32 2475754826, %v1096
      %v1100 = vor.u32 %v1098, %v1099
      %v1101 = vshll.u32 2475754826, %v1095
      %v1102 = vshrl.u32 2131351028, %v1096
      %v1103 = vor.u32 %v1101, %v1102
      %v1104 = vshll.u32 2131351028, %v1095
      %v1105 = vshrl.u32 2102212464, %v1096
      %v1106 = vor.u32 %v1104, %v1105
      %v1107 = vshll.u32 2102212464, %v1095
      %v1108 = vshrl.u32 920167782, %v1096
      %v1109 = vor.u32 %v1107, %v1108
      %v1110 = vshll.u32 920167782, %v1095
      %v1111 = vshrl.u32 1326507024, %v1096
      %v1112 = vor.u32 %v1110, %v1111
      %vm1113 = vcmp.lt.s32.totalorder %v1094, 1
      %vm1114 = vcmp.lt.s32.totalorder %v1094, 2
      %vm1115 = vcmp.lt.s32.totalorder %v1094, 3
      %vm1116 = vcmp.lt.s32.totalorder %v1094, 4
      %v1117 = vsel %vm1113, %v1097, %v1100
      %v1118 = vsel %vm1116, %v1106, 2102212464
      %v1119 = vsel %vm1115, %v1103, %v1118
      %v1120 = vsel %vm1114, %v1117, %v1119
      %v1121 = vsel %vm1113, %v1100, %v1103
      %v1122 = vsel %vm1116, %v1109, 920167782
      %v1123 = vsel %vm1115, %v1106, %v1122
      %v1124 = vsel %vm1114, %v1121, %v1123
      %v1125 = vsel %vm1113, %v1103, %v1106
      %v1126 = vsel %vm1116, %v1112, 1326507024
      %v1127 = vsel %vm1115, %v1109, %v1126
      %v1128 = vsel %vm1114, %v1125, %v1127
      %v1129 = vshll.u32 %v1089, 8
      %v1130 = vand.u32 %v1129, 65535
      %v1131 = vshrl.u32 %v1129, 16
      %v1132 = vand.u32 %v1128, 65535
      %v1133 = vshrl.u32 %v1128, 16
      %v1134 = vmul.u32 %v1130, %v1132
      %v1135 = vmul.u32 %v1130, %v1133
      %v1136 = vmul.u32 %v1131, %v1132
      %v1137 = vmul.u32 %v1131, %v1133
      %v1138 = vshll.u32 %v1135, 16
      %v1139 = vshrl.u32 %v1135, 16
      %v1140 = vshll.u32 %v1136, 16
      %v1141 = vshrl.u32 %v1136, 16
      %vm1142 = vc.u32 %v1134, %v1138
      %v1143 = vsel %vm1142, 1, 0
      %v1144 = vadd.s32 %v1134, %v1138
      %v1145 = vadd.s32 %v1137, %v1143
      %vm1146 = vc.u32 %v1144, %v1140
      %v1147 = vsel %vm1146, 1, 0
      %v1148 = vadd.s32 %v1144, %v1140
      %v1149 = vadd.s32 %v1145, %v1147
      %v1150 = vadd.s32 %v1149, %v1139
      %v1151 = vadd.s32 %v1150, %v1141
      %v1152 = vand.u32 %v1129, 65535
      %v1153 = vshrl.u32 %v1129, 16
      %v1154 = vand.u32 %v1124, 65535
      %v1155 = vshrl.u32 %v1124, 16
      %v1156 = vmul.u32 %v1152, %v1154
      %v1157 = vmul.u32 %v1152, %v1155
      %v1158 = vmul.u32 %v1153, %v1154
      %v1159 = vmul.u32 %v1153, %v1155
      %v1160 = vshll.u32 %v1157, 16
      %v1161 = vshrl.u32 %v1157, 16
      %v1162 = vshll.u32 %v1158, 16
      %v1163 = vshrl.u32 %v1158, 16
      %vm1164 = vc.u32 %v1156, %v1160
      %v1165 = vsel %vm1164, 1, 0
      %v1166 = vadd.s32 %v1156, %v1160
      %v1167 = vadd.s32 %v1159, %v1165
      %vm1168 = vc.u32 %v1166, %v1162
      %v1169 = vsel %vm1168, 1, 0
      %v1170 = vadd.s32 %v1166, %v1162
      %v1171 = vadd.s32 %v1167, %v1169
      %v1172 = vadd.s32 %v1171, %v1161
      %v1173 = vadd.s32 %v1172, %v1163
      %v1174 = vmul.u32 %v1129, %v1120
      %v1175 = vadd.s32 %v1151, %v1170
      %vm1176 = vc.u32 %v1151, %v1170
      %v1177 = vadd.s32 %v1173, 1
      %v1178 = vsel %vm1176, %v1177, %v1173
      %v1179 = vadd.s32 %v1174, %v1178
      %v1180 = vadd.s32 %v1179, 536870912
      %v1181 = vshrl.u32 %v1180, 30
      %v1182 = vshll.u32 %v1181, 30
      %v1183 = vsub.s32 %v1179, %v1182
      %vm1184 = vcmp.lt.s32.totalorder %v1183, 0
      %v1185 = vsub.s32 0, %v1183
      %v1186 = vsel %vm1184, %v1185, %v1183
      %v1187 = vclz %v1186
      %v1188 = vsub.s32 %v1187, 2
      %vm1189 = vcmp.gt.s32.totalorder 0, %v1188
      %v1190 = vsel %vm1189, 0, %v1188
      %v1191 = vsub.s32 32, %v1190
      %v1192 = vshll.u32 %v1183, %v1190
      %v1193 = vshrl.u32 %v1175, %v1191
      %v1194 = vor.u32 %v1192, %v1193
      %v1195 = vsub.s32 4294967266, %v1190
      %v1196 = vadd.s32 %v1195, 127
      %v1197 = vshll.u32 %v1196, 23
      %v1198 = vor.u32 4788187, %v1197
      %v1199 = vand.u32 2147483647, %v1198
      %v1201 = vcvt.s32.f32 %v1194
      %v1202 = vmul.f32 %v1201, %v1199
      %v1203 = vxor.u32 %v1202, 2147483648
      %v1204 = vsel %vm1083, %v1203, %v1202
      %v1205 = vsub.s32 4, %v1181
      %v1206 = vsel %vm1083, %v1205, %v1181
      %v1207 = vsel %vm1082, %v268, %v1204
      %v1208 = vsel %vm1082, 0, %v1206
      %v1209 = vmul.f32 %v1207, %v1207
      %v1210 = vmul.f32 %v1209, -0.001358992
      %v1211 = vadd.f32 %v1210, 0.041655596
      %v1212 = vmul.f32 %v1209, %v1211
      %v1213 = vadd.f32 %v1212, -0.4999988
      %v1214 = vmul.f32 %v1209, %v1213
      %v1215 = vadd.f32 1.0, %v1214
      %v1216 = vmul.f32 %v1207, %v1207
      %v1217 = vmul.f32 %v1216, -0.00019511016
      %v1218 = vadd.f32 %v1217, 0.008332121
      %v1219 = vmul.f32 %v1216, %v1218
      %v1220 = vadd.f32 %v1219, -0.16666654
      %v1221 = vmul.f32 %v1216, %v1220
      %v1222 = vadd.f32 %v1221, 1.0
      %v1223 = vmul.f32 %v1222, %v1207
      %vm1224 = vweird.f32 %v268
      %v1225 = vand.u32 %v1208, 3
      %vm1226 = vcmp.lt.s32.totalorder %v1225, 2
      %vm1227 = vcmp.eq.s32.totalorder %v1225, 0
      %v1228 = vxor.u32 %v1223, 2147483648
      %v1229 = vsel %vm1227, %v1215, %v1228
      %vm1230 = vcmp.eq.s32.totalorder %v1225, 2
      %v1231 = vxor.u32 %v1215, 2147483648
      %v1232 = vsel %vm1230, %v1231, %v1223
      %v1233 = vsel %vm1226, %v1229, %v1232
      %v1234 = vsel %vm1224, nan, %v1233
      %v1235 = vand.u32 2147483647, %v269
      %vm1236 = vcmp.le.f32.partialorder %v1235, 0.7853982
      %vm1237 = vcmp.lt.s32.totalorder %v269, 0
      %v1238 = vand.u32 %v269, 2139095040
      %v1239 = vshrl.u32 %v1238, 23
      %v1240 = vsub.s32 %v1239, 127
      %v1241 = vand.u32 2147483647, %v269
      %v1242 = vand.u32 %v1241, 8388607
      %v1243 = vor.u32 %v1242, 8388608
      %v1244 = vsub.s32 0, %v1243
      %v1245 = vadd.s32 %v1240, 1
      %vm1246 = vcmp.gt.s32.totalorder %v1245, 0
      %v1247 = vsel %vm1246, %v1245, 0
      %v1248 = vshrl.u32 %v1247, 5
      %v1249 = vand.u32 %v1247, 31
      %v1250 = vsub.s32 32, %v1249
      %v1251 = vshrl.u32 683565275, %v1250
      %v1252 = vshll.u32 683565275, %v1249
      %v1253 = vshrl.u32 2475754826, %v1250
      %v1254 = vor.u32 %v1252, %v1253
      %v1255 = vshll.u32 2475754826, %v1249
      %v1256 = vshrl.u32 2131351028, %v1250
      %v1257 = vor.u32 %v1255, %v1256
      %v1258 = vshll.u32 2131351028, %v1249
      %v1259 = vshrl.u32 2102212464, %v1250
      %v1260 = vor.u32 %v1258, %v1259
      %v1261 = vshll.u32 2102212464, %v1249
      %v1262 = vshrl.u32 920167782, %v1250
      %v1263 = vor.u32 %v1261, %v1262
      %v1264 = vshll.u32 920167782, %v1249
      %v1265 = vshrl.u32 1326507024, %v1250
      %v1266 = vor.u32 %v1264, %v1265
      %vm1267 = vcmp.lt.s32.totalorder %v1248, 1
      %vm1268 = vcmp.lt.s32.totalorder %v1248, 2
      %vm1269 = vcmp.lt.s32.totalorder %v1248, 3
      %vm1270 = vcmp.lt.s32.totalorder %v1248, 4
      %v1271 = vsel %vm1267, %v1251, %v1254
      %v1272 = vsel %vm1270, %v1260, 2102212464
      %v1273 = vsel %vm1269, %v1257, %v1272
      %v1274 = vsel %vm1268, %v1271, %v1273
      %v1275 = vsel %vm1267, %v1254, %v1257
      %v1276 = vsel %vm1270, %v1263, 920167782
      %v1277 = vsel %vm1269, %v1260, %v1276
      %v1278 = vsel %vm1268, %v1275, %v1277
      %v1279 = vsel %vm1267, %v1257, %v1260
      %v1280 = vsel %vm1270, %v1266, 1326507024
      %v1281 = vsel %vm1269, %v1263, %v1280
      %v1282 = vsel %vm1268, %v1279, %v1281
      %v1283 = vshll.u32 %v1243, 8
      %v1284 = vand.u32 %v1283, 65535
      %v1285 = vshrl.u32 %v1283, 16
      %v1286 = vand.u32 %v1282, 65535
      %v1287 = vshrl.u32 %v1282, 16
      %v1288 = vmul.u32 %v1284, %v1286
      %v1289 = vmul.u32 %v1284, %v1287
      %v1290 = vmul.u32 %v1285, %v1286
      %v1291 = vmul.u32 %v1285, %v1287
      %v1292 = vshll.u32 %v1289, 16
      %v1293 = vshrl.u32 %v1289, 16
      %v1294 = vshll.u32 %v1290, 16
      %v1295 = vshrl.u32 %v1290, 16
      %vm1296 = vc.u32 %v1288, %v1292
      %v1297 = vsel %vm1296, 1, 0
      %v1298 = vadd.s32 %v1288, %v1292
      %v1299 = vadd.s32 %v1291, %v1297
      %vm1300 = vc.u32 %v1298, %v1294
      %v1301 = vsel %vm1300, 1, 0
      %v1302 = vadd.s32 %v1298, %v1294
      %v1303 = vadd.s32 %v1299, %v1301
      %v1304 = vadd.s32 %v1303, %v1293
      %v1305 = vadd.s32 %v1304, %v1295
      %v1306 = vand.u32 %v1283, 65535
      %v1307 = vshrl.u32 %v1283, 16
      %v1308 = vand.u32 %v1278, 65535
      %v1309 = vshrl.u32 %v1278, 16
      %v1310 = vmul.u32 %v1306, %v1308
      %v1311 = vmul.u32 %v1306, %v1309
      %v1312 = vmul.u32 %v1307, %v1308
      %v1313 = vmul.u32 %v1307, %v1309
      %v1314 = vshll.u32 %v1311, 16
      %v1315 = vshrl.u32 %v1311, 16
      %v1316 = vshll.u32 %v1312, 16
      %v1317 = vshrl.u32 %v1312, 16
      %vm1318 = vc.u32 %v1310, %v1314
      %v1319 = vsel %vm1318, 1, 0
      %v1320 = vadd.s32 %v1310, %v1314
      %v1321 = vadd.s32 %v1313, %v1319
      %vm1322 = vc.u32 %v1320, %v1316
      %v1323 = vsel %vm1322, 1, 0
      %v1324 = vadd.s32 %v1320, %v1316
      %v1325 = vadd.s32 %v1321, %v1323
      %v1326 = vadd.s32 %v1325, %v1315
      %v1327 = vadd.s32 %v1326, %v1317
      %v1328 = vmul.u32 %v1283, %v1274
      %v1329 = vadd.s32 %v1305, %v1324
      %vm1330 = vc.u32 %v1305, %v1324
      %v1331 = vadd.s32 %v1327, 1
      %v1332 = vsel %vm1330, %v1331, %v1327
      %v1333 = vadd.s32 %v1328, %v1332
      %v1334 = vadd.s32 %v1333, 536870912
      %v1335 = vshrl.u32 %v1334, 30
      %v1336 = vshll.u32 %v1335, 30
      %v1337 = vsub.s32 %v1333, %v1336
      %vm1338 = vcmp.lt.s32.totalorder %v1337, 0
      %v1339 = vsub.s32 0, %v1337
      %v1340 = vsel %vm1338, %v1339, %v1337
      %v1341 = vclz %v1340
      %v1342 = vsub.s32 %v1341, 2
      %vm1343 = vcmp.gt.s32.totalorder 0, %v1342
      %v1344 = vsel %vm1343, 0, %v1342
      %v1345 = vsub.s32 32, %v1344
      %v1346 = vshll.u32 %v1337, %v1344
      %v1347 = vshrl.u32 %v1329, %v1345
      %v1348 = vor.u32 %v1346, %v1347
      %v1349 = vsub.s32 4294967266, %v1344
      %v1350 = vadd.s32 %v1349, 127
      %v1351 = vshll.u32 %v1350, 23
      %v1352 = vor.u32 4788187, %v1351
      %v1353 = vand.u32 2147483647, %v1352
      %v1355 = vcvt.s32.f32 %v1348
      %v1356 = vmul.f32 %v1355, %v1353
      %v1357 = vxor.u32 %v1356, 2147483648
      %v1358 = vsel %vm1237, %v1357, %v1356
      %v1359 = vsub.s32 4, %v1335
      %v1360 = vsel %vm1237, %v1359, %v1335
      %v1361 = vsel %vm1236, %v269, %v1358
      %v1362 = vsel %vm1236, 0, %v1360
      %v1363 = vmul.f32 %v1361, %v1361
      %v1364 = vmul.f32 %v1363, -0.001358992
      %v1365 = vadd.f32 %v1364, 0.041655596
      %v1366 = vmul.f32 %v1363, %v1365
      %v1367 = vadd.f32 %v1366, -0.4999988
      %v1368 = vmul.f32 %v1363, %v1367
      %v1369 = vadd.f32 1.0, %v1368
      %v1370 = vmul.f32 %v1361, %v1361
      %v1371 = vmul.f32 %v1370, -0.00019511016
      %v1372 = vadd.f32 %v1371, 0.008332121
      %v1373 = vmul.f32 %v1370, %v1372
      %v1374 = vadd.f32 %v1373, -0.16666654
      %v1375 = vmul.f32 %v1370, %v1374
      %v1376 = vadd.f32 %v1375, 1.0
      %v1377 = vmul.f32 %v1376, %v1361
      %vm1378 = vweird.f32 %v269
      %v1379 = vand.u32 %v1362, 3
      %vm1380 = vcmp.lt.s32.totalorder %v1379, 2
      %vm1381 = vcmp.eq.s32.totalorder %v1379, 0
      %v1382 = vxor.u32 %v1377, 2147483648
      %v1383 = vsel %vm1381, %v1369, %v1382
      %vm1384 = vcmp.eq.s32.totalorder %v1379, 2
      %v1385 = vxor.u32 %v1369, 2147483648
      %v1386 = vsel %vm1384, %v1385, %v1377
      %v1387 = vsel %vm1380, %v1383, %v1386
      %v1388 = vsel %vm1378, nan, %v1387
      %v1389 = vand.u32 2147483647, %v270
      %vm1390 = vcmp.le.f32.partialorder %v1389, 0.7853982
      %vm1391 = vcmp.lt.s32.totalorder %v270, 0
      %v1392 = vand.u32 %v270, 2139095040
      %v1393 = vshrl.u32 %v1392, 23
      %v1394 = vsub.s32 %v1393, 127
      %v1395 = vand.u32 2147483647, %v270
      %v1396 = vand.u32 %v1395, 8388607
      %v1397 = vor.u32 %v1396, 8388608
      %v1398 = vsub.s32 0, %v1397
      %v1399 = vadd.s32 %v1394, 1
      %vm1400 = vcmp.gt.s32.totalorder %v1399, 0
      %v1401 = vsel %vm1400, %v1399, 0
      %v1402 = vshrl.u32 %v1401, 5
      %v1403 = vand.u32 %v1401, 31
      %v1404 = vsub.s32 32, %v1403
      %v1405 = vshrl.u32 683565275, %v1404
      %v1406 = vshll.u32 683565275, %v1403
      %v1407 = vshrl.u32 2475754826, %v1404
      %v1408 = vor.u32 %v1406, %v1407
      %v1409 = vshll.u32 2475754826, %v1403
      %v1410 = vshrl.u32 2131351028, %v1404
      %v1411 = vor.u32 %v1409, %v1410
      %v1412 = vshll.u32 2131351028, %v1403
      %v1413 = vshrl.u32 2102212464, %v1404
      %v1414 = vor.u32 %v1412, %v1413
      %v1415 = vshll.u32 2102212464, %v1403
      %v1416 = vshrl.u32 920167782, %v1404
      %v1417 = vor.u32 %v1415, %v1416
      %v1418 = vshll.u32 920167782, %v1403
      %v1419 = vshrl.u32 1326507024, %v1404
      %v1420 = vor.u32 %v1418, %v1419
      %vm1421 = vcmp.lt.s32.totalorder %v1402, 1
      %vm1422 = vcmp.lt.s32.totalorder %v1402, 2
      %vm1423 = vcmp.lt.s32.totalorder %v1402, 3
      %vm1424 = vcmp.lt.s32.totalorder %v1402, 4
      %v1425 = vsel %vm1421, %v1405, %v1408
      %v1426 = vsel %vm1424, %v1414, 2102212464
      %v1427 = vsel %vm1423, %v1411, %v1426
      %v1428 = vsel %vm1422, %v1425, %v1427
      %v1429 = vsel %vm1421, %v1408, %v1411
      %v1430 = vsel %vm1424, %v1417, 920167782
      %v1431 = vsel %vm1423, %v1414, %v1430
      %v1432 = vsel %vm1422, %v1429, %v1431
      %v1433 = vsel %vm1421, %v1411, %v1414
      %v1434 = vsel %vm1424, %v1420, 1326507024
      %v1435 = vsel %vm1423, %v1417, %v1434
      %v1436 = vsel %vm1422, %v1433, %v1435
      %v1437 = vshll.u32 %v1397, 8
      %v1438 = vand.u32 %v1437, 65535
      %v1439 = vshrl.u32 %v1437, 16
      %v1440 = vand.u32 %v1436, 65535
      %v1441 = vshrl.u32 %v1436, 16
      %v1442 = vmul.u32 %v1438, %v1440
      %v1443 = vmul.u32 %v1438, %v1441
      %v1444 = vmul.u32 %v1439, %v1440
      %v1445 = vmul.u32 %v1439, %v1441
      %v1446 = vshll.u32 %v1443, 16
      %v1447 = vshrl.u32 %v1443, 16
      %v1448 = vshll.u32 %v1444, 16
      %v1449 = vshrl.u32 %v1444, 16
      %vm1450 = vc.u32 %v1442, %v1446
      %v1451 = vsel %vm1450, 1, 0
      %v1452 = vadd.s32 %v1442, %v1446
      %v1453 = vadd.s32 %v1445, %v1451
      %vm1454 = vc.u32 %v1452, %v1448
      %v1455 = vsel %vm1454, 1, 0
      %v1456 = vadd.s32 %v1452, %v1448
      %v1457 = vadd.s32 %v1453, %v1455
      %v1458 = vadd.s32 %v1457, %v1447
      %v1459 = vadd.s32 %v1458, %v1449
      %v1460 = vand.u32 %v1437, 65535
      %v1461 = vshrl.u32 %v1437, 16
      %v1462 = vand.u32 %v1432, 65535
      %v1463 = vshrl.u32 %v1432, 16
      %v1464 = vmul.u32 %v1460, %v1462
      %v1465 = vmul.u32 %v1460, %v1463
      %v1466 = vmul.u32 %v1461, %v1462
      %v1467 = vmul.u32 %v1461, %v1463
      %v1468 = vshll.u32 %v1465, 16
      %v1469 = vshrl.u32 %v1465, 16
      %v1470 = vshll.u32 %v1466, 16
      %v1471 = vshrl.u32 %v1466, 16
      %vm1472 = vc.u32 %v1464, %v1468
      %v1473 = vsel %vm1472, 1, 0
      %v1474 = vadd.s32 %v1464, %v1468
      %v1475 = vadd.s32 %v1467, %v1473
      %vm1476 = vc.u32 %v1474, %v1470
      %v1477 = vsel %vm1476, 1, 0
      %v1478 = vadd.s32 %v1474, %v1470
      %v1479 = vadd.s32 %v1475, %v1477
      %v1480 = vadd.s32 %v1479, %v1469
      %v1481 = vadd.s32 %v1480, %v1471
      %v1482 = vmul.u32 %v1437, %v1428
      %v1483 = vadd.s32 %v1459, %v1478
      %vm1484 = vc.u32 %v1459, %v1478
      %v1485 = vadd.s32 %v1481, 1
      %v1486 = vsel %vm1484, %v1485, %v1481
      %v1487 = vadd.s32 %v1482, %v1486
      %v1488 = vadd.s32 %v1487, 536870912
      %v1489 = vshrl.u32 %v1488, 30
      %v1490 = vshll.u32 %v1489, 30
      %v1491 = vsub.s32 %v1487, %v1490
      %vm1492 = vcmp.lt.s32.totalorder %v1491, 0
      %v1493 = vsub.s32 0, %v1491
      %v1494 = vsel %vm1492, %v1493, %v1491
      %v1495 = vclz %v1494
      %v1496 = vsub.s32 %v1495, 2
      %vm1497 = vcmp.gt.s32.totalorder 0, %v1496
      %v1498 = vsel %vm1497, 0, %v1496
      %v1499 = vsub.s32 32, %v1498
      %v1500 = vshll.u32 %v1491, %v1498
      %v1501 = vshrl.u32 %v1483, %v1499
      %v1502 = vor.u32 %v1500, %v1501
      %v1503 = vsub.s32 4294967266, %v1498
      %v1504 = vadd.s32 %v1503, 127
      %v1505 = vshll.u32 %v1504, 23
      %v1506 = vor.u32 4788187, %v1505
      %v1507 = vand.u32 2147483647, %v1506
      %v1509 = vcvt.s32.f32 %v1502
      %v1510 = vmul.f32 %v1509, %v1507
      %v1511 = vxor.u32 %v1510, 2147483648
      %v1512 = vsel %vm1391, %v1511, %v1510
      %v1513 = vsub.s32 4, %v1489
      %v1514 = vsel %vm1391, %v1513, %v1489
      %v1515 = vsel %vm1390, %v270, %v1512
      %v1516 = vsel %vm1390, 0, %v1514
      %v1517 = vmul.f32 %v1515, %v1515
      %v1518 = vmul.f32 %v1517, -0.001358992
      %v1519 = vadd.f32 %v1518, 0.041655596
      %v1520 = vmul.f32 %v1517, %v1519
      %v1521 = vadd.f32 %v1520, -0.4999988
      %v1522 = vmul.f32 %v1517, %v1521
      %v1523 = vadd.f32 1.0, %v1522
      %v1524 = vmul.f32 %v1515, %v1515
      %v1525 = vmul.f32 %v1524, -0.00019511016
      %v1526 = vadd.f32 %v1525, 0.008332121
      %v1527 = vmul.f32 %v1524, %v1526
      %v1528 = vadd.f32 %v1527, -0.16666654
      %v1529 = vmul.f32 %v1524, %v1528
      %v1530 = vadd.f32 %v1529, 1.0
      %v1531 = vmul.f32 %v1530, %v1515
      %vm1532 = vweird.f32 %v270
      %v1533 = vand.u32 %v1516, 3
      %vm1534 = vcmp.lt.s32.totalorder %v1533, 2
      %vm1535 = vcmp.eq.s32.totalorder %v1533, 0
      %v1536 = vxor.u32 %v1531, 2147483648
      %v1537 = vsel %vm1535, %v1523, %v1536
      %vm1538 = vcmp.eq.s32.totalorder %v1533, 2
      %v1539 = vxor.u32 %v1523, 2147483648
      %v1540 = vsel %vm1538, %v1539, %v1531
      %v1541 = vsel %vm1534, %v1537, %v1540
      %v1542 = vsel %vm1532, nan, %v1541
      %v1543 = vand.u32 2147483647, %v271
      %vm1544 = vcmp.le.f32.partialorder %v1543, 0.7853982
      %vm1545 = vcmp.lt.s32.totalorder %v271, 0
      %v1546 = vand.u32 %v271, 2139095040
      %v1547 = vshrl.u32 %v1546, 23
      %v1548 = vsub.s32 %v1547, 127
      %v1549 = vand.u32 2147483647, %v271
      %v1550 = vand.u32 %v1549, 8388607
      %v1551 = vor.u32 %v1550, 8388608
      %v1552 = vsub.s32 0, %v1551
      %v1553 = vadd.s32 %v1548, 1
      %vm1554 = vcmp.gt.s32.totalorder %v1553, 0
      %v1555 = vsel %vm1554, %v1553, 0
      %v1556 = vshrl.u32 %v1555, 5
      %v1557 = vand.u32 %v1555, 31
      %v1558 = vsub.s32 32, %v1557
      %v1559 = vshrl.u32 683565275, %v1558
      %v1560 = vshll.u32 683565275, %v1557
      %v1561 = vshrl.u32 2475754826, %v1558
      %v1562 = vor.u32 %v1560, %v1561
      %v1563 = vshll.u32 2475754826, %v1557
      %v1564 = vshrl.u32 2131351028, %v1558
      %v1565 = vor.u32 %v1563, %v1564
      %v1566 = vshll.u32 2131351028, %v1557
      %v1567 = vshrl.u32 2102212464, %v1558
      %v1568 = vor.u32 %v1566, %v1567
      %v1569 = vshll.u32 2102212464, %v1557
      %v1570 = vshrl.u32 920167782, %v1558
      %v1571 = vor.u32 %v1569, %v1570
      %v1572 = vshll.u32 920167782, %v1557
      %v1573 = vshrl.u32 1326507024, %v1558
      %v1574 = vor.u32 %v1572, %v1573
      %vm1575 = vcmp.lt.s32.totalorder %v1556, 1
      %vm1576 = vcmp.lt.s32.totalorder %v1556, 2
      %vm1577 = vcmp.lt.s32.totalorder %v1556, 3
      %vm1578 = vcmp.lt.s32.totalorder %v1556, 4
      %v1579 = vsel %vm1575, %v1559, %v1562
      %v1580 = vsel %vm1578, %v1568, 2102212464
      %v1581 = vsel %vm1577, %v1565, %v1580
      %v1582 = vsel %vm1576, %v1579, %v1581
      %v1583 = vsel %vm1575, %v1562, %v1565
      %v1584 = vsel %vm1578, %v1571, 920167782
      %v1585 = vsel %vm1577, %v1568, %v1584
      %v1586 = vsel %vm1576, %v1583, %v1585
      %v1587 = vsel %vm1575, %v1565, %v1568
      %v1588 = vsel %vm1578, %v1574, 1326507024
      %v1589 = vsel %vm1577, %v1571, %v1588
      %v1590 = vsel %vm1576, %v1587, %v1589
      %v1591 = vshll.u32 %v1551, 8
      %v1592 = vand.u32 %v1591, 65535
      %v1593 = vshrl.u32 %v1591, 16
      %v1594 = vand.u32 %v1590, 65535
      %v1595 = vshrl.u32 %v1590, 16
      %v1596 = vmul.u32 %v1592, %v1594
      %v1597 = vmul.u32 %v1592, %v1595
      %v1598 = vmul.u32 %v1593, %v1594
      %v1599 = vmul.u32 %v1593, %v1595
      %v1600 = vshll.u32 %v1597, 16
      %v1601 = vshrl.u32 %v1597, 16
      %v1602 = vshll.u32 %v1598, 16
      %v1603 = vshrl.u32 %v1598, 16
      %vm1604 = vc.u32 %v1596, %v1600
      %v1605 = vsel %vm1604, 1, 0
      %v1606 = vadd.s32 %v1596, %v1600
      %v1607 = vadd.s32 %v1599, %v1605
      %vm1608 = vc.u32 %v1606, %v1602
      %v1609 = vsel %vm1608, 1, 0
      %v1610 = vadd.s32 %v1606, %v1602
      %v1611 = vadd.s32 %v1607, %v1609
      %v1612 = vadd.s32 %v1611, %v1601
      %v1613 = vadd.s32 %v1612, %v1603
      %v1614 = vand.u32 %v1591, 65535
      %v1615 = vshrl.u32 %v1591, 16
      %v1616 = vand.u32 %v1586, 65535
      %v1617 = vshrl.u32 %v1586, 16
      %v1618 = vmul.u32 %v1614, %v1616
      %v1619 = vmul.u32 %v1614, %v1617
      %v1620 = vmul.u32 %v1615, %v1616
      %v1621 = vmul.u32 %v1615, %v1617
      %v1622 = vshll.u32 %v1619, 16
      %v1623 = vshrl.u32 %v1619, 16
      %v1624 = vshll.u32 %v1620, 16
      %v1625 = vshrl.u32 %v1620, 16
      %vm1626 = vc.u32 %v1618, %v1622
      %v1627 = vsel %vm1626, 1, 0
      %v1628 = vadd.s32 %v1618, %v1622
      %v1629 = vadd.s32 %v1621, %v1627
      %vm1630 = vc.u32 %v1628, %v1624
      %v1631 = vsel %vm1630, 1, 0
      %v1632 = vadd.s32 %v1628, %v1624
      %v1633 = vadd.s32 %v1629, %v1631
      %v1634 = vadd.s32 %v1633, %v1623
      %v1635 = vadd.s32 %v1634, %v1625
      %v1636 = vmul.u32 %v1591, %v1582
      %v1637 = vadd.s32 %v1613, %v1632
      %vm1638 = vc.u32 %v1613, %v1632
      %v1639 = vadd.s32 %v1635, 1
      %v1640 = vsel %vm1638, %v1639, %v1635
      %v1641 = vadd.s32 %v1636, %v1640
      %v1642 = vadd.s32 %v1641, 536870912
      %v1643 = vshrl.u32 %v1642, 30
      %v1644 = vshll.u32 %v1643, 30
      %v1645 = vsub.s32 %v1641, %v1644
      %vm1646 = vcmp.lt.s32.totalorder %v1645, 0
      %v1647 = vsub.s32 0, %v1645
      %v1648 = vsel %vm1646, %v1647, %v1645
      %v1649 = vclz %v1648
      %v1650 = vsub.s32 %v1649, 2
      %vm1651 = vcmp.gt.s32.totalorder 0, %v1650
      %v1652 = vsel %vm1651, 0, %v1650
      %v1653 = vsub.s32 32, %v1652
      %v1654 = vshll.u32 %v1645, %v1652
      %v1655 = vshrl.u32 %v1637, %v1653
      %v1656 = vor.u32 %v1654, %v1655
      %v1657 = vsub.s32 4294967266, %v1652
      %v1658 = vadd.s32 %v1657, 127
      %v1659 = vshll.u32 %v1658, 23
      %v1660 = vor.u32 4788187, %v1659
      %v1661 = vand.u32 2147483647, %v1660
      %v1663 = vcvt.s32.f32 %v1656
      %v1664 = vmul.f32 %v1663, %v1661
      %v1665 = vxor.u32 %v1664, 2147483648
      %v1666 = vsel %vm1545, %v1665, %v1664
      %v1667 = vsub.s32 4, %v1643
      %v1668 = vsel %vm1545, %v1667, %v1643
      %v1669 = vsel %vm1544, %v271, %v1666
      %v1670 = vsel %vm1544, 0, %v1668
      %v1671 = vmul.f32 %v1669, %v1669
      %v1672 = vmul.f32 %v1671, -0.001358992
      %v1673 = vadd.f32 %v1672, 0.041655596
      %v1674 = vmul.f32 %v1671, %v1673
      %v1675 = vadd.f32 %v1674, -0.4999988
      %v1676 = vmul.f32 %v1671, %v1675
      %v1677 = vadd.f32 1.0, %v1676
      %v1678 = vmul.f32 %v1669, %v1669
      %v1679 = vmul.f32 %v1678, -0.00019511016
      %v1680 = vadd.f32 %v1679, 0.008332121
      %v1681 = vmul.f32 %v1678, %v1680
      %v1682 = vadd.f32 %v1681, -0.16666654
      %v1683 = vmul.f32 %v1678, %v1682
      %v1684 = vadd.f32 %v1683, 1.0
      %v1685 = vmul.f32 %v1684, %v1669
      %vm1686 = vweird.f32 %v271
      %v1687 = vand.u32 %v1670, 3
      %vm1688 = vcmp.lt.s32.totalorder %v1687, 2
      %vm1689 = vcmp.eq.s32.totalorder %v1687, 0
      %v1690 = vxor.u32 %v1685, 2147483648
      %v1691 = vsel %vm1689, %v1677, %v1690
      %vm1692 = vcmp.eq.s32.totalorder %v1687, 2
      %v1693 = vxor.u32 %v1677, 2147483648
      %v1694 = vsel %vm1692, %v1693, %v1685
      %v1695 = vsel %vm1688, %v1691, %v1694
      %v1696 = vsel %vm1686, nan, %v1695
      %v1697 = vand.u32 2147483647, %v272
      %vm1698 = vcmp.le.f32.partialorder %v1697, 0.7853982
      %vm1699 = vcmp.lt.s32.totalorder %v272, 0
      %v1700 = vand.u32 %v272, 2139095040
      %v1701 = vshrl.u32 %v1700, 23
      %v1702 = vsub.s32 %v1701, 127
      %v1703 = vand.u32 2147483647, %v272
      %v1704 = vand.u32 %v1703, 8388607
      %v1705 = vor.u32 %v1704, 8388608
      %v1706 = vsub.s32 0, %v1705
      %v1707 = vadd.s32 %v1702, 1
      %vm1708 = vcmp.gt.s32.totalorder %v1707, 0
      %v1709 = vsel %vm1708, %v1707, 0
      %v1710 = vshrl.u32 %v1709, 5
      %v1711 = vand.u32 %v1709, 31
      %v1712 = vsub.s32 32, %v1711
      %v1713 = vshrl.u32 683565275, %v1712
      %v1714 = vshll.u32 683565275, %v1711
      %v1715 = vshrl.u32 2475754826, %v1712
      %v1716 = vor.u32 %v1714, %v1715
      %v1717 = vshll.u32 2475754826, %v1711
      %v1718 = vshrl.u32 2131351028, %v1712
      %v1719 = vor.u32 %v1717, %v1718
      %v1720 = vshll.u32 2131351028, %v1711
      %v1721 = vshrl.u32 2102212464, %v1712
      %v1722 = vor.u32 %v1720, %v1721
      %v1723 = vshll.u32 2102212464, %v1711
      %v1724 = vshrl.u32 920167782, %v1712
      %v1725 = vor.u32 %v1723, %v1724
      %v1726 = vshll.u32 920167782, %v1711
      %v1727 = vshrl.u32 1326507024, %v1712
      %v1728 = vor.u32 %v1726, %v1727
      %vm1729 = vcmp.lt.s32.totalorder %v1710, 1
      %vm1730 = vcmp.lt.s32.totalorder %v1710, 2
      %vm1731 = vcmp.lt.s32.totalorder %v1710, 3
      %vm1732 = vcmp.lt.s32.totalorder %v1710, 4
      %v1733 = vsel %vm1729, %v1713, %v1716
      %v1734 = vsel %vm1732, %v1722, 2102212464
      %v1735 = vsel %vm1731, %v1719, %v1734
      %v1736 = vsel %vm1730, %v1733, %v1735
      %v1737 = vsel %vm1729, %v1716, %v1719
      %v1738 = vsel %vm1732, %v1725, 920167782
      %v1739 = vsel %vm1731, %v1722, %v1738
      %v1740 = vsel %vm1730, %v1737, %v1739
      %v1741 = vsel %vm1729, %v1719, %v1722
      %v1742 = vsel %vm1732, %v1728, 1326507024
      %v1743 = vsel %vm1731, %v1725, %v1742
      %v1744 = vsel %vm1730, %v1741, %v1743
      %v1745 = vshll.u32 %v1705, 8
      %v1746 = vand.u32 %v1745, 65535
      %v1747 = vshrl.u32 %v1745, 16
      %v1748 = vand.u32 %v1744, 65535
      %v1749 = vshrl.u32 %v1744, 16
      %v1750 = vmul.u32 %v1746, %v1748
      %v1751 = vmul.u32 %v1746, %v1749
      %v1752 = vmul.u32 %v1747, %v1748
      %v1753 = vmul.u32 %v1747, %v1749
      %v1754 = vshll.u32 %v1751, 16
      %v1755 = vshrl.u32 %v1751, 16
      %v1756 = vshll.u32 %v1752, 16
      %v1757 = vshrl.u32 %v1752, 16
      %vm1758 = vc.u32 %v1750, %v1754
      %v1759 = vsel %vm1758, 1, 0
      %v1760 = vadd.s32 %v1750, %v1754
      %v1761 = vadd.s32 %v1753, %v1759
      %vm1762 = vc.u32 %v1760, %v1756
      %v1763 = vsel %vm1762, 1, 0
      %v1764 = vadd.s32 %v1760, %v1756
      %v1765 = vadd.s32 %v1761, %v1763
      %v1766 = vadd.s32 %v1765, %v1755
      %v1767 = vadd.s32 %v1766, %v1757
      %v1768 = vand.u32 %v1745, 65535
      %v1769 = vshrl.u32 %v1745, 16
      %v1770 = vand.u32 %v1740, 65535
      %v1771 = vshrl.u32 %v1740, 16
      %v1772 = vmul.u32 %v1768, %v1770
      %v1773 = vmul.u32 %v1768, %v1771
      %v1774 = vmul.u32 %v1769, %v1770
      %v1775 = vmul.u32 %v1769, %v1771
      %v1776 = vshll.u32 %v1773, 16
      %v1777 = vshrl.u32 %v1773, 16
      %v1778 = vshll.u32 %v1774, 16
      %v1779 = vshrl.u32 %v1774, 16
      %vm1780 = vc.u32 %v1772, %v1776
      %v1781 = vsel %vm1780, 1, 0
      %v1782 = vadd.s32 %v1772, %v1776
      %v1783 = vadd.s32 %v1775, %v1781
      %vm1784 = vc.u32 %v1782, %v1778
      %v1785 = vsel %vm1784, 1, 0
      %v1786 = vadd.s32 %v1782, %v1778
      %v1787 = vadd.s32 %v1783, %v1785
      %v1788 = vadd.s32 %v1787, %v1777
      %v1789 = vadd.s32 %v1788, %v1779
      %v1790 = vmul.u32 %v1745, %v1736
      %v1791 = vadd.s32 %v1767, %v1786
      %vm1792 = vc.u32 %v1767, %v1786
      %v1793 = vadd.s32 %v1789, 1
      %v1794 = vsel %vm1792, %v1793, %v1789
      %v1795 = vadd.s32 %v1790, %v1794
      %v1796 = vadd.s32 %v1795, 536870912
      %v1797 = vshrl.u32 %v1796, 30
      %v1798 = vshll.u32 %v1797, 30
      %v1799 = vsub.s32 %v1795, %v1798
      %vm1800 = vcmp.lt.s32.totalorder %v1799, 0
      %v1801 = vsub.s32 0, %v1799
      %v1802 = vsel %vm1800, %v1801, %v1799
      %v1803 = vclz %v1802
      %v1804 = vsub.s32 %v1803, 2
      %vm1805 = vcmp.gt.s32.totalorder 0, %v1804
      %v1806 = vsel %vm1805, 0, %v1804
      %v1807 = vsub.s32 32, %v1806
      %v1808 = vshll.u32 %v1799, %v1806
      %v1809 = vshrl.u32 %v1791, %v1807
      %v1810 = vor.u32 %v1808, %v1809
      %v1811 = vsub.s32 4294967266, %v1806
      %v1812 = vadd.s32 %v1811, 127
      %v1813 = vshll.u32 %v1812, 23
      %v1814 = vor.u32 4788187, %v1813
      %v1815 = vand.u32 2147483647, %v1814
      %v1817 = vcvt.s32.f32 %v1810
      %v1818 = vmul.f32 %v1817, %v1815
      %v1819 = vxor.u32 %v1818, 2147483648
      %v1820 = vsel %vm1699, %v1819, %v1818
      %v1821 = vsub.s32 4, %v1797
      %v1822 = vsel %vm1699, %v1821, %v1797
      %v1823 = vsel %vm1698, %v272, %v1820
      %v1824 = vsel %vm1698, 0, %v1822
      %v1825 = vmul.f32 %v1823, %v1823
      %v1826 = vmul.f32 %v1825, -0.001358992
      %v1827 = vadd.f32 %v1826, 0.041655596
      %v1828 = vmul.f32 %v1825, %v1827
      %v1829 = vadd.f32 %v1828, -0.4999988
      %v1830 = vmul.f32 %v1825, %v1829
      %v1831 = vadd.f32 1.0, %v1830
      %v1832 = vmul.f32 %v1823, %v1823
      %v1833 = vmul.f32 %v1832, -0.00019511016
      %v1834 = vadd.f32 %v1833, 0.008332121
      %v1835 = vmul.f32 %v1832, %v1834
      %v1836 = vadd.f32 %v1835, -0.16666654
      %v1837 = vmul.f32 %v1832, %v1836
      %v1838 = vadd.f32 %v1837, 1.0
      %v1839 = vmul.f32 %v1838, %v1823
      %vm1840 = vweird.f32 %v272
      %v1841 = vand.u32 %v1824, 3
      %vm1842 = vcmp.lt.s32.totalorder %v1841, 2
      %vm1843 = vcmp.eq.s32.totalorder %v1841, 0
      %v1844 = vxor.u32 %v1839, 2147483648
      %v1845 = vsel %vm1843, %v1831, %v1844
      %vm1846 = vcmp.eq.s32.totalorder %v1841, 2
      %v1847 = vxor.u32 %v1831, 2147483648
      %v1848 = vsel %vm1846, %v1847, %v1839
      %v1849 = vsel %vm1842, %v1845, %v1848
      %v1850 = vsel %vm1840, nan, %v1849
      %v1851 = vand.u32 2147483647, %v273
      %vm1852 = vcmp.le.f32.partialorder %v1851, 0.7853982
      %vm1853 = vcmp.lt.s32.totalorder %v273, 0
      %v1854 = vand.u32 %v273, 2139095040
      %v1855 = vshrl.u32 %v1854, 23
      %v1856 = vsub.s32 %v1855, 127
      %v1857 = vand.u32 2147483647, %v273
      %v1858 = vand.u32 %v1857, 8388607
      %v1859 = vor.u32 %v1858, 8388608
      %v1860 = vsub.s32 0, %v1859
      %v1861 = vadd.s32 %v1856, 1
      %vm1862 = vcmp.gt.s32.totalorder %v1861, 0
      %v1863 = vsel %vm1862, %v1861, 0
      %v1864 = vshrl.u32 %v1863, 5
      %v1865 = vand.u32 %v1863, 31
      %v1866 = vsub.s32 32, %v1865
      %v1867 = vshrl.u32 683565275, %v1866
      %v1868 = vshll.u32 683565275, %v1865
      %v1869 = vshrl.u32 2475754826, %v1866
      %v1870 = vor.u32 %v1868, %v1869
      %v1871 = vshll.u32 2475754826, %v1865
      %v1872 = vshrl.u32 2131351028, %v1866
      %v1873 = vor.u32 %v1871, %v1872
      %v1874 = vshll.u32 2131351028, %v1865
      %v1875 = vshrl.u32 2102212464, %v1866
      %v1876 = vor.u32 %v1874, %v1875
      %v1877 = vshll.u32 2102212464, %v1865
      %v1878 = vshrl.u32 920167782, %v1866
      %v1879 = vor.u32 %v1877, %v1878
      %v1880 = vshll.u32 920167782, %v1865
      %v1881 = vshrl.u32 1326507024, %v1866
      %v1882 = vor.u32 %v1880, %v1881
      %vm1883 = vcmp.lt.s32.totalorder %v1864, 1
      %vm1884 = vcmp.lt.s32.totalorder %v1864, 2
      %vm1885 = vcmp.lt.s32.totalorder %v1864, 3
      %vm1886 = vcmp.lt.s32.totalorder %v1864, 4
      %v1887 = vsel %vm1883, %v1867, %v1870
      %v1888 = vsel %vm1886, %v1876, 2102212464
      %v1889 = vsel %vm1885, %v1873, %v1888
      %v1890 = vsel %vm1884, %v1887, %v1889
      %v1891 = vsel %vm1883, %v1870, %v1873
      %v1892 = vsel %vm1886, %v1879, 920167782
      %v1893 = vsel %vm1885, %v1876, %v1892
      %v1894 = vsel %vm1884, %v1891, %v1893
      %v1895 = vsel %vm1883, %v1873, %v1876
      %v1896 = vsel %vm1886, %v1882, 1326507024
      %v1897 = vsel %vm1885, %v1879, %v1896
      %v1898 = vsel %vm1884, %v1895, %v1897
      %v1899 = vshll.u32 %v1859, 8
      %v1900 = vand.u32 %v1899, 65535
      %v1901 = vshrl.u32 %v1899, 16
      %v1902 = vand.u32 %v1898, 65535
      %v1903 = vshrl.u32 %v1898, 16
      %v1904 = vmul.u32 %v1900, %v1902
      %v1905 = vmul.u32 %v1900, %v1903
      %v1906 = vmul.u32 %v1901, %v1902
      %v1907 = vmul.u32 %v1901, %v1903
      %v1908 = vshll.u32 %v1905, 16
      %v1909 = vshrl.u32 %v1905, 16
      %v1910 = vshll.u32 %v1906, 16
      %v1911 = vshrl.u32 %v1906, 16
      %vm1912 = vc.u32 %v1904, %v1908
      %v1913 = vsel %vm1912, 1, 0
      %v1914 = vadd.s32 %v1904, %v1908
      %v1915 = vadd.s32 %v1907, %v1913
      %vm1916 = vc.u32 %v1914, %v1910
      %v1917 = vsel %vm1916, 1, 0
      %v1918 = vadd.s32 %v1914, %v1910
      %v1919 = vadd.s32 %v1915, %v1917
      %v1920 = vadd.s32 %v1919, %v1909
      %v1921 = vadd.s32 %v1920, %v1911
      %v1922 = vand.u32 %v1899, 65535
      %v1923 = vshrl.u32 %v1899, 16
      %v1924 = vand.u32 %v1894, 65535
      %v1925 = vshrl.u32 %v1894, 16
      %v1926 = vmul.u32 %v1922, %v1924
      %v1927 = vmul.u32 %v1922, %v1925
      %v1928 = vmul.u32 %v1923, %v1924
      %v1929 = vmul.u32 %v1923, %v1925
      %v1930 = vshll.u32 %v1927, 16
      %v1931 = vshrl.u32 %v1927, 16
      %v1932 = vshll.u32 %v1928, 16
      %v1933 = vshrl.u32 %v1928, 16
      %vm1934 = vc.u32 %v1926, %v1930
      %v1935 = vsel %vm1934, 1, 0
      %v1936 = vadd.s32 %v1926, %v1930
      %v1937 = vadd.s32 %v1929, %v1935
      %vm1938 = vc.u32 %v1936, %v1932
      %v1939 = vsel %vm1938, 1, 0
      %v1940 = vadd.s32 %v1936, %v1932
      %v1941 = vadd.s32 %v1937, %v1939
      %v1942 = vadd.s32 %v1941, %v1931
      %v1943 = vadd.s32 %v1942, %v1933
      %v1944 = vmul.u32 %v1899, %v1890
      %v1945 = vadd.s32 %v1921, %v1940
      %vm1946 = vc.u32 %v1921, %v1940
      %v1947 = vadd.s32 %v1943, 1
      %v1948 = vsel %vm1946, %v1947, %v1943
      %v1949 = vadd.s32 %v1944, %v1948
      %v1950 = vadd.s32 %v1949, 536870912
      %v1951 = vshrl.u32 %v1950, 30
      %v1952 = vshll.u32 %v1951, 30
      %v1953 = vsub.s32 %v1949, %v1952
      %vm1954 = vcmp.lt.s32.totalorder %v1953, 0
      %v1955 = vsub.s32 0, %v1953
      %v1956 = vsel %vm1954, %v1955, %v1953
      %v1957 = vclz %v1956
      %v1958 = vsub.s32 %v1957, 2
      %vm1959 = vcmp.gt.s32.totalorder 0, %v1958
      %v1960 = vsel %vm1959, 0, %v1958
      %v1961 = vsub.s32 32, %v1960
      %v1962 = vshll.u32 %v1953, %v1960
      %v1963 = vshrl.u32 %v1945, %v1961
      %v1964 = vor.u32 %v1962, %v1963
      %v1965 = vsub.s32 4294967266, %v1960
      %v1966 = vadd.s32 %v1965, 127
      %v1967 = vshll.u32 %v1966, 23
      %v1968 = vor.u32 4788187, %v1967
      %v1969 = vand.u32 2147483647, %v1968
      %v1971 = vcvt.s32.f32 %v1964
      %v1972 = vmul.f32 %v1971, %v1969
      %v1973 = vxor.u32 %v1972, 2147483648
      %v1974 = vsel %vm1853, %v1973, %v1972
      %v1975 = vsub.s32 4, %v1951
      %v1976 = vsel %vm1853, %v1975, %v1951
      %v1977 = vsel %vm1852, %v273, %v1974
      %v1978 = vsel %vm1852, 0, %v1976
      %v1979 = vmul.f32 %v1977, %v1977
      %v1980 = vmul.f32 %v1979, -0.001358992
      %v1981 = vadd.f32 %v1980, 0.041655596
      %v1982 = vmul.f32 %v1979, %v1981
      %v1983 = vadd.f32 %v1982, -0.4999988
      %v1984 = vmul.f32 %v1979, %v1983
      %v1985 = vadd.f32 1.0, %v1984
      %v1986 = vmul.f32 %v1977, %v1977
      %v1987 = vmul.f32 %v1986, -0.00019511016
      %v1988 = vadd.f32 %v1987, 0.008332121
      %v1989 = vmul.f32 %v1986, %v1988
      %v1990 = vadd.f32 %v1989, -0.16666654
      %v1991 = vmul.f32 %v1986, %v1990
      %v1992 = vadd.f32 %v1991, 1.0
      %v1993 = vmul.f32 %v1992, %v1977
      %vm1994 = vweird.f32 %v273
      %v1995 = vand.u32 %v1978, 3
      %vm1996 = vcmp.lt.s32.totalorder %v1995, 2
      %vm1997 = vcmp.eq.s32.totalorder %v1995, 0
      %v1998 = vxor.u32 %v1993, 2147483648
      %v1999 = vsel %vm1997, %v1985, %v1998
      %vm2000 = vcmp.eq.s32.totalorder %v1995, 2
      %v2001 = vxor.u32 %v1985, 2147483648
      %v2002 = vsel %vm2000, %v2001, %v1993
      %v2003 = vsel %vm1996, %v1999, %v2002
      %v2004 = vsel %vm1994, nan, %v2003
      %v2005 = vand.u32 2147483647, %v274
      %vm2006 = vcmp.le.f32.partialorder %v2005, 0.7853982
      %vm2007 = vcmp.lt.s32.totalorder %v274, 0
      %v2008 = vand.u32 %v274, 2139095040
      %v2009 = vshrl.u32 %v2008, 23
      %v2010 = vsub.s32 %v2009, 127
      %v2011 = vand.u32 2147483647, %v274
      %v2012 = vand.u32 %v2011, 8388607
      %v2013 = vor.u32 %v2012, 8388608
      %v2014 = vsub.s32 0, %v2013
      %v2015 = vadd.s32 %v2010, 1
      %vm2016 = vcmp.gt.s32.totalorder %v2015, 0
      %v2017 = vsel %vm2016, %v2015, 0
      %v2018 = vshrl.u32 %v2017, 5
      %v2019 = vand.u32 %v2017, 31
      %v2020 = vsub.s32 32, %v2019
      %v2021 = vshrl.u32 683565275, %v2020
      %v2022 = vshll.u32 683565275, %v2019
      %v2023 = vshrl.u32 2475754826, %v2020
      %v2024 = vor.u32 %v2022, %v2023
      %v2025 = vshll.u32 2475754826, %v2019
      %v2026 = vshrl.u32 2131351028, %v2020
      %v2027 = vor.u32 %v2025, %v2026
      %v2028 = vshll.u32 2131351028, %v2019
      %v2029 = vshrl.u32 2102212464, %v2020
      %v2030 = vor.u32 %v2028, %v2029
      %v2031 = vshll.u32 2102212464, %v2019
      %v2032 = vshrl.u32 920167782, %v2020
      %v2033 = vor.u32 %v2031, %v2032
      %v2034 = vshll.u32 920167782, %v2019
      %v2035 = vshrl.u32 1326507024, %v2020
      %v2036 = vor.u32 %v2034, %v2035
      %vm2037 = vcmp.lt.s32.totalorder %v2018, 1
      %vm2038 = vcmp.lt.s32.totalorder %v2018, 2
      %vm2039 = vcmp.lt.s32.totalorder %v2018, 3
      %vm2040 = vcmp.lt.s32.totalorder %v2018, 4
      %v2041 = vsel %vm2037, %v2021, %v2024
      %v2042 = vsel %vm2040, %v2030, 2102212464
      %v2043 = vsel %vm2039, %v2027, %v2042
      %v2044 = vsel %vm2038, %v2041, %v2043
      %v2045 = vsel %vm2037, %v2024, %v2027
      %v2046 = vsel %vm2040, %v2033, 920167782
      %v2047 = vsel %vm2039, %v2030, %v2046
      %v2048 = vsel %vm2038, %v2045, %v2047
      %v2049 = vsel %vm2037, %v2027, %v2030
      %v2050 = vsel %vm2040, %v2036, 1326507024
      %v2051 = vsel %vm2039, %v2033, %v2050
      %v2052 = vsel %vm2038, %v2049, %v2051
      %v2053 = vshll.u32 %v2013, 8
      %v2054 = vand.u32 %v2053, 65535
      %v2055 = vshrl.u32 %v2053, 16
      %v2056 = vand.u32 %v2052, 65535
      %v2057 = vshrl.u32 %v2052, 16
      %v2058 = vmul.u32 %v2054, %v2056
      %v2059 = vmul.u32 %v2054, %v2057
      %v2060 = vmul.u32 %v2055, %v2056
      %v2061 = vmul.u32 %v2055, %v2057
      %v2062 = vshll.u32 %v2059, 16
      %v2063 = vshrl.u32 %v2059, 16
      %v2064 = vshll.u32 %v2060, 16
      %v2065 = vshrl.u32 %v2060, 16
      %vm2066 = vc.u32 %v2058, %v2062
      %v2067 = vsel %vm2066, 1, 0
      %v2068 = vadd.s32 %v2058, %v2062
      %v2069 = vadd.s32 %v2061, %v2067
      %vm2070 = vc.u32 %v2068, %v2064
      %v2071 = vsel %vm2070, 1, 0
      %v2072 = vadd.s32 %v2068, %v2064
      %v2073 = vadd.s32 %v2069, %v2071
      %v2074 = vadd.s32 %v2073, %v2063
      %v2075 = vadd.s32 %v2074, %v2065
      %v2076 = vand.u32 %v2053, 65535
      %v2077 = vshrl.u32 %v2053, 16
      %v2078 = vand.u32 %v2048, 65535
      %v2079 = vshrl.u32 %v2048, 16
      %v2080 = vmul.u32 %v2076, %v2078
      %v2081 = vmul.u32 %v2076, %v2079
      %v2082 = vmul.u32 %v2077, %v2078
      %v2083 = vmul.u32 %v2077, %v2079
      %v2084 = vshll.u32 %v2081, 16
      %v2085 = vshrl.u32 %v2081, 16
      %v2086 = vshll.u32 %v2082, 16
      %v2087 = vshrl.u32 %v2082, 16
      %vm2088 = vc.u32 %v2080, %v2084
      %v2089 = vsel %vm2088, 1, 0
      %v2090 = vadd.s32 %v2080, %v2084
      %v2091 = vadd.s32 %v2083, %v2089
      %vm2092 = vc.u32 %v2090, %v2086
      %v2093 = vsel %vm2092, 1, 0
      %v2094 = vadd.s32 %v2090, %v2086
      %v2095 = vadd.s32 %v2091, %v2093
      %v2096 = vadd.s32 %v2095, %v2085
      %v2097 = vadd.s32 %v2096, %v2087
      %v2098 = vmul.u32 %v2053, %v2044
      %v2099 = vadd.s32 %v2075, %v2094
      %vm2100 = vc.u32 %v2075, %v2094
      %v2101 = vadd.s32 %v2097, 1
      %v2102 = vsel %vm2100, %v2101, %v2097
      %v2103 = vadd.s32 %v2098, %v2102
      %v2104 = vadd.s32 %v2103, 536870912
      %v2105 = vshrl.u32 %v2104, 30
      %v2106 = vshll.u32 %v2105, 30
      %v2107 = vsub.s32 %v2103, %v2106
      %vm2108 = vcmp.lt.s32.totalorder %v2107, 0
      %v2109 = vsub.s32 0, %v2107
      %v2110 = vsel %vm2108, %v2109, %v2107
      %v2111 = vclz %v2110
      %v2112 = vsub.s32 %v2111, 2
      %vm2113 = vcmp.gt.s32.totalorder 0, %v2112
      %v2114 = vsel %vm2113, 0, %v2112
      %v2115 = vsub.s32 32, %v2114
      %v2116 = vshll.u32 %v2107, %v2114
      %v2117 = vshrl.u32 %v2099, %v2115
      %v2118 = vor.u32 %v2116, %v2117
      %v2119 = vsub.s32 4294967266, %v2114
      %v2120 = vadd.s32 %v2119, 127
      %v2121 = vshll.u32 %v2120, 23
      %v2122 = vor.u32 4788187, %v2121
      %v2123 = vand.u32 2147483647, %v2122
      %v2125 = vcvt.s32.f32 %v2118
      %v2126 = vmul.f32 %v2125, %v2123
      %v2127 = vxor.u32 %v2126, 2147483648
      %v2128 = vsel %vm2007, %v2127, %v2126
      %v2129 = vsub.s32 4, %v2105
      %v2130 = vsel %vm2007, %v2129, %v2105
      %v2131 = vsel %vm2006, %v274, %v2128
      %v2132 = vsel %vm2006, 0, %v2130
      %v2133 = vmul.f32 %v2131, %v2131
      %v2134 = vmul.f32 %v2133, -0.001358992
      %v2135 = vadd.f32 %v2134, 0.041655596
      %v2136 = vmul.f32 %v2133, %v2135
      %v2137 = vadd.f32 %v2136, -0.4999988
      %v2138 = vmul.f32 %v2133, %v2137
      %v2139 = vadd.f32 1.0, %v2138
      %v2140 = vmul.f32 %v2131, %v2131
      %v2141 = vmul.f32 %v2140, -0.00019511016
      %v2142 = vadd.f32 %v2141, 0.008332121
      %v2143 = vmul.f32 %v2140, %v2142
      %v2144 = vadd.f32 %v2143, -0.16666654
      %v2145 = vmul.f32 %v2140, %v2144
      %v2146 = vadd.f32 %v2145, 1.0
      %v2147 = vmul.f32 %v2146, %v2131
      %vm2148 = vweird.f32 %v274
      %v2149 = vand.u32 %v2132, 3
      %vm2150 = vcmp.lt.s32.totalorder %v2149, 2
      %vm2151 = vcmp.eq.s32.totalorder %v2149, 0
      %v2152 = vxor.u32 %v2147, 2147483648
      %v2153 = vsel %vm2151, %v2139, %v2152
      %vm2154 = vcmp.eq.s32.totalorder %v2149, 2
      %v2155 = vxor.u32 %v2139, 2147483648
      %v2156 = vsel %vm2154, %v2155, %v2147
      %v2157 = vsel %vm2150, %v2153, %v2156
      %v2158 = vsel %vm2148, nan, %v2157
      %v2159 = vand.u32 2147483647, %v275
      %vm2160 = vcmp.le.f32.partialorder %v2159, 0.7853982
      %vm2161 = vcmp.lt.s32.totalorder %v275, 0
      %v2162 = vand.u32 %v275, 2139095040
      %v2163 = vshrl.u32 %v2162, 23
      %v2164 = vsub.s32 %v2163, 127
      %v2165 = vand.u32 2147483647, %v275
      %v2166 = vand.u32 %v2165, 8388607
      %v2167 = vor.u32 %v2166, 8388608
      %v2168 = vsub.s32 0, %v2167
      %v2169 = vadd.s32 %v2164, 1
      %vm2170 = vcmp.gt.s32.totalorder %v2169, 0
      %v2171 = vsel %vm2170, %v2169, 0
      %v2172 = vshrl.u32 %v2171, 5
      %v2173 = vand.u32 %v2171, 31
      %v2174 = vsub.s32 32, %v2173
      %v2175 = vshrl.u32 683565275, %v2174
      %v2176 = vshll.u32 683565275, %v2173
      %v2177 = vshrl.u32 2475754826, %v2174
      %v2178 = vor.u32 %v2176, %v2177
      %v2179 = vshll.u32 2475754826, %v2173
      %v2180 = vshrl.u32 2131351028, %v2174
      %v2181 = vor.u32 %v2179, %v2180
      %v2182 = vshll.u32 2131351028, %v2173
      %v2183 = vshrl.u32 2102212464, %v2174
      %v2184 = vor.u32 %v2182, %v2183
      %v2185 = vshll.u32 2102212464, %v2173
      %v2186 = vshrl.u32 920167782, %v2174
      %v2187 = vor.u32 %v2185, %v2186
      %v2188 = vshll.u32 920167782, %v2173
      %v2189 = vshrl.u32 1326507024, %v2174
      %v2190 = vor.u32 %v2188, %v2189
      %vm2191 = vcmp.lt.s32.totalorder %v2172, 1
      %vm2192 = vcmp.lt.s32.totalorder %v2172, 2
      %vm2193 = vcmp.lt.s32.totalorder %v2172, 3
      %vm2194 = vcmp.lt.s32.totalorder %v2172, 4
      %v2195 = vsel %vm2191, %v2175, %v2178
      %v2196 = vsel %vm2194, %v2184, 2102212464
      %v2197 = vsel %vm2193, %v2181, %v2196
      %v2198 = vsel %vm2192, %v2195, %v2197
      %v2199 = vsel %vm2191, %v2178, %v2181
      %v2200 = vsel %vm2194, %v2187, 920167782
      %v2201 = vsel %vm2193, %v2184, %v2200
      %v2202 = vsel %vm2192, %v2199, %v2201
      %v2203 = vsel %vm2191, %v2181, %v2184
      %v2204 = vsel %vm2194, %v2190, 1326507024
      %v2205 = vsel %vm2193, %v2187, %v2204
      %v2206 = vsel %vm2192, %v2203, %v2205
      %v2207 = vshll.u32 %v2167, 8
      %v2208 = vand.u32 %v2207, 65535
      %v2209 = vshrl.u32 %v2207, 16
      %v2210 = vand.u32 %v2206, 65535
      %v2211 = vshrl.u32 %v2206, 16
      %v2212 = vmul.u32 %v2208, %v2210
      %v2213 = vmul.u32 %v2208, %v2211
      %v2214 = vmul.u32 %v2209, %v2210
      %v2215 = vmul.u32 %v2209, %v2211
      %v2216 = vshll.u32 %v2213, 16
      %v2217 = vshrl.u32 %v2213, 16
      %v2218 = vshll.u32 %v2214, 16
      %v2219 = vshrl.u32 %v2214, 16
      %vm2220 = vc.u32 %v2212, %v2216
      %v2221 = vsel %vm2220, 1, 0
      %v2222 = vadd.s32 %v2212, %v2216
      %v2223 = vadd.s32 %v2215, %v2221
      %vm2224 = vc.u32 %v2222, %v2218
      %v2225 = vsel %vm2224, 1, 0
      %v2226 = vadd.s32 %v2222, %v2218
      %v2227 = vadd.s32 %v2223, %v2225
      %v2228 = vadd.s32 %v2227, %v2217
      %v2229 = vadd.s32 %v2228, %v2219
      %v2230 = vand.u32 %v2207, 65535
      %v2231 = vshrl.u32 %v2207, 16
      %v2232 = vand.u32 %v2202, 65535
      %v2233 = vshrl.u32 %v2202, 16
      %v2234 = vmul.u32 %v2230, %v2232
      %v2235 = vmul.u32 %v2230, %v2233
      %v2236 = vmul.u32 %v2231, %v2232
      %v2237 = vmul.u32 %v2231, %v2233
      %v2238 = vshll.u32 %v2235, 16
      %v2239 = vshrl.u32 %v2235, 16
      %v2240 = vshll.u32 %v2236, 16
      %v2241 = vshrl.u32 %v2236, 16
      %vm2242 = vc.u32 %v2234, %v2238
      %v2243 = vsel %vm2242, 1, 0
      %v2244 = vadd.s32 %v2234, %v2238
      %v2245 = vadd.s32 %v2237, %v2243
      %vm2246 = vc.u32 %v2244, %v2240
      %v2247 = vsel %vm2246, 1, 0
      %v2248 = vadd.s32 %v2244, %v2240
      %v2249 = vadd.s32 %v2245, %v2247
      %v2250 = vadd.s32 %v2249, %v2239
      %v2251 = vadd.s32 %v2250, %v2241
      %v2252 = vmul.u32 %v2207, %v2198
      %v2253 = vadd.s32 %v2229, %v2248
      %vm2254 = vc.u32 %v2229, %v2248
      %v2255 = vadd.s32 %v2251, 1
      %v2256 = vsel %vm2254, %v2255, %v2251
      %v2257 = vadd.s32 %v2252, %v2256
      %v2258 = vadd.s32 %v2257, 536870912
      %v2259 = vshrl.u32 %v2258, 30
      %v2260 = vshll.u32 %v2259, 30
      %v2261 = vsub.s32 %v2257, %v2260
      %vm2262 = vcmp.lt.s32.totalorder %v2261, 0
      %v2263 = vsub.s32 0, %v2261
      %v2264 = vsel %vm2262, %v2263, %v2261
      %v2265 = vclz %v2264
      %v2266 = vsub.s32 %v2265, 2
      %vm2267 = vcmp.gt.s32.totalorder 0, %v2266
      %v2268 = vsel %vm2267, 0, %v2266
      %v2269 = vsub.s32 32, %v2268
      %v2270 = vshll.u32 %v2261, %v2268
      %v2271 = vshrl.u32 %v2253, %v2269
      %v2272 = vor.u32 %v2270, %v2271
      %v2273 = vsub.s32 4294967266, %v2268
      %v2274 = vadd.s32 %v2273, 127
      %v2275 = vshll.u32 %v2274, 23
      %v2276 = vor.u32 4788187, %v2275
      %v2277 = vand.u32 2147483647, %v2276
      %v2279 = vcvt.s32.f32 %v2272
      %v2280 = vmul.f32 %v2279, %v2277
      %v2281 = vxor.u32 %v2280, 2147483648
      %v2282 = vsel %vm2161, %v2281, %v2280
      %v2283 = vsub.s32 4, %v2259
      %v2284 = vsel %vm2161, %v2283, %v2259
      %v2285 = vsel %vm2160, %v275, %v2282
      %v2286 = vsel %vm2160, 0, %v2284
      %v2287 = vmul.f32 %v2285, %v2285
      %v2288 = vmul.f32 %v2287, -0.001358992
      %v2289 = vadd.f32 %v2288, 0.041655596
      %v2290 = vmul.f32 %v2287, %v2289
      %v2291 = vadd.f32 %v2290, -0.4999988
      %v2292 = vmul.f32 %v2287, %v2291
      %v2293 = vadd.f32 1.0, %v2292
      %v2294 = vmul.f32 %v2285, %v2285
      %v2295 = vmul.f32 %v2294, -0.00019511016
      %v2296 = vadd.f32 %v2295, 0.008332121
      %v2297 = vmul.f32 %v2294, %v2296
      %v2298 = vadd.f32 %v2297, -0.16666654
      %v2299 = vmul.f32 %v2294, %v2298
      %v2300 = vadd.f32 %v2299, 1.0
      %v2301 = vmul.f32 %v2300, %v2285
      %vm2302 = vweird.f32 %v275
      %v2303 = vand.u32 %v2286, 3
      %vm2304 = vcmp.lt.s32.totalorder %v2303, 2
      %vm2305 = vcmp.eq.s32.totalorder %v2303, 0
      %v2306 = vxor.u32 %v2301, 2147483648
      %v2307 = vsel %vm2305, %v2293, %v2306
      %vm2308 = vcmp.eq.s32.totalorder %v2303, 2
      %v2309 = vxor.u32 %v2293, 2147483648
      %v2310 = vsel %vm2308, %v2309, %v2301
      %v2311 = vsel %vm2304, %v2307, %v2310
      %v2312 = vsel %vm2302, nan, %v2311
      %v2313 = vand.u32 2147483647, %v276
      %vm2314 = vcmp.le.f32.partialorder %v2313, 0.7853982
      %vm2315 = vcmp.lt.s32.totalorder %v276, 0
      %v2316 = vand.u32 %v276, 2139095040
      %v2317 = vshrl.u32 %v2316, 23
      %v2318 = vsub.s32 %v2317, 127
      %v2319 = vand.u32 2147483647, %v276
      %v2320 = vand.u32 %v2319, 8388607
      %v2321 = vor.u32 %v2320, 8388608
      %v2322 = vsub.s32 0, %v2321
      %v2323 = vadd.s32 %v2318, 1
      %vm2324 = vcmp.gt.s32.totalorder %v2323, 0
      %v2325 = vsel %vm2324, %v2323, 0
      %v2326 = vshrl.u32 %v2325, 5
      %v2327 = vand.u32 %v2325, 31
      %v2328 = vsub.s32 32, %v2327
      %v2329 = vshrl.u32 683565275, %v2328
      %v2330 = vshll.u32 683565275, %v2327
      %v2331 = vshrl.u32 2475754826, %v2328
      %v2332 = vor.u32 %v2330, %v2331
      %v2333 = vshll.u32 2475754826, %v2327
      %v2334 = vshrl.u32 2131351028, %v2328
      %v2335 = vor.u32 %v2333, %v2334
      %v2336 = vshll.u32 2131351028, %v2327
      %v2337 = vshrl.u32 2102212464, %v2328
      %v2338 = vor.u32 %v2336, %v2337
      %v2339 = vshll.u32 2102212464, %v2327
      %v2340 = vshrl.u32 920167782, %v2328
      %v2341 = vor.u32 %v2339, %v2340
      %v2342 = vshll.u32 920167782, %v2327
      %v2343 = vshrl.u32 1326507024, %v2328
      %v2344 = vor.u32 %v2342, %v2343
      %vm2345 = vcmp.lt.s32.totalorder %v2326, 1
      %vm2346 = vcmp.lt.s32.totalorder %v2326, 2
      %vm2347 = vcmp.lt.s32.totalorder %v2326, 3
      %vm2348 = vcmp.lt.s32.totalorder %v2326, 4
      %v2349 = vsel %vm2345, %v2329, %v2332
      %v2350 = vsel %vm2348, %v2338, 2102212464
      %v2351 = vsel %vm2347, %v2335, %v2350
      %v2352 = vsel %vm2346, %v2349, %v2351
      %v2353 = vsel %vm2345, %v2332, %v2335
      %v2354 = vsel %vm2348, %v2341, 920167782
      %v2355 = vsel %vm2347, %v2338, %v2354
      %v2356 = vsel %vm2346, %v2353, %v2355
      %v2357 = vsel %vm2345, %v2335, %v2338
      %v2358 = vsel %vm2348, %v2344, 1326507024
      %v2359 = vsel %vm2347, %v2341, %v2358
      %v2360 = vsel %vm2346, %v2357, %v2359
      %v2361 = vshll.u32 %v2321, 8
      %v2362 = vand.u32 %v2361, 65535
      %v2363 = vshrl.u32 %v2361, 16
      %v2364 = vand.u32 %v2360, 65535
      %v2365 = vshrl.u32 %v2360, 16
      %v2366 = vmul.u32 %v2362, %v2364
      %v2367 = vmul.u32 %v2362, %v2365
      %v2368 = vmul.u32 %v2363, %v2364
      %v2369 = vmul.u32 %v2363, %v2365
      %v2370 = vshll.u32 %v2367, 16
      %v2371 = vshrl.u32 %v2367, 16
      %v2372 = vshll.u32 %v2368, 16
      %v2373 = vshrl.u32 %v2368, 16
      %vm2374 = vc.u32 %v2366, %v2370
      %v2375 = vsel %vm2374, 1, 0
      %v2376 = vadd.s32 %v2366, %v2370
      %v2377 = vadd.s32 %v2369, %v2375
      %vm2378 = vc.u32 %v2376, %v2372
      %v2379 = vsel %vm2378, 1, 0
      %v2380 = vadd.s32 %v2376, %v2372
      %v2381 = vadd.s32 %v2377, %v2379
      %v2382 = vadd.s32 %v2381, %v2371
      %v2383 = vadd.s32 %v2382, %v2373
      %v2384 = vand.u32 %v2361, 65535
      %v2385 = vshrl.u32 %v2361, 16
      %v2386 = vand.u32 %v2356, 65535
      %v2387 = vshrl.u32 %v2356, 16
      %v2388 = vmul.u32 %v2384, %v2386
      %v2389 = vmul.u32 %v2384, %v2387
      %v2390 = vmul.u32 %v2385, %v2386
      %v2391 = vmul.u32 %v2385, %v2387
      %v2392 = vshll.u32 %v2389, 16
      %v2393 = vshrl.u32 %v2389, 16
      %v2394 = vshll.u32 %v2390, 16
      %v2395 = vshrl.u32 %v2390, 16
      %vm2396 = vc.u32 %v2388, %v2392
      %v2397 = vsel %vm2396, 1, 0
      %v2398 = vadd.s32 %v2388, %v2392
      %v2399 = vadd.s32 %v2391, %v2397
      %vm2400 = vc.u32 %v2398, %v2394
      %v2401 = vsel %vm2400, 1, 0
      %v2402 = vadd.s32 %v2398, %v2394
      %v2403 = vadd.s32 %v2399, %v2401
      %v2404 = vadd.s32 %v2403, %v2393
      %v2405 = vadd.s32 %v2404, %v2395
      %v2406 = vmul.u32 %v2361, %v2352
      %v2407 = vadd.s32 %v2383, %v2402
      %vm2408 = vc.u32 %v2383, %v2402
      %v2409 = vadd.s32 %v2405, 1
      %v2410 = vsel %vm2408, %v2409, %v2405
      %v2411 = vadd.s32 %v2406, %v2410
      %v2412 = vadd.s32 %v2411, 536870912
      %v2413 = vshrl.u32 %v2412, 30
      %v2414 = vshll.u32 %v2413, 30
      %v2415 = vsub.s32 %v2411, %v2414
      %vm2416 = vcmp.lt.s32.totalorder %v2415, 0
      %v2417 = vsub.s32 0, %v2415
      %v2418 = vsel %vm2416, %v2417, %v2415
      %v2419 = vclz %v2418
      %v2420 = vsub.s32 %v2419, 2
      %vm2421 = vcmp.gt.s32.totalorder 0, %v2420
      %v2422 = vsel %vm2421, 0, %v2420
      %v2423 = vsub.s32 32, %v2422
      %v2424 = vshll.u32 %v2415, %v2422
      %v2425 = vshrl.u32 %v2407, %v2423
      %v2426 = vor.u32 %v2424, %v2425
      %v2427 = vsub.s32 4294967266, %v2422
      %v2428 = vadd.s32 %v2427, 127
      %v2429 = vshll.u32 %v2428, 23
      %v2430 = vor.u32 4788187, %v2429
      %v2431 = vand.u32 2147483647, %v2430
      %v2433 = vcvt.s32.f32 %v2426
      %v2434 = vmul.f32 %v2433, %v2431
      %v2435 = vxor.u32 %v2434, 2147483648
      %v2436 = vsel %vm2315, %v2435, %v2434
      %v2437 = vsub.s32 4, %v2413
      %v2438 = vsel %vm2315, %v2437, %v2413
      %v2439 = vsel %vm2314, %v276, %v2436
      %v2440 = vsel %vm2314, 0, %v2438
      %v2441 = vmul.f32 %v2439, %v2439
      %v2442 = vmul.f32 %v2441, -0.001358992
      %v2443 = vadd.f32 %v2442, 0.041655596
      %v2444 = vmul.f32 %v2441, %v2443
      %v2445 = vadd.f32 %v2444, -0.4999988
      %v2446 = vmul.f32 %v2441, %v2445
      %v2447 = vadd.f32 1.0, %v2446
      %v2448 = vmul.f32 %v2439, %v2439
      %v2449 = vmul.f32 %v2448, -0.00019511016
      %v2450 = vadd.f32 %v2449, 0.008332121
      %v2451 = vmul.f32 %v2448, %v2450
      %v2452 = vadd.f32 %v2451, -0.16666654
      %v2453 = vmul.f32 %v2448, %v2452
      %v2454 = vadd.f32 %v2453, 1.0
      %v2455 = vmul.f32 %v2454, %v2439
      %vm2456 = vweird.f32 %v276
      %v2457 = vand.u32 %v2440, 3
      %vm2458 = vcmp.lt.s32.totalorder %v2457, 2
      %vm2459 = vcmp.eq.s32.totalorder %v2457, 0
      %v2460 = vxor.u32 %v2455, 2147483648
      %v2461 = vsel %vm2459, %v2447, %v2460
      %vm2462 = vcmp.eq.s32.totalorder %v2457, 2
      %v2463 = vxor.u32 %v2447, 2147483648
      %v2464 = vsel %vm2462, %v2463, %v2455
      %v2465 = vsel %vm2458, %v2461, %v2464
      %v2466 = vsel %vm2456, nan, %v2465
      %v2467 = vand.u32 2147483647, %v277
      %vm2468 = vcmp.le.f32.partialorder %v2467, 0.7853982
      %vm2469 = vcmp.lt.s32.totalorder %v277, 0
      %v2470 = vand.u32 %v277, 2139095040
      %v2471 = vshrl.u32 %v2470, 23
      %v2472 = vsub.s32 %v2471, 127
      %v2473 = vand.u32 2147483647, %v277
      %v2474 = vand.u32 %v2473, 8388607
      %v2475 = vor.u32 %v2474, 8388608
      %v2476 = vsub.s32 0, %v2475
      %v2477 = vadd.s32 %v2472, 1
      %vm2478 = vcmp.gt.s32.totalorder %v2477, 0
      %v2479 = vsel %vm2478, %v2477, 0
      %v2480 = vshrl.u32 %v2479, 5
      %v2481 = vand.u32 %v2479, 31
      %v2482 = vsub.s32 32, %v2481
      %v2483 = vshrl.u32 683565275, %v2482
      %v2484 = vshll.u32 683565275, %v2481
      %v2485 = vshrl.u32 2475754826, %v2482
      %v2486 = vor.u32 %v2484, %v2485
      %v2487 = vshll.u32 2475754826, %v2481
      %v2488 = vshrl.u32 2131351028, %v2482
      %v2489 = vor.u32 %v2487, %v2488
      %v2490 = vshll.u32 2131351028, %v2481
      %v2491 = vshrl.u32 2102212464, %v2482
      %v2492 = vor.u32 %v2490, %v2491
      %v2493 = vshll.u32 2102212464, %v2481
      %v2494 = vshrl.u32 920167782, %v2482
      %v2495 = vor.u32 %v2493, %v2494
      %v2496 = vshll.u32 920167782, %v2481
      %v2497 = vshrl.u32 1326507024, %v2482
      %v2498 = vor.u32 %v2496, %v2497
      %vm2499 = vcmp.lt.s32.totalorder %v2480, 1
      %vm2500 = vcmp.lt.s32.totalorder %v2480, 2
      %vm2501 = vcmp.lt.s32.totalorder %v2480, 3
      %vm2502 = vcmp.lt.s32.totalorder %v2480, 4
      %v2503 = vsel %vm2499, %v2483, %v2486
      %v2504 = vsel %vm2502, %v2492, 2102212464
      %v2505 = vsel %vm2501, %v2489, %v2504
      %v2506 = vsel %vm2500, %v2503, %v2505
      %v2507 = vsel %vm2499, %v2486, %v2489
      %v2508 = vsel %vm2502, %v2495, 920167782
      %v2509 = vsel %vm2501, %v2492, %v2508
      %v2510 = vsel %vm2500, %v2507, %v2509
      %v2511 = vsel %vm2499, %v2489, %v2492
      %v2512 = vsel %vm2502, %v2498, 1326507024
      %v2513 = vsel %vm2501, %v2495, %v2512
      %v2514 = vsel %vm2500, %v2511, %v2513
      %v2515 = vshll.u32 %v2475, 8
      %v2516 = vand.u32 %v2515, 65535
      %v2517 = vshrl.u32 %v2515, 16
      %v2518 = vand.u32 %v2514, 65535
      %v2519 = vshrl.u32 %v2514, 16
      %v2520 = vmul.u32 %v2516, %v2518
      %v2521 = vmul.u32 %v2516, %v2519
      %v2522 = vmul.u32 %v2517, %v2518
      %v2523 = vmul.u32 %v2517, %v2519
      %v2524 = vshll.u32 %v2521, 16
      %v2525 = vshrl.u32 %v2521, 16
      %v2526 = vshll.u32 %v2522, 16
      %v2527 = vshrl.u32 %v2522, 16
      %vm2528 = vc.u32 %v2520, %v2524
      %v2529 = vsel %vm2528, 1, 0
      %v2530 = vadd.s32 %v2520, %v2524
      %v2531 = vadd.s32 %v2523, %v2529
      %vm2532 = vc.u32 %v2530, %v2526
      %v2533 = vsel %vm2532, 1, 0
      %v2534 = vadd.s32 %v2530, %v2526
      %v2535 = vadd.s32 %v2531, %v2533
      %v2536 = vadd.s32 %v2535, %v2525
      %v2537 = vadd.s32 %v2536, %v2527
      %v2538 = vand.u32 %v2515, 65535
      %v2539 = vshrl.u32 %v2515, 16
      %v2540 = vand.u32 %v2510, 65535
      %v2541 = vshrl.u32 %v2510, 16
      %v2542 = vmul.u32 %v2538, %v2540
      %v2543 = vmul.u32 %v2538, %v2541
      %v2544 = vmul.u32 %v2539, %v2540
      %v2545 = vmul.u32 %v2539, %v2541
      %v2546 = vshll.u32 %v2543, 16
      %v2547 = vshrl.u32 %v2543, 16
      %v2548 = vshll.u32 %v2544, 16
      %v2549 = vshrl.u32 %v2544, 16
      %vm2550 = vc.u32 %v2542, %v2546
      %v2551 = vsel %vm2550, 1, 0
      %v2552 = vadd.s32 %v2542, %v2546
      %v2553 = vadd.s32 %v2545, %v2551
      %vm2554 = vc.u32 %v2552, %v2548
      %v2555 = vsel %vm2554, 1, 0
      %v2556 = vadd.s32 %v2552, %v2548
      %v2557 = vadd.s32 %v2553, %v2555
      %v2558 = vadd.s32 %v2557, %v2547
      %v2559 = vadd.s32 %v2558, %v2549
      %v2560 = vmul.u32 %v2515, %v2506
      %v2561 = vadd.s32 %v2537, %v2556
      %vm2562 = vc.u32 %v2537, %v2556
      %v2563 = vadd.s32 %v2559, 1
      %v2564 = vsel %vm2562, %v2563, %v2559
      %v2565 = vadd.s32 %v2560, %v2564
      %v2566 = vadd.s32 %v2565, 536870912
      %v2567 = vshrl.u32 %v2566, 30
      %v2568 = vshll.u32 %v2567, 30
      %v2569 = vsub.s32 %v2565, %v2568
      %vm2570 = vcmp.lt.s32.totalorder %v2569, 0
      %v2571 = vsub.s32 0, %v2569
      %v2572 = vsel %vm2570, %v2571, %v2569
      %v2573 = vclz %v2572
      %v2574 = vsub.s32 %v2573, 2
      %vm2575 = vcmp.gt.s32.totalorder 0, %v2574
      %v2576 = vsel %vm2575, 0, %v2574
      %v2577 = vsub.s32 32, %v2576
      %v2578 = vshll.u32 %v2569, %v2576
      %v2579 = vshrl.u32 %v2561, %v2577
      %v2580 = vor.u32 %v2578, %v2579
      %v2581 = vsub.s32 4294967266, %v2576
      %v2582 = vadd.s32 %v2581, 127
      %v2583 = vshll.u32 %v2582, 23
      %v2584 = vor.u32 4788187, %v2583
      %v2585 = vand.u32 2147483647, %v2584
      %v2587 = vcvt.s32.f32 %v2580
      %v2588 = vmul.f32 %v2587, %v2585
      %v2589 = vxor.u32 %v2588, 2147483648
      %v2590 = vsel %vm2469, %v2589, %v2588
      %v2591 = vsub.s32 4, %v2567
      %v2592 = vsel %vm2469, %v2591, %v2567
      %v2593 = vsel %vm2468, %v277, %v2590
      %v2594 = vsel %vm2468, 0, %v2592
      %v2595 = vmul.f32 %v2593, %v2593
      %v2596 = vmul.f32 %v2595, -0.001358992
      %v2597 = vadd.f32 %v2596, 0.041655596
      %v2598 = vmul.f32 %v2595, %v2597
      %v2599 = vadd.f32 %v2598, -0.4999988
      %v2600 = vmul.f32 %v2595, %v2599
      %v2601 = vadd.f32 1.0, %v2600
      %v2602 = vmul.f32 %v2593, %v2593
      %v2603 = vmul.f32 %v2602, -0.00019511016
      %v2604 = vadd.f32 %v2603, 0.008332121
      %v2605 = vmul.f32 %v2602, %v2604
      %v2606 = vadd.f32 %v2605, -0.16666654
      %v2607 = vmul.f32 %v2602, %v2606
      %v2608 = vadd.f32 %v2607, 1.0
      %v2609 = vmul.f32 %v2608, %v2593
      %vm2610 = vweird.f32 %v277
      %v2611 = vand.u32 %v2594, 3
      %vm2612 = vcmp.lt.s32.totalorder %v2611, 2
      %vm2613 = vcmp.eq.s32.totalorder %v2611, 0
      %v2614 = vxor.u32 %v2609, 2147483648
      %v2615 = vsel %vm2613, %v2601, %v2614
      %vm2616 = vcmp.eq.s32.totalorder %v2611, 2
      %v2617 = vxor.u32 %v2601, 2147483648
      %v2618 = vsel %vm2616, %v2617, %v2609
      %v2619 = vsel %vm2612, %v2615, %v2618
      %v2620 = vsel %vm2610, nan, %v2619
      %v2621 = vand.u32 2147483647, %v278
      %vm2622 = vcmp.le.f32.partialorder %v2621, 0.7853982
      %vm2623 = vcmp.lt.s32.totalorder %v278, 0
      %v2624 = vand.u32 %v278, 2139095040
      %v2625 = vshrl.u32 %v2624, 23
      %v2626 = vsub.s32 %v2625, 127
      %v2627 = vand.u32 2147483647, %v278
      %v2628 = vand.u32 %v2627, 8388607
      %v2629 = vor.u32 %v2628, 8388608
      %v2630 = vsub.s32 0, %v2629
      %v2631 = vadd.s32 %v2626, 1
      %vm2632 = vcmp.gt.s32.totalorder %v2631, 0
      %v2633 = vsel %vm2632, %v2631, 0
      %v2634 = vshrl.u32 %v2633, 5
      %v2635 = vand.u32 %v2633, 31
      %v2636 = vsub.s32 32, %v2635
      %v2637 = vshrl.u32 683565275, %v2636
      %v2638 = vshll.u32 683565275, %v2635
      %v2639 = vshrl.u32 2475754826, %v2636
      %v2640 = vor.u32 %v2638, %v2639
      %v2641 = vshll.u32 2475754826, %v2635
      %v2642 = vshrl.u32 2131351028, %v2636
      %v2643 = vor.u32 %v2641, %v2642
      %v2644 = vshll.u32 2131351028, %v2635
      %v2645 = vshrl.u32 2102212464, %v2636
      %v2646 = vor.u32 %v2644, %v2645
      %v2647 = vshll.u32 2102212464, %v2635
      %v2648 = vshrl.u32 920167782, %v2636
      %v2649 = vor.u32 %v2647, %v2648
      %v2650 = vshll.u32 920167782, %v2635
      %v2651 = vshrl.u32 1326507024, %v2636
      %v2652 = vor.u32 %v2650, %v2651
      %vm2653 = vcmp.lt.s32.totalorder %v2634, 1
      %vm2654 = vcmp.lt.s32.totalorder %v2634, 2
      %vm2655 = vcmp.lt.s32.totalorder %v2634, 3
      %vm2656 = vcmp.lt.s32.totalorder %v2634, 4
      %v2657 = vsel %vm2653, %v2637, %v2640
      %v2658 = vsel %vm2656, %v2646, 2102212464
      %v2659 = vsel %vm2655, %v2643, %v2658
      %v2660 = vsel %vm2654, %v2657, %v2659
      %v2661 = vsel %vm2653, %v2640, %v2643
      %v2662 = vsel %vm2656, %v2649, 920167782
      %v2663 = vsel %vm2655, %v2646, %v2662
      %v2664 = vsel %vm2654, %v2661, %v2663
      %v2665 = vsel %vm2653, %v2643, %v2646
      %v2666 = vsel %vm2656, %v2652, 1326507024
      %v2667 = vsel %vm2655, %v2649, %v2666
      %v2668 = vsel %vm2654, %v2665, %v2667
      %v2669 = vshll.u32 %v2629, 8
      %v2670 = vand.u32 %v2669, 65535
      %v2671 = vshrl.u32 %v2669, 16
      %v2672 = vand.u32 %v2668, 65535
      %v2673 = vshrl.u32 %v2668, 16
      %v2674 = vmul.u32 %v2670, %v2672
      %v2675 = vmul.u32 %v2670, %v2673
      %v2676 = vmul.u32 %v2671, %v2672
      %v2677 = vmul.u32 %v2671, %v2673
      %v2678 = vshll.u32 %v2675, 16
      %v2679 = vshrl.u32 %v2675, 16
      %v2680 = vshll.u32 %v2676, 16
      %v2681 = vshrl.u32 %v2676, 16
      %vm2682 = vc.u32 %v2674, %v2678
      %v2683 = vsel %vm2682, 1, 0
      %v2684 = vadd.s32 %v2674, %v2678
      %v2685 = vadd.s32 %v2677, %v2683
      %vm2686 = vc.u32 %v2684, %v2680
      %v2687 = vsel %vm2686, 1, 0
      %v2688 = vadd.s32 %v2684, %v2680
      %v2689 = vadd.s32 %v2685, %v2687
      %v2690 = vadd.s32 %v2689, %v2679
      %v2691 = vadd.s32 %v2690, %v2681
      %v2692 = vand.u32 %v2669, 65535
      %v2693 = vshrl.u32 %v2669, 16
      %v2694 = vand.u32 %v2664, 65535
      %v2695 = vshrl.u32 %v2664, 16
      %v2696 = vmul.u32 %v2692, %v2694
      %v2697 = vmul.u32 %v2692, %v2695
      %v2698 = vmul.u32 %v2693, %v2694
      %v2699 = vmul.u32 %v2693, %v2695
      %v2700 = vshll.u32 %v2697, 16
      %v2701 = vshrl.u32 %v2697, 16
      %v2702 = vshll.u32 %v2698, 16
      %v2703 = vshrl.u32 %v2698, 16
      %vm2704 = vc.u32 %v2696, %v2700
      %v2705 = vsel %vm2704, 1, 0
      %v2706 = vadd.s32 %v2696, %v2700
      %v2707 = vadd.s32 %v2699, %v2705
      %vm2708 = vc.u32 %v2706, %v2702
      %v2709 = vsel %vm2708, 1, 0
      %v2710 = vadd.s32 %v2706, %v2702
      %v2711 = vadd.s32 %v2707, %v2709
      %v2712 = vadd.s32 %v2711, %v2701
      %v2713 = vadd.s32 %v2712, %v2703
      %v2714 = vmul.u32 %v2669, %v2660
      %v2715 = vadd.s32 %v2691, %v2710
      %vm2716 = vc.u32 %v2691, %v2710
      %v2717 = vadd.s32 %v2713, 1
      %v2718 = vsel %vm2716, %v2717, %v2713
      %v2719 = vadd.s32 %v2714, %v2718
      %v2720 = vadd.s32 %v2719, 536870912
      %v2721 = vshrl.u32 %v2720, 30
      %v2722 = vshll.u32 %v2721, 30
      %v2723 = vsub.s32 %v2719, %v2722
      %vm2724 = vcmp.lt.s32.totalorder %v2723, 0
      %v2725 = vsub.s32 0, %v2723
      %v2726 = vsel %vm2724, %v2725, %v2723
      %v2727 = vclz %v2726
      %v2728 = vsub.s32 %v2727, 2
      %vm2729 = vcmp.gt.s32.totalorder 0, %v2728
      %v2730 = vsel %vm2729, 0, %v2728
      %v2731 = vsub.s32 32, %v2730
      %v2732 = vshll.u32 %v2723, %v2730
      %v2733 = vshrl.u32 %v2715, %v2731
      %v2734 = vor.u32 %v2732, %v2733
      %v2735 = vsub.s32 4294967266, %v2730
      %v2736 = vadd.s32 %v2735, 127
      %v2737 = vshll.u32 %v2736, 23
      %v2738 = vor.u32 4788187, %v2737
      %v2739 = vand.u32 2147483647, %v2738
      %v2741 = vcvt.s32.f32 %v2734
      %v2742 = vmul.f32 %v2741, %v2739
      %v2743 = vxor.u32 %v2742, 2147483648
      %v2744 = vsel %vm2623, %v2743, %v2742
      %v2745 = vsub.s32 4, %v2721
      %v2746 = vsel %vm2623, %v2745, %v2721
      %v2747 = vsel %vm2622, %v278, %v2744
      %v2748 = vsel %vm2622, 0, %v2746
      %v2749 = vmul.f32 %v2747, %v2747
      %v2750 = vmul.f32 %v2749, -0.001358992
      %v2751 = vadd.f32 %v2750, 0.041655596
      %v2752 = vmul.f32 %v2749, %v2751
      %v2753 = vadd.f32 %v2752, -0.4999988
      %v2754 = vmul.f32 %v2749, %v2753
      %v2755 = vadd.f32 1.0, %v2754
      %v2756 = vmul.f32 %v2747, %v2747
      %v2757 = vmul.f32 %v2756, -0.00019511016
      %v2758 = vadd.f32 %v2757, 0.008332121
      %v2759 = vmul.f32 %v2756, %v2758
      %v2760 = vadd.f32 %v2759, -0.16666654
      %v2761 = vmul.f32 %v2756, %v2760
      %v2762 = vadd.f32 %v2761, 1.0
      %v2763 = vmul.f32 %v2762, %v2747
      %vm2764 = vweird.f32 %v278
      %v2765 = vand.u32 %v2748, 3
      %vm2766 = vcmp.lt.s32.totalorder %v2765, 2
      %vm2767 = vcmp.eq.s32.totalorder %v2765, 0
      %v2768 = vxor.u32 %v2763, 2147483648
      %v2769 = vsel %vm2767, %v2755, %v2768
      %vm2770 = vcmp.eq.s32.totalorder %v2765, 2
      %v2771 = vxor.u32 %v2755, 2147483648
      %v2772 = vsel %vm2770, %v2771, %v2763
      %v2773 = vsel %vm2766, %v2769, %v2772
      %v2774 = vsel %vm2764, nan, %v2773
      %v2775 = vmul.f32 %v280, %v464
      %v2776 = vmul.f32 %v282, %v618
      %v2777 = vmul.f32 %v284, %v772
      %v2778 = vmul.f32 %v286, %v926
      %v2779 = vmul.f32 %v288, %v1080
      %v2780 = vmul.f32 %v290, %v1234
      %v2781 = vmul.f32 %v292, %v1388
      %v2782 = vmul.f32 %v294, %v1542
      %v2783 = vmul.f32 %v296, %v1696
      %v2784 = vmul.f32 %v298, %v1850
      %v2785 = vmul.f32 %v300, %v2004
      %v2786 = vmul.f32 %v302, %v2158
      %v2787 = vmul.f32 %v304, %v2312
      %v2788 = vmul.f32 %v306, %v2466
      %v2789 = vmul.f32 %v308, %v2620
      %v2790 = vmul.f32 %v310, %v2774
      %v2791 = vand.u32 2147483647, %v263
      %vm2792 = vcmp.le.f32.partialorder %v2791, 0.7853982
      %vm2793 = vcmp.lt.s32.totalorder %v263, 0
      %v2794 = vand.u32 %v263, 2139095040
      %v2795 = vshrl.u32 %v2794, 23
      %v2796 = vsub.s32 %v2795, 127
      %v2797 = vand.u32 2147483647, %v263
      %v2798 = vand.u32 %v2797, 8388607
      %v2799 = vor.u32 %v2798, 8388608
      %v2800 = vsub.s32 0, %v2799
      %v2801 = vadd.s32 %v2796, 1
      %vm2802 = vcmp.gt.s32.totalorder %v2801, 0
      %v2803 = vsel %vm2802, %v2801, 0
      %v2804 = vshrl.u32 %v2803, 5
      %v2805 = vand.u32 %v2803, 31
      %v2806 = vsub.s32 32, %v2805
      %v2807 = vshrl.u32 683565275, %v2806
      %v2808 = vshll.u32 683565275, %v2805
      %v2809 = vshrl.u32 2475754826, %v2806
      %v2810 = vor.u32 %v2808, %v2809
      %v2811 = vshll.u32 2475754826, %v2805
      %v2812 = vshrl.u32 2131351028, %v2806
      %v2813 = vor.u32 %v2811, %v2812
      %v2814 = vshll.u32 2131351028, %v2805
      %v2815 = vshrl.u32 2102212464, %v2806
      %v2816 = vor.u32 %v2814, %v2815
      %v2817 = vshll.u32 2102212464, %v2805
      %v2818 = vshrl.u32 920167782, %v2806
      %v2819 = vor.u32 %v2817, %v2818
      %v2820 = vshll.u32 920167782, %v2805
      %v2821 = vshrl.u32 1326507024, %v2806
      %v2822 = vor.u32 %v2820, %v2821
      %vm2823 = vcmp.lt.s32.totalorder %v2804, 1
      %vm2824 = vcmp.lt.s32.totalorder %v2804, 2
      %vm2825 = vcmp.lt.s32.totalorder %v2804, 3
      %vm2826 = vcmp.lt.s32.totalorder %v2804, 4
      %v2827 = vsel %vm2823, %v2807, %v2810
      %v2828 = vsel %vm2826, %v2816, 2102212464
      %v2829 = vsel %vm2825, %v2813, %v2828
      %v2830 = vsel %vm2824, %v2827, %v2829
      %v2831 = vsel %vm2823, %v2810, %v2813
      %v2832 = vsel %vm2826, %v2819, 920167782
      %v2833 = vsel %vm2825, %v2816, %v2832
      %v2834 = vsel %vm2824, %v2831, %v2833
      %v2835 = vsel %vm2823, %v2813, %v2816
      %v2836 = vsel %vm2826, %v2822, 1326507024
      %v2837 = vsel %vm2825, %v2819, %v2836
      %v2838 = vsel %vm2824, %v2835, %v2837
      %v2839 = vshll.u32 %v2799, 8
      %v2840 = vand.u32 %v2839, 65535
      %v2841 = vshrl.u32 %v2839, 16
      %v2842 = vand.u32 %v2838, 65535
      %v2843 = vshrl.u32 %v2838, 16
      %v2844 = vmul.u32 %v2840, %v2842
      %v2845 = vmul.u32 %v2840, %v2843
      %v2846 = vmul.u32 %v2841, %v2842
      %v2847 = vmul.u32 %v2841, %v2843
      %v2848 = vshll.u32 %v2845, 16
      %v2849 = vshrl.u32 %v2845, 16
      %v2850 = vshll.u32 %v2846, 16
      %v2851 = vshrl.u32 %v2846, 16
      %vm2852 = vc.u32 %v2844, %v2848
      %v2853 = vsel %vm2852, 1, 0
      %v2854 = vadd.s32 %v2844, %v2848
      %v2855 = vadd.s32 %v2847, %v2853
      %vm2856 = vc.u32 %v2854, %v2850
      %v2857 = vsel %vm2856, 1, 0
      %v2858 = vadd.s32 %v2854, %v2850
      %v2859 = vadd.s32 %v2855, %v2857
      %v2860 = vadd.s32 %v2859, %v2849
      %v2861 = vadd.s32 %v2860, %v2851
      %v2862 = vand.u32 %v2839, 65535
      %v2863 = vshrl.u32 %v2839, 16
      %v2864 = vand.u32 %v2834, 65535
      %v2865 = vshrl.u32 %v2834, 16
      %v2866 = vmul.u32 %v2862, %v2864
      %v2867 = vmul.u32 %v2862, %v2865
      %v2868 = vmul.u32 %v2863, %v2864
      %v2869 = vmul.u32 %v2863, %v2865
      %v2870 = vshll.u32 %v2867, 16
      %v2871 = vshrl.u32 %v2867, 16
      %v2872 = vshll.u32 %v2868, 16
      %v2873 = vshrl.u32 %v2868, 16
      %vm2874 = vc.u32 %v2866, %v2870
      %v2875 = vsel %vm2874, 1, 0
      %v2876 = vadd.s32 %v2866, %v2870
      %v2877 = vadd.s32 %v2869, %v2875
      %vm2878 = vc.u32 %v2876, %v2872
      %v2879 = vsel %vm2878, 1, 0
      %v2880 = vadd.s32 %v2876, %v2872
      %v2881 = vadd.s32 %v2877, %v2879
      %v2882 = vadd.s32 %v2881, %v2871
      %v2883 = vadd.s32 %v2882, %v2873
      %v2884 = vmul.u32 %v2839, %v2830
      %v2885 = vadd.s32 %v2861, %v2880
      %vm2886 = vc.u32 %v2861, %v2880
      %v2887 = vadd.s32 %v2883, 1
      %v2888 = vsel %vm2886, %v2887, %v2883
      %v2889 = vadd.s32 %v2884, %v2888
      %v2890 = vadd.s32 %v2889, 536870912
      %v2891 = vshrl.u32 %v2890, 30
      %v2892 = vshll.u32 %v2891, 30
      %v2893 = vsub.s32 %v2889, %v2892
      %vm2894 = vcmp.lt.s32.totalorder %v2893, 0
      %v2895 = vsub.s32 0, %v2893
      %v2896 = vsel %vm2894, %v2895, %v2893
      %v2897 = vclz %v2896
      %v2898 = vsub.s32 %v2897, 2
      %vm2899 = vcmp.gt.s32.totalorder 0, %v2898
      %v2900 = vsel %vm2899, 0, %v2898
      %v2901 = vsub.s32 32, %v2900
      %v2902 = vshll.u32 %v2893, %v2900
      %v2903 = vshrl.u32 %v2885, %v2901
      %v2904 = vor.u32 %v2902, %v2903
      %v2905 = vsub.s32 4294967266, %v2900
      %v2906 = vadd.s32 %v2905, 127
      %v2907 = vshll.u32 %v2906, 23
      %v2908 = vor.u32 4788187, %v2907
      %v2909 = vand.u32 2147483647, %v2908
      %v2911 = vcvt.s32.f32 %v2904
      %v2912 = vmul.f32 %v2911, %v2909
      %v2913 = vxor.u32 %v2912, 2147483648
      %v2914 = vsel %vm2793, %v2913, %v2912
      %v2915 = vsub.s32 4, %v2891
      %v2916 = vsel %vm2793, %v2915, %v2891
      %v2917 = vsel %vm2792, %v263, %v2914
      %v2918 = vsel %vm2792, 0, %v2916
      %v2919 = vmul.f32 %v2917, %v2917
      %v2920 = vmul.f32 %v2919, -0.001358992
      %v2921 = vadd.f32 %v2920, 0.041655596
      %v2922 = vmul.f32 %v2919, %v2921
      %v2923 = vadd.f32 %v2922, -0.4999988
      %v2924 = vmul.f32 %v2919, %v2923
      %v2925 = vadd.f32 1.0, %v2924
      %v2926 = vmul.f32 %v2917, %v2917
      %v2927 = vmul.f32 %v2926, -0.00019511016
      %v2928 = vadd.f32 %v2927, 0.008332121
      %v2929 = vmul.f32 %v2926, %v2928
      %v2930 = vadd.f32 %v2929, -0.16666654
      %v2931 = vmul.f32 %v2926, %v2930
      %v2932 = vadd.f32 %v2931, 1.0
      %v2933 = vmul.f32 %v2932, %v2917
      %vm2934 = vweird.f32 %v263
      %v2935 = vadd.s32 %v2918, 3
      %v2936 = vand.u32 %v2935, 3
      %vm2937 = vcmp.lt.s32.totalorder %v2936, 2
      %vm2938 = vcmp.eq.s32.totalorder %v2936, 0
      %v2939 = vxor.u32 %v2933, 2147483648
      %v2940 = vsel %vm2938, %v2925, %v2939
      %vm2941 = vcmp.eq.s32.totalorder %v2936, 2
      %v2942 = vxor.u32 %v2925, 2147483648
      %v2943 = vsel %vm2941, %v2942, %v2933
      %v2944 = vsel %vm2937, %v2940, %v2943
      %v2945 = vsel %vm2934, nan, %v2944
      %v2946 = vand.u32 2147483647, %v264
      %vm2947 = vcmp.le.f32.partialorder %v2946, 0.7853982
      %vm2948 = vcmp.lt.s32.totalorder %v264, 0
      %v2949 = vand.u32 %v264, 2139095040
      %v2950 = vshrl.u32 %v2949, 23
      %v2951 = vsub.s32 %v2950, 127
      %v2952 = vand.u32 2147483647, %v264
      %v2953 = vand.u32 %v2952, 8388607
      %v2954 = vor.u32 %v2953, 8388608
      %v2955 = vsub.s32 0, %v2954
      %v2956 = vadd.s32 %v2951, 1
      %vm2957 = vcmp.gt.s32.totalorder %v2956, 0
      %v2958 = vsel %vm2957, %v2956, 0
      %v2959 = vshrl.u32 %v2958, 5
      %v2960 = vand.u32 %v2958, 31
      %v2961 = vsub.s32 32, %v2960
      %v2962 = vshrl.u32 683565275, %v2961
      %v2963 = vshll.u32 683565275, %v2960
      %v2964 = vshrl.u32 2475754826, %v2961
      %v2965 = vor.u32 %v2963, %v2964
      %v2966 = vshll.u32 2475754826, %v2960
      %v2967 = vshrl.u32 2131351028, %v2961
      %v2968 = vor.u32 %v2966, %v2967
      %v2969 = vshll.u32 2131351028, %v2960
      %v2970 = vshrl.u32 2102212464, %v2961
      %v2971 = vor.u32 %v2969, %v2970
      %v2972 = vshll.u32 2102212464, %v2960
      %v2973 = vshrl.u32 920167782, %v2961
      %v2974 = vor.u32 %v2972, %v2973
      %v2975 = vshll.u32 920167782, %v2960
      %v2976 = vshrl.u32 1326507024, %v2961
      %v2977 = vor.u32 %v2975, %v2976
      %vm2978 = vcmp.lt.s32.totalorder %v2959, 1
      %vm2979 = vcmp.lt.s32.totalorder %v2959, 2
      %vm2980 = vcmp.lt.s32.totalorder %v2959, 3
      %vm2981 = vcmp.lt.s32.totalorder %v2959, 4
      %v2982 = vsel %vm2978, %v2962, %v2965
      %v2983 = vsel %vm2981, %v2971, 2102212464
      %v2984 = vsel %vm2980, %v2968, %v2983
      %v2985 = vsel %vm2979, %v2982, %v2984
      %v2986 = vsel %vm2978, %v2965, %v2968
      %v2987 = vsel %vm2981, %v2974, 920167782
      %v2988 = vsel %vm2980, %v2971, %v2987
      %v2989 = vsel %vm2979, %v2986, %v2988
      %v2990 = vsel %vm2978, %v2968, %v2971
      %v2991 = vsel %vm2981, %v2977, 1326507024
      %v2992 = vsel %vm2980, %v2974, %v2991
      %v2993 = vsel %vm2979, %v2990, %v2992
      %v2994 = vshll.u32 %v2954, 8
      %v2995 = vand.u32 %v2994, 65535
      %v2996 = vshrl.u32 %v2994, 16
      %v2997 = vand.u32 %v2993, 65535
      %v2998 = vshrl.u32 %v2993, 16
      %v2999 = vmul.u32 %v2995, %v2997
      %v3000 = vmul.u32 %v2995, %v2998
      %v3001 = vmul.u32 %v2996, %v2997
      %v3002 = vmul.u32 %v2996, %v2998
      %v3003 = vshll.u32 %v3000, 16
      %v3004 = vshrl.u32 %v3000, 16
      %v3005 = vshll.u32 %v3001, 16
      %v3006 = vshrl.u32 %v3001, 16
      %vm3007 = vc.u32 %v2999, %v3003
      %v3008 = vsel %vm3007, 1, 0
      %v3009 = vadd.s32 %v2999, %v3003
      %v3010 = vadd.s32 %v3002, %v3008
      %vm3011 = vc.u32 %v3009, %v3005
      %v3012 = vsel %vm3011, 1, 0
      %v3013 = vadd.s32 %v3009, %v3005
      %v3014 = vadd.s32 %v3010, %v3012
      %v3015 = vadd.s32 %v3014, %v3004
      %v3016 = vadd.s32 %v3015, %v3006
      %v3017 = vand.u32 %v2994, 65535
      %v3018 = vshrl.u32 %v2994, 16
      %v3019 = vand.u32 %v2989, 65535
      %v3020 = vshrl.u32 %v2989, 16
      %v3021 = vmul.u32 %v3017, %v3019
      %v3022 = vmul.u32 %v3017, %v3020
      %v3023 = vmul.u32 %v3018, %v3019
      %v3024 = vmul.u32 %v3018, %v3020
      %v3025 = vshll.u32 %v3022, 16
      %v3026 = vshrl.u32 %v3022, 16
      %v3027 = vshll.u32 %v3023, 16
      %v3028 = vshrl.u32 %v3023, 16
      %vm3029 = vc.u32 %v3021, %v3025
      %v3030 = vsel %vm3029, 1, 0
      %v3031 = vadd.s32 %v3021, %v3025
      %v3032 = vadd.s32 %v3024, %v3030
      %vm3033 = vc.u32 %v3031, %v3027
      %v3034 = vsel %vm3033, 1, 0
      %v3035 = vadd.s32 %v3031, %v3027
      %v3036 = vadd.s32 %v3032, %v3034
      %v3037 = vadd.s32 %v3036, %v3026
      %v3038 = vadd.s32 %v3037, %v3028
      %v3039 = vmul.u32 %v2994, %v2985
      %v3040 = vadd.s32 %v3016, %v3035
      %vm3041 = vc.u32 %v3016, %v3035
      %v3042 = vadd.s32 %v3038, 1
      %v3043 = vsel %vm3041, %v3042, %v3038
      %v3044 = vadd.s32 %v3039, %v3043
      %v3045 = vadd.s32 %v3044, 536870912
      %v3046 = vshrl.u32 %v3045, 30
      %v3047 = vshll.u32 %v3046, 30
      %v3048 = vsub.s32 %v3044, %v3047
      %vm3049 = vcmp.lt.s32.totalorder %v3048, 0
      %v3050 = vsub.s32 0, %v3048
      %v3051 = vsel %vm3049, %v3050, %v3048
      %v3052 = vclz %v3051
      %v3053 = vsub.s32 %v3052, 2
      %vm3054 = vcmp.gt.s32.totalorder 0, %v3053
      %v3055 = vsel %vm3054, 0, %v3053
      %v3056 = vsub.s32 32, %v3055
      %v3057 = vshll.u32 %v3048, %v3055
      %v3058 = vshrl.u32 %v3040, %v3056
      %v3059 = vor.u32 %v3057, %v3058
      %v3060 = vsub.s32 4294967266, %v3055
      %v3061 = vadd.s32 %v3060, 127
      %v3062 = vshll.u32 %v3061, 23
      %v3063 = vor.u32 4788187, %v3062
      %v3064 = vand.u32 2147483647, %v3063
      %v3066 = vcvt.s32.f32 %v3059
      %v3067 = vmul.f32 %v3066, %v3064
      %v3068 = vxor.u32 %v3067, 2147483648
      %v3069 = vsel %vm2948, %v3068, %v3067
      %v3070 = vsub.s32 4, %v3046
      %v3071 = vsel %vm2948, %v3070, %v3046
      %v3072 = vsel %vm2947, %v264, %v3069
      %v3073 = vsel %vm2947, 0, %v3071
      %v3074 = vmul.f32 %v3072, %v3072
      %v3075 = vmul.f32 %v3074, -0.001358992
      %v3076 = vadd.f32 %v3075, 0.041655596
      %v3077 = vmul.f32 %v3074, %v3076
      %v3078 = vadd.f32 %v3077, -0.4999988
      %v3079 = vmul.f32 %v3074, %v3078
      %v3080 = vadd.f32 1.0, %v3079
      %v3081 = vmul.f32 %v3072, %v3072
      %v3082 = vmul.f32 %v3081, -0.00019511016
      %v3083 = vadd.f32 %v3082, 0.008332121
      %v3084 = vmul.f32 %v3081, %v3083
      %v3085 = vadd.f32 %v3084, -0.16666654
      %v3086 = vmul.f32 %v3081, %v3085
      %v3087 = vadd.f32 %v3086, 1.0
      %v3088 = vmul.f32 %v3087, %v3072
      %vm3089 = vweird.f32 %v264
      %v3090 = vadd.s32 %v3073, 3
      %v3091 = vand.u32 %v3090, 3
      %vm3092 = vcmp.lt.s32.totalorder %v3091, 2
      %vm3093 = vcmp.eq.s32.totalorder %v3091, 0
      %v3094 = vxor.u32 %v3088, 2147483648
      %v3095 = vsel %vm3093, %v3080, %v3094
      %vm3096 = vcmp.eq.s32.totalorder %v3091, 2
      %v3097 = vxor.u32 %v3080, 2147483648
      %v3098 = vsel %vm3096, %v3097, %v3088
      %v3099 = vsel %vm3092, %v3095, %v3098
      %v3100 = vsel %vm3089, nan, %v3099
      %v3101 = vand.u32 2147483647, %v265
      %vm3102 = vcmp.le.f32.partialorder %v3101, 0.7853982
      %vm3103 = vcmp.lt.s32.totalorder %v265, 0
      %v3104 = vand.u32 %v265, 2139095040
      %v3105 = vshrl.u32 %v3104, 23
      %v3106 = vsub.s32 %v3105, 127
      %v3107 = vand.u32 2147483647, %v265
      %v3108 = vand.u32 %v3107, 8388607
      %v3109 = vor.u32 %v3108, 8388608
      %v3110 = vsub.s32 0, %v3109
      %v3111 = vadd.s32 %v3106, 1
      %vm3112 = vcmp.gt.s32.totalorder %v3111, 0
      %v3113 = vsel %vm3112, %v3111, 0
      %v3114 = vshrl.u32 %v3113, 5
      %v3115 = vand.u32 %v3113, 31
      %v3116 = vsub.s32 32, %v3115
      %v3117 = vshrl.u32 683565275, %v3116
      %v3118 = vshll.u32 683565275, %v3115
      %v3119 = vshrl.u32 2475754826, %v3116
      %v3120 = vor.u32 %v3118, %v3119
      %v3121 = vshll.u32 2475754826, %v3115
      %v3122 = vshrl.u32 2131351028, %v3116
      %v3123 = vor.u32 %v3121, %v3122
      %v3124 = vshll.u32 2131351028, %v3115
      %v3125 = vshrl.u32 2102212464, %v3116
      %v3126 = vor.u32 %v3124, %v3125
      %v3127 = vshll.u32 2102212464, %v3115
      %v3128 = vshrl.u32 920167782, %v3116
      %v3129 = vor.u32 %v3127, %v3128
      %v3130 = vshll.u32 920167782, %v3115
      %v3131 = vshrl.u32 1326507024, %v3116
      %v3132 = vor.u32 %v3130, %v3131
      %vm3133 = vcmp.lt.s32.totalorder %v3114, 1
      %vm3134 = vcmp.lt.s32.totalorder %v3114, 2
      %vm3135 = vcmp.lt.s32.totalorder %v3114, 3
      %vm3136 = vcmp.lt.s32.totalorder %v3114, 4
      %v3137 = vsel %vm3133, %v3117, %v3120
      %v3138 = vsel %vm3136, %v3126, 2102212464
      %v3139 = vsel %vm3135, %v3123, %v3138
      %v3140 = vsel %vm3134, %v3137, %v3139
      %v3141 = vsel %vm3133, %v3120, %v3123
      %v3142 = vsel %vm3136, %v3129, 920167782
      %v3143 = vsel %vm3135, %v3126, %v3142
      %v3144 = vsel %vm3134, %v3141, %v3143
      %v3145 = vsel %vm3133, %v3123, %v3126
      %v3146 = vsel %vm3136, %v3132, 1326507024
      %v3147 = vsel %vm3135, %v3129, %v3146
      %v3148 = vsel %vm3134, %v3145, %v3147
      %v3149 = vshll.u32 %v3109, 8
      %v3150 = vand.u32 %v3149, 65535
      %v3151 = vshrl.u32 %v3149, 16
      %v3152 = vand.u32 %v3148, 65535
      %v3153 = vshrl.u32 %v3148, 16
      %v3154 = vmul.u32 %v3150, %v3152
      %v3155 = vmul.u32 %v3150, %v3153
      %v3156 = vmul.u32 %v3151, %v3152
      %v3157 = vmul.u32 %v3151, %v3153
      %v3158 = vshll.u32 %v3155, 16
      %v3159 = vshrl.u32 %v3155, 16
      %v3160 = vshll.u32 %v3156, 16
      %v3161 = vshrl.u32 %v3156, 16
      %vm3162 = vc.u32 %v3154, %v3158
      %v3163 = vsel %vm3162, 1, 0
      %v3164 = vadd.s32 %v3154, %v3158
      %v3165 = vadd.s32 %v3157, %v3163
      %vm3166 = vc.u32 %v3164, %v3160
      %v3167 = vsel %vm3166, 1, 0
      %v3168 = vadd.s32 %v3164, %v3160
      %v3169 = vadd.s32 %v3165, %v3167
      %v3170 = vadd.s32 %v3169, %v3159
      %v3171 = vadd.s32 %v3170, %v3161
      %v3172 = vand.u32 %v3149, 65535
      %v3173 = vshrl.u32 %v3149, 16
      %v3174 = vand.u32 %v3144, 65535
      %v3175 = vshrl.u32 %v3144, 16
      %v3176 = vmul.u32 %v3172, %v3174
      %v3177 = vmul.u32 %v3172, %v3175
      %v3178 = vmul.u32 %v3173, %v3174
      %v3179 = vmul.u32 %v3173, %v3175
      %v3180 = vshll.u32 %v3177, 16
      %v3181 = vshrl.u32 %v3177, 16
      %v3182 = vshll.u32 %v3178, 16
      %v3183 = vshrl.u32 %v3178, 16
      %vm3184 = vc.u32 %v3176, %v3180
      %v3185 = vsel %vm3184, 1, 0
      %v3186 = vadd.s32 %v3176, %v3180
      %v3187 = vadd.s32 %v3179, %v3185
      %vm3188 = vc.u32 %v3186, %v3182
      %v3189 = vsel %vm3188, 1, 0
      %v3190 = vadd.s32 %v3186, %v3182
      %v3191 = vadd.s32 %v3187, %v3189
      %v3192 = vadd.s32 %v3191, %v3181
      %v3193 = vadd.s32 %v3192, %v3183
      %v3194 = vmul.u32 %v3149, %v3140
      %v3195 = vadd.s32 %v3171, %v3190
      %vm3196 = vc.u32 %v3171, %v3190
      %v3197 = vadd.s32 %v3193, 1
      %v3198 = vsel %vm3196, %v3197, %v3193
      %v3199 = vadd.s32 %v3194, %v3198
      %v3200 = vadd.s32 %v3199, 536870912
      %v3201 = vshrl.u32 %v3200, 30
      %v3202 = vshll.u32 %v3201, 30
      %v3203 = vsub.s32 %v3199, %v3202
      %vm3204 = vcmp.lt.s32.totalorder %v3203, 0
      %v3205 = vsub.s32 0, %v3203
      %v3206 = vsel %vm3204, %v3205, %v3203
      %v3207 = vclz %v3206
      %v3208 = vsub.s32 %v3207, 2
      %vm3209 = vcmp.gt.s32.totalorder 0, %v3208
      %v3210 = vsel %vm3209, 0, %v3208
      %v3211 = vsub.s32 32, %v3210
      %v3212 = vshll.u32 %v3203, %v3210
      %v3213 = vshrl.u32 %v3195, %v3211
      %v3214 = vor.u32 %v3212, %v3213
      %v3215 = vsub.s32 4294967266, %v3210
      %v3216 = vadd.s32 %v3215, 127
      %v3217 = vshll.u32 %v3216, 23
      %v3218 = vor.u32 4788187, %v3217
      %v3219 = vand.u32 2147483647, %v3218
      %v3221 = vcvt.s32.f32 %v3214
      %v3222 = vmul.f32 %v3221, %v3219
      %v3223 = vxor.u32 %v3222, 2147483648
      %v3224 = vsel %vm3103, %v3223, %v3222
      %v3225 = vsub.s32 4, %v3201
      %v3226 = vsel %vm3103, %v3225, %v3201
      %v3227 = vsel %vm3102, %v265, %v3224
      %v3228 = vsel %vm3102, 0, %v3226
      %v3229 = vmul.f32 %v3227, %v3227
      %v3230 = vmul.f32 %v3229, -0.001358992
      %v3231 = vadd.f32 %v3230, 0.041655596
      %v3232 = vmul.f32 %v3229, %v3231
      %v3233 = vadd.f32 %v3232, -0.4999988
      %v3234 = vmul.f32 %v3229, %v3233
      %v3235 = vadd.f32 1.0, %v3234
      %v3236 = vmul.f32 %v3227, %v3227
      %v3237 = vmul.f32 %v3236, -0.00019511016
      %v3238 = vadd.f32 %v3237, 0.008332121
      %v3239 = vmul.f32 %v3236, %v3238
      %v3240 = vadd.f32 %v3239, -0.16666654
      %v3241 = vmul.f32 %v3236, %v3240
      %v3242 = vadd.f32 %v3241, 1.0
      %v3243 = vmul.f32 %v3242, %v3227
      %vm3244 = vweird.f32 %v265
      %v3245 = vadd.s32 %v3228, 3
      %v3246 = vand.u32 %v3245, 3
      %vm3247 = vcmp.lt.s32.totalorder %v3246, 2
      %vm3248 = vcmp.eq.s32.totalorder %v3246, 0
      %v3249 = vxor.u32 %v3243, 2147483648
      %v3250 = vsel %vm3248, %v3235, %v3249
      %vm3251 = vcmp.eq.s32.totalorder %v3246, 2
      %v3252 = vxor.u32 %v3235, 2147483648
      %v3253 = vsel %vm3251, %v3252, %v3243
      %v3254 = vsel %vm3247, %v3250, %v3253
      %v3255 = vsel %vm3244, nan, %v3254
      %v3256 = vand.u32 2147483647, %v266
      %vm3257 = vcmp.le.f32.partialorder %v3256, 0.7853982
      %vm3258 = vcmp.lt.s32.totalorder %v266, 0
      %v3259 = vand.u32 %v266, 2139095040
      %v3260 = vshrl.u32 %v3259, 23
      %v3261 = vsub.s32 %v3260, 127
      %v3262 = vand.u32 2147483647, %v266
      %v3263 = vand.u32 %v3262, 8388607
      %v3264 = vor.u32 %v3263, 8388608
      %v3265 = vsub.s32 0, %v3264
      %v3266 = vadd.s32 %v3261, 1
      %vm3267 = vcmp.gt.s32.totalorder %v3266, 0
      %v3268 = vsel %vm3267, %v3266, 0
      %v3269 = vshrl.u32 %v3268, 5
      %v3270 = vand.u32 %v3268, 31
      %v3271 = vsub.s32 32, %v3270
      %v3272 = vshrl.u32 683565275, %v3271
      %v3273 = vshll.u32 683565275, %v3270
      %v3274 = vshrl.u32 2475754826, %v3271
      %v3275 = vor.u32 %v3273, %v3274
      %v3276 = vshll.u32 2475754826, %v3270
      %v3277 = vshrl.u32 2131351028, %v3271
      %v3278 = vor.u32 %v3276, %v3277
      %v3279 = vshll.u32 2131351028, %v3270
      %v3280 = vshrl.u32 2102212464, %v3271
      %v3281 = vor.u32 %v3279, %v3280
      %v3282 = vshll.u32 2102212464, %v3270
      %v3283 = vshrl.u32 920167782, %v3271
      %v3284 = vor.u32 %v3282, %v3283
      %v3285 = vshll.u32 920167782, %v3270
      %v3286 = vshrl.u32 1326507024, %v3271
      %v3287 = vor.u32 %v3285, %v3286
      %vm3288 = vcmp.lt.s32.totalorder %v3269, 1
      %vm3289 = vcmp.lt.s32.totalorder %v3269, 2
      %vm3290 = vcmp.lt.s32.totalorder %v3269, 3
      %vm3291 = vcmp.lt.s32.totalorder %v3269, 4
      %v3292 = vsel %vm3288, %v3272, %v3275
      %v3293 = vsel %vm3291, %v3281, 2102212464
      %v3294 = vsel %vm3290, %v3278, %v3293
      %v3295 = vsel %vm3289, %v3292, %v3294
      %v3296 = vsel %vm3288, %v3275, %v3278
      %v3297 = vsel %vm3291, %v3284, 920167782
      %v3298 = vsel %vm3290, %v3281, %v3297
      %v3299 = vsel %vm3289, %v3296, %v3298
      %v3300 = vsel %vm3288, %v3278, %v3281
      %v3301 = vsel %vm3291, %v3287, 1326507024
      %v3302 = vsel %vm3290, %v3284, %v3301
      %v3303 = vsel %vm3289, %v3300, %v3302
      %v3304 = vshll.u32 %v3264, 8
      %v3305 = vand.u32 %v3304, 65535
      %v3306 = vshrl.u32 %v3304, 16
      %v3307 = vand.u32 %v3303, 65535
      %v3308 = vshrl.u32 %v3303, 16
      %v3309 = vmul.u32 %v3305, %v3307
      %v3310 = vmul.u32 %v3305, %v3308
      %v3311 = vmul.u32 %v3306, %v3307
      %v3312 = vmul.u32 %v3306, %v3308
      %v3313 = vshll.u32 %v3310, 16
      %v3314 = vshrl.u32 %v3310, 16
      %v3315 = vshll.u32 %v3311, 16
      %v3316 = vshrl.u32 %v3311, 16
      %vm3317 = vc.u32 %v3309, %v3313
      %v3318 = vsel %vm3317, 1, 0
      %v3319 = vadd.s32 %v3309, %v3313
      %v3320 = vadd.s32 %v3312, %v3318
      %vm3321 = vc.u32 %v3319, %v3315
      %v3322 = vsel %vm3321, 1, 0
      %v3323 = vadd.s32 %v3319, %v3315
      %v3324 = vadd.s32 %v3320, %v3322
      %v3325 = vadd.s32 %v3324, %v3314
      %v3326 = vadd.s32 %v3325, %v3316
      %v3327 = vand.u32 %v3304, 65535
      %v3328 = vshrl.u32 %v3304, 16
      %v3329 = vand.u32 %v3299, 65535
      %v3330 = vshrl.u32 %v3299, 16
      %v3331 = vmul.u32 %v3327, %v3329
      %v3332 = vmul.u32 %v3327, %v3330
      %v3333 = vmul.u32 %v3328, %v3329
      %v3334 = vmul.u32 %v3328, %v3330
      %v3335 = vshll.u32 %v3332, 16
      %v3336 = vshrl.u32 %v3332, 16
      %v3337 = vshll.u32 %v3333, 16
      %v3338 = vshrl.u32 %v3333, 16
      %vm3339 = vc.u32 %v3331, %v3335
      %v3340 = vsel %vm3339, 1, 0
      %v3341 = vadd.s32 %v3331, %v3335
      %v3342 = vadd.s32 %v3334, %v3340
      %vm3343 = vc.u32 %v3341, %v3337
      %v3344 = vsel %vm3343, 1, 0
      %v3345 = vadd.s32 %v3341, %v3337
      %v3346 = vadd.s32 %v3342, %v3344
      %v3347 = vadd.s32 %v3346, %v3336
      %v3348 = vadd.s32 %v3347, %v3338
      %v3349 = vmul.u32 %v3304, %v3295
      %v3350 = vadd.s32 %v3326, %v3345
      %vm3351 = vc.u32 %v3326, %v3345
      %v3352 = vadd.s32 %v3348, 1
      %v3353 = vsel %vm3351, %v3352, %v3348
      %v3354 = vadd.s32 %v3349, %v3353
      %v3355 = vadd.s32 %v3354, 536870912
      %v3356 = vshrl.u32 %v3355, 30
      %v3357 = vshll.u32 %v3356, 30
      %v3358 = vsub.s32 %v3354, %v3357
      %vm3359 = vcmp.lt.s32.totalorder %v3358, 0
      %v3360 = vsub.s32 0, %v3358
      %v3361 = vsel %vm3359, %v3360, %v3358
      %v3362 = vclz %v3361
      %v3363 = vsub.s32 %v3362, 2
      %vm3364 = vcmp.gt.s32.totalorder 0, %v3363
      %v3365 = vsel %vm3364, 0, %v3363
      %v3366 = vsub.s32 32, %v3365
      %v3367 = vshll.u32 %v3358, %v3365
      %v3368 = vshrl.u32 %v3350, %v3366
      %v3369 = vor.u32 %v3367, %v3368
      %v3370 = vsub.s32 4294967266, %v3365
      %v3371 = vadd.s32 %v3370, 127
      %v3372 = vshll.u32 %v3371, 23
      %v3373 = vor.u32 4788187, %v3372
      %v3374 = vand.u32 2147483647, %v3373
      %v3376 = vcvt.s32.f32 %v3369
      %v3377 = vmul.f32 %v3376, %v3374
      %v3378 = vxor.u32 %v3377, 2147483648
      %v3379 = vsel %vm3258, %v3378, %v3377
      %v3380 = vsub.s32 4, %v3356
      %v3381 = vsel %vm3258, %v3380, %v3356
      %v3382 = vsel %vm3257, %v266, %v3379
      %v3383 = vsel %vm3257, 0, %v3381
      %v3384 = vmul.f32 %v3382, %v3382
      %v3385 = vmul.f32 %v3384, -0.001358992
      %v3386 = vadd.f32 %v3385, 0.041655596
      %v3387 = vmul.f32 %v3384, %v3386
      %v3388 = vadd.f32 %v3387, -0.4999988
      %v3389 = vmul.f32 %v3384, %v3388
      %v3390 = vadd.f32 1.0, %v3389
      %v3391 = vmul.f32 %v3382, %v3382
      %v3392 = vmul.f32 %v3391, -0.00019511016
      %v3393 = vadd.f32 %v3392, 0.008332121
      %v3394 = vmul.f32 %v3391, %v3393
      %v3395 = vadd.f32 %v3394, -0.16666654
      %v3396 = vmul.f32 %v3391, %v3395
      %v3397 = vadd.f32 %v3396, 1.0
      %v3398 = vmul.f32 %v3397, %v3382
      %vm3399 = vweird.f32 %v266
      %v3400 = vadd.s32 %v3383, 3
      %v3401 = vand.u32 %v3400, 3
      %vm3402 = vcmp.lt.s32.totalorder %v3401, 2
      %vm3403 = vcmp.eq.s32.totalorder %v3401, 0
      %v3404 = vxor.u32 %v3398, 2147483648
      %v3405 = vsel %vm3403, %v3390, %v3404
      %vm3406 = vcmp.eq.s32.totalorder %v3401, 2
      %v3407 = vxor.u32 %v3390, 2147483648
      %v3408 = vsel %vm3406, %v3407, %v3398
      %v3409 = vsel %vm3402, %v3405, %v3408
      %v3410 = vsel %vm3399, nan, %v3409
      %v3411 = vand.u32 2147483647, %v267
      %vm3412 = vcmp.le.f32.partialorder %v3411, 0.7853982
      %vm3413 = vcmp.lt.s32.totalorder %v267, 0
      %v3414 = vand.u32 %v267, 2139095040
      %v3415 = vshrl.u32 %v3414, 23
      %v3416 = vsub.s32 %v3415, 127
      %v3417 = vand.u32 2147483647, %v267
      %v3418 = vand.u32 %v3417, 8388607
      %v3419 = vor.u32 %v3418, 8388608
      %v3420 = vsub.s32 0, %v3419
      %v3421 = vadd.s32 %v3416, 1
      %vm3422 = vcmp.gt.s32.totalorder %v3421, 0
      %v3423 = vsel %vm3422, %v3421, 0
      %v3424 = vshrl.u32 %v3423, 5
      %v3425 = vand.u32 %v3423, 31
      %v3426 = vsub.s32 32, %v3425
      %v3427 = vshrl.u32 683565275, %v3426
      %v3428 = vshll.u32 683565275, %v3425
      %v3429 = vshrl.u32 2475754826, %v3426
      %v3430 = vor.u32 %v3428, %v3429
      %v3431 = vshll.u32 2475754826, %v3425
      %v3432 = vshrl.u32 2131351028, %v3426
      %v3433 = vor.u32 %v3431, %v3432
      %v3434 = vshll.u32 2131351028, %v3425
      %v3435 = vshrl.u32 2102212464, %v3426
      %v3436 = vor.u32 %v3434, %v3435
      %v3437 = vshll.u32 2102212464, %v3425
      %v3438 = vshrl.u32 920167782, %v3426
      %v3439 = vor.u32 %v3437, %v3438
      %v3440 = vshll.u32 920167782, %v3425
      %v3441 = vshrl.u32 1326507024, %v3426
      %v3442 = vor.u32 %v3440, %v3441
      %vm3443 = vcmp.lt.s32.totalorder %v3424, 1
      %vm3444 = vcmp.lt.s32.totalorder %v3424, 2
      %vm3445 = vcmp.lt.s32.totalorder %v3424, 3
      %vm3446 = vcmp.lt.s32.totalorder %v3424, 4
      %v3447 = vsel %vm3443, %v3427, %v3430
      %v3448 = vsel %vm3446, %v3436, 2102212464
      %v3449 = vsel %vm3445, %v3433, %v3448
      %v3450 = vsel %vm3444, %v3447, %v3449
      %v3451 = vsel %vm3443, %v3430, %v3433
      %v3452 = vsel %vm3446, %v3439, 920167782
      %v3453 = vsel %vm3445, %v3436, %v3452
      %v3454 = vsel %vm3444, %v3451, %v3453
      %v3455 = vsel %vm3443, %v3433, %v3436
      %v3456 = vsel %vm3446, %v3442, 1326507024
      %v3457 = vsel %vm3445, %v3439, %v3456
      %v3458 = vsel %vm3444, %v3455, %v3457
      %v3459 = vshll.u32 %v3419, 8
      %v3460 = vand.u32 %v3459, 65535
      %v3461 = vshrl.u32 %v3459, 16
      %v3462 = vand.u32 %v3458, 65535
      %v3463 = vshrl.u32 %v3458, 16
      %v3464 = vmul.u32 %v3460, %v3462
      %v3465 = vmul.u32 %v3460, %v3463
      %v3466 = vmul.u32 %v3461, %v3462
      %v3467 = vmul.u32 %v3461, %v3463
      %v3468 = vshll.u32 %v3465, 16
      %v3469 = vshrl.u32 %v3465, 16
      %v3470 = vshll.u32 %v3466, 16
      %v3471 = vshrl.u32 %v3466, 16
      %vm3472 = vc.u32 %v3464, %v3468
      %v3473 = vsel %vm3472, 1, 0
      %v3474 = vadd.s32 %v3464, %v3468
      %v3475 = vadd.s32 %v3467, %v3473
      %vm3476 = vc.u32 %v3474, %v3470
      %v3477 = vsel %vm3476, 1, 0
      %v3478 = vadd.s32 %v3474, %v3470
      %v3479 = vadd.s32 %v3475, %v3477
      %v3480 = vadd.s32 %v3479, %v3469
      %v3481 = vadd.s32 %v3480, %v3471
      %v3482 = vand.u32 %v3459, 65535
      %v3483 = vshrl.u32 %v3459, 16
      %v3484 = vand.u32 %v3454, 65535
      %v3485 = vshrl.u32 %v3454, 16
      %v3486 = vmul.u32 %v3482, %v3484
      %v3487 = vmul.u32 %v3482, %v3485
      %v3488 = vmul.u32 %v3483, %v3484
      %v3489 = vmul.u32 %v3483, %v3485
      %v3490 = vshll.u32 %v3487, 16
      %v3491 = vshrl.u32 %v3487, 16
      %v3492 = vshll.u32 %v3488, 16
      %v3493 = vshrl.u32 %v3488, 16
      %vm3494 = vc.u32 %v3486, %v3490
      %v3495 = vsel %vm3494, 1, 0
      %v3496 = vadd.s32 %v3486, %v3490
      %v3497 = vadd.s32 %v3489, %v3495
      %vm3498 = vc.u32 %v3496, %v3492
      %v3499 = vsel %vm3498, 1, 0
      %v3500 = vadd.s32 %v3496, %v3492
      %v3501 = vadd.s32 %v3497, %v3499
      %v3502 = vadd.s32 %v3501, %v3491
      %v3503 = vadd.s32 %v3502, %v3493
      %v3504 = vmul.u32 %v3459, %v3450
      %v3505 = vadd.s32 %v3481, %v3500
      %vm3506 = vc.u32 %v3481, %v3500
      %v3507 = vadd.s32 %v3503, 1
      %v3508 = vsel %vm3506, %v3507, %v3503
      %v3509 = vadd.s32 %v3504, %v3508
      %v3510 = vadd.s32 %v3509, 536870912
      %v3511 = vshrl.u32 %v3510, 30
      %v3512 = vshll.u32 %v3511, 30
      %v3513 = vsub.s32 %v3509, %v3512
      %vm3514 = vcmp.lt.s32.totalorder %v3513, 0
      %v3515 = vsub.s32 0, %v3513
      %v3516 = vsel %vm3514, %v3515, %v3513
      %v3517 = vclz %v3516
      %v3518 = vsub.s32 %v3517, 2
      %vm3519 = vcmp.gt.s32.totalorder 0, %v3518
      %v3520 = vsel %vm3519, 0, %v3518
      %v3521 = vsub.s32 32, %v3520
      %v3522 = vshll.u32 %v3513, %v3520
      %v3523 = vshrl.u32 %v3505, %v3521
      %v3524 = vor.u32 %v3522, %v3523
      %v3525 = vsub.s32 4294967266, %v3520
      %v3526 = vadd.s32 %v3525, 127
      %v3527 = vshll.u32 %v3526, 23
      %v3528 = vor.u32 4788187, %v3527
      %v3529 = vand.u32 2147483647, %v3528
      %v3531 = vcvt.s32.f32 %v3524
      %v3532 = vmul.f32 %v3531, %v3529
      %v3533 = vxor.u32 %v3532, 2147483648
      %v3534 = vsel %vm3413, %v3533, %v3532
      %v3535 = vsub.s32 4, %v3511
      %v3536 = vsel %vm3413, %v3535, %v3511
      %v3537 = vsel %vm3412, %v267, %v3534
      %v3538 = vsel %vm3412, 0, %v3536
      %v3539 = vmul.f32 %v3537, %v3537
      %v3540 = vmul.f32 %v3539, -0.001358992
      %v3541 = vadd.f32 %v3540, 0.041655596
      %v3542 = vmul.f32 %v3539, %v3541
      %v3543 = vadd.f32 %v3542, -0.4999988
      %v3544 = vmul.f32 %v3539, %v3543
      %v3545 = vadd.f32 1.0, %v3544
      %v3546 = vmul.f32 %v3537, %v3537
      %v3547 = vmul.f32 %v3546, -0.00019511016
      %v3548 = vadd.f32 %v3547, 0.008332121
      %v3549 = vmul.f32 %v3546, %v3548
      %v3550 = vadd.f32 %v3549, -0.16666654
      %v3551 = vmul.f32 %v3546, %v3550
      %v3552 = vadd.f32 %v3551, 1.0
      %v3553 = vmul.f32 %v3552, %v3537
      %vm3554 = vweird.f32 %v267
      %v3555 = vadd.s32 %v3538, 3
      %v3556 = vand.u32 %v3555, 3
      %vm3557 = vcmp.lt.s32.totalorder %v3556, 2
      %vm3558 = vcmp.eq.s32.totalorder %v3556, 0
      %v3559 = vxor.u32 %v3553, 2147483648
      %v3560 = vsel %vm3558, %v3545, %v3559
      %vm3561 = vcmp.eq.s32.totalorder %v3556, 2
      %v3562 = vxor.u32 %v3545, 2147483648
      %v3563 = vsel %vm3561, %v3562, %v3553
      %v3564 = vsel %vm3557, %v3560, %v3563
      %v3565 = vsel %vm3554, nan, %v3564
      %v3566 = vand.u32 2147483647, %v268
      %vm3567 = vcmp.le.f32.partialorder %v3566, 0.7853982
      %vm3568 = vcmp.lt.s32.totalorder %v268, 0
      %v3569 = vand.u32 %v268, 2139095040
      %v3570 = vshrl.u32 %v3569, 23
      %v3571 = vsub.s32 %v3570, 127
      %v3572 = vand.u32 2147483647, %v268
      %v3573 = vand.u32 %v3572, 8388607
      %v3574 = vor.u32 %v3573, 8388608
      %v3575 = vsub.s32 0, %v3574
      %v3576 = vadd.s32 %v3571, 1
      %vm3577 = vcmp.gt.s32.totalorder %v3576, 0
      %v3578 = vsel %vm3577, %v3576, 0
      %v3579 = vshrl.u32 %v3578, 5
      %v3580 = vand.u32 %v3578, 31
      %v3581 = vsub.s32 32, %v3580
      %v3582 = vshrl.u32 683565275, %v3581
      %v3583 = vshll.u32 683565275, %v3580
      %v3584 = vshrl.u32 2475754826, %v3581
      %v3585 = vor.u32 %v3583, %v3584
      %v3586 = vshll.u32 2475754826, %v3580
      %v3587 = vshrl.u32 2131351028, %v3581
      %v3588 = vor.u32 %v3586, %v3587
      %v3589 = vshll.u32 2131351028, %v3580
      %v3590 = vshrl.u32 2102212464, %v3581
      %v3591 = vor.u32 %v3589, %v3590
      %v3592 = vshll.u32 2102212464, %v3580
      %v3593 = vshrl.u32 920167782, %v3581
      %v3594 = vor.u32 %v3592, %v3593
      %v3595 = vshll.u32 920167782, %v3580
      %v3596 = vshrl.u32 1326507024, %v3581
      %v3597 = vor.u32 %v3595, %v3596
      %vm3598 = vcmp.lt.s32.totalorder %v3579, 1
      %vm3599 = vcmp.lt.s32.totalorder %v3579, 2
      %vm3600 = vcmp.lt.s32.totalorder %v3579, 3
      %vm3601 = vcmp.lt.s32.totalorder %v3579, 4
      %v3602 = vsel %vm3598, %v3582, %v3585
      %v3603 = vsel %vm3601, %v3591, 2102212464
      %v3604 = vsel %vm3600, %v3588, %v3603
      %v3605 = vsel %vm3599, %v3602, %v3604
      %v3606 = vsel %vm3598, %v3585, %v3588
      %v3607 = vsel %vm3601, %v3594, 920167782
      %v3608 = vsel %vm3600, %v3591, %v3607
      %v3609 = vsel %vm3599, %v3606, %v3608
      %v3610 = vsel %vm3598, %v3588, %v3591
      %v3611 = vsel %vm3601, %v3597, 1326507024
      %v3612 = vsel %vm3600, %v3594, %v3611
      %v3613 = vsel %vm3599, %v3610, %v3612
      %v3614 = vshll.u32 %v3574, 8
      %v3615 = vand.u32 %v3614, 65535
      %v3616 = vshrl.u32 %v3614, 16
      %v3617 = vand.u32 %v3613, 65535
      %v3618 = vshrl.u32 %v3613, 16
      %v3619 = vmul.u32 %v3615, %v3617
      %v3620 = vmul.u32 %v3615, %v3618
      %v3621 = vmul.u32 %v3616, %v3617
      %v3622 = vmul.u32 %v3616, %v3618
      %v3623 = vshll.u32 %v3620, 16
      %v3624 = vshrl.u32 %v3620, 16
      %v3625 = vshll.u32 %v3621, 16
      %v3626 = vshrl.u32 %v3621, 16
      %vm3627 = vc.u32 %v3619, %v3623
      %v3628 = vsel %vm3627, 1, 0
      %v3629 = vadd.s32 %v3619, %v3623
      %v3630 = vadd.s32 %v3622, %v3628
      %vm3631 = vc.u32 %v3629, %v3625
      %v3632 = vsel %vm3631, 1, 0
      %v3633 = vadd.s32 %v3629, %v3625
      %v3634 = vadd.s32 %v3630, %v3632
      %v3635 = vadd.s32 %v3634, %v3624
      %v3636 = vadd.s32 %v3635, %v3626
      %v3637 = vand.u32 %v3614, 65535
      %v3638 = vshrl.u32 %v3614, 16
      %v3639 = vand.u32 %v3609, 65535
      %v3640 = vshrl.u32 %v3609, 16
      %v3641 = vmul.u32 %v3637, %v3639
      %v3642 = vmul.u32 %v3637, %v3640
      %v3643 = vmul.u32 %v3638, %v3639
      %v3644 = vmul.u32 %v3638, %v3640
      %v3645 = vshll.u32 %v3642, 16
      %v3646 = vshrl.u32 %v3642, 16
      %v3647 = vshll.u32 %v3643, 16
      %v3648 = vshrl.u32 %v3643, 16
      %vm3649 = vc.u32 %v3641, %v3645
      %v3650 = vsel %vm3649, 1, 0
      %v3651 = vadd.s32 %v3641, %v3645
      %v3652 = vadd.s32 %v3644, %v3650
      %vm3653 = vc.u32 %v3651, %v3647
      %v3654 = vsel %vm3653, 1, 0
      %v3655 = vadd.s32 %v3651, %v3647
      %v3656 = vadd.s32 %v3652, %v3654
      %v3657 = vadd.s32 %v3656, %v3646
      %v3658 = vadd.s32 %v3657, %v3648
      %v3659 = vmul.u32 %v3614, %v3605
      %v3660 = vadd.s32 %v3636, %v3655
      %vm3661 = vc.u32 %v3636, %v3655
      %v3662 = vadd.s32 %v3658, 1
      %v3663 = vsel %vm3661, %v3662, %v3658
      %v3664 = vadd.s32 %v3659, %v3663
      %v3665 = vadd.s32 %v3664, 536870912
      %v3666 = vshrl.u32 %v3665, 30
      %v3667 = vshll.u32 %v3666, 30
      %v3668 = vsub.s32 %v3664, %v3667
      %vm3669 = vcmp.lt.s32.totalorder %v3668, 0
      %v3670 = vsub.s32 0, %v3668
      %v3671 = vsel %vm3669, %v3670, %v3668
      %v3672 = vclz %v3671
      %v3673 = vsub.s32 %v3672, 2
      %vm3674 = vcmp.gt.s32.totalorder 0, %v3673
      %v3675 = vsel %vm3674, 0, %v3673
      %v3676 = vsub.s32 32, %v3675
      %v3677 = vshll.u32 %v3668, %v3675
      %v3678 = vshrl.u32 %v3660, %v3676
      %v3679 = vor.u32 %v3677, %v3678
      %v3680 = vsub.s32 4294967266, %v3675
      %v3681 = vadd.s32 %v3680, 127
      %v3682 = vshll.u32 %v3681, 23
      %v3683 = vor.u32 4788187, %v3682
      %v3684 = vand.u32 2147483647, %v3683
      %v3686 = vcvt.s32.f32 %v3679
      %v3687 = vmul.f32 %v3686, %v3684
      %v3688 = vxor.u32 %v3687, 2147483648
      %v3689 = vsel %vm3568, %v3688, %v3687
      %v3690 = vsub.s32 4, %v3666
      %v3691 = vsel %vm3568, %v3690, %v3666
      %v3692 = vsel %vm3567, %v268, %v3689
      %v3693 = vsel %vm3567, 0, %v3691
      %v3694 = vmul.f32 %v3692, %v3692
      %v3695 = vmul.f32 %v3694, -0.001358992
      %v3696 = vadd.f32 %v3695, 0.041655596
      %v3697 = vmul.f32 %v3694, %v3696
      %v3698 = vadd.f32 %v3697, -0.4999988
      %v3699 = vmul.f32 %v3694, %v3698
      %v3700 = vadd.f32 1.0, %v3699
      %v3701 = vmul.f32 %v3692, %v3692
      %v3702 = vmul.f32 %v3701, -0.00019511016
      %v3703 = vadd.f32 %v3702, 0.008332121
      %v3704 = vmul.f32 %v3701, %v3703
      %v3705 = vadd.f32 %v3704, -0.16666654
      %v3706 = vmul.f32 %v3701, %v3705
      %v3707 = vadd.f32 %v3706, 1.0
      %v3708 = vmul.f32 %v3707, %v3692
      %vm3709 = vweird.f32 %v268
      %v3710 = vadd.s32 %v3693, 3
      %v3711 = vand.u32 %v3710, 3
      %vm3712 = vcmp.lt.s32.totalorder %v3711, 2
      %vm3713 = vcmp.eq.s32.totalorder %v3711, 0
      %v3714 = vxor.u32 %v3708, 2147483648
      %v3715 = vsel %vm3713, %v3700, %v3714
      %vm3716 = vcmp.eq.s32.totalorder %v3711, 2
      %v3717 = vxor.u32 %v3700, 2147483648
      %v3718 = vsel %vm3716, %v3717, %v3708
      %v3719 = vsel %vm3712, %v3715, %v3718
      %v3720 = vsel %vm3709, nan, %v3719
      %v3721 = vand.u32 2147483647, %v269
      %vm3722 = vcmp.le.f32.partialorder %v3721, 0.7853982
      %vm3723 = vcmp.lt.s32.totalorder %v269, 0
      %v3724 = vand.u32 %v269, 2139095040
      %v3725 = vshrl.u32 %v3724, 23
      %v3726 = vsub.s32 %v3725, 127
      %v3727 = vand.u32 2147483647, %v269
      %v3728 = vand.u32 %v3727, 8388607
      %v3729 = vor.u32 %v3728, 8388608
      %v3730 = vsub.s32 0, %v3729
      %v3731 = vadd.s32 %v3726, 1
      %vm3732 = vcmp.gt.s32.totalorder %v3731, 0
      %v3733 = vsel %vm3732, %v3731, 0
      %v3734 = vshrl.u32 %v3733, 5
      %v3735 = vand.u32 %v3733, 31
      %v3736 = vsub.s32 32, %v3735
      %v3737 = vshrl.u32 683565275, %v3736
      %v3738 = vshll.u32 683565275, %v3735
      %v3739 = vshrl.u32 2475754826, %v3736
      %v3740 = vor.u32 %v3738, %v3739
      %v3741 = vshll.u32 2475754826, %v3735
      %v3742 = vshrl.u32 2131351028, %v3736
      %v3743 = vor.u32 %v3741, %v3742
      %v3744 = vshll.u32 2131351028, %v3735
      %v3745 = vshrl.u32 2102212464, %v3736
      %v3746 = vor.u32 %v3744, %v3745
      %v3747 = vshll.u32 2102212464, %v3735
      %v3748 = vshrl.u32 920167782, %v3736
      %v3749 = vor.u32 %v3747, %v3748
      %v3750 = vshll.u32 920167782, %v3735
      %v3751 = vshrl.u32 1326507024, %v3736
      %v3752 = vor.u32 %v3750, %v3751
      %vm3753 = vcmp.lt.s32.totalorder %v3734, 1
      %vm3754 = vcmp.lt.s32.totalorder %v3734, 2
      %vm3755 = vcmp.lt.s32.totalorder %v3734, 3
      %vm3756 = vcmp.lt.s32.totalorder %v3734, 4
      %v3757 = vsel %vm3753, %v3737, %v3740
      %v3758 = vsel %vm3756, %v3746, 2102212464
      %v3759 = vsel %vm3755, %v3743, %v3758
      %v3760 = vsel %vm3754, %v3757, %v3759
      %v3761 = vsel %vm3753, %v3740, %v3743
      %v3762 = vsel %vm3756, %v3749, 920167782
      %v3763 = vsel %vm3755, %v3746, %v3762
      %v3764 = vsel %vm3754, %v3761, %v3763
      %v3765 = vsel %vm3753, %v3743, %v3746
      %v3766 = vsel %vm3756, %v3752, 1326507024
      %v3767 = vsel %vm3755, %v3749, %v3766
      %v3768 = vsel %vm3754, %v3765, %v3767
      %v3769 = vshll.u32 %v3729, 8
      %v3770 = vand.u32 %v3769, 65535
      %v3771 = vshrl.u32 %v3769, 16
      %v3772 = vand.u32 %v3768, 65535
      %v3773 = vshrl.u32 %v3768, 16
      %v3774 = vmul.u32 %v3770, %v3772
      %v3775 = vmul.u32 %v3770, %v3773
      %v3776 = vmul.u32 %v3771, %v3772
      %v3777 = vmul.u32 %v3771, %v3773
      %v3778 = vshll.u32 %v3775, 16
      %v3779 = vshrl.u32 %v3775, 16
      %v3780 = vshll.u32 %v3776, 16
      %v3781 = vshrl.u32 %v3776, 16
      %vm3782 = vc.u32 %v3774, %v3778
      %v3783 = vsel %vm3782, 1, 0
      %v3784 = vadd.s32 %v3774, %v3778
      %v3785 = vadd.s32 %v3777, %v3783
      %vm3786 = vc.u32 %v3784, %v3780
      %v3787 = vsel %vm3786, 1, 0
      %v3788 = vadd.s32 %v3784, %v3780
      %v3789 = vadd.s32 %v3785, %v3787
      %v3790 = vadd.s32 %v3789, %v3779
      %v3791 = vadd.s32 %v3790, %v3781
      %v3792 = vand.u32 %v3769, 65535
      %v3793 = vshrl.u32 %v3769, 16
      %v3794 = vand.u32 %v3764, 65535
      %v3795 = vshrl.u32 %v3764, 16
      %v3796 = vmul.u32 %v3792, %v3794
      %v3797 = vmul.u32 %v3792, %v3795
      %v3798 = vmul.u32 %v3793, %v3794
      %v3799 = vmul.u32 %v3793, %v3795
      %v3800 = vshll.u32 %v3797, 16
      %v3801 = vshrl.u32 %v3797, 16
      %v3802 = vshll.u32 %v3798, 16
      %v3803 = vshrl.u32 %v3798, 16
      %vm3804 = vc.u32 %v3796, %v3800
      %v3805 = vsel %vm3804, 1, 0
      %v3806 = vadd.s32 %v3796, %v3800
      %v3807 = vadd.s32 %v3799, %v3805
      %vm3808 = vc.u32 %v3806, %v3802
      %v3809 = vsel %vm3808, 1, 0
      %v3810 = vadd.s32 %v3806, %v3802
      %v3811 = vadd.s32 %v3807, %v3809
      %v3812 = vadd.s32 %v3811, %v3801
      %v3813 = vadd.s32 %v3812, %v3803
      %v3814 = vmul.u32 %v3769, %v3760
      %v3815 = vadd.s32 %v3791, %v3810
      %vm3816 = vc.u32 %v3791, %v3810
      %v3817 = vadd.s32 %v3813, 1
      %v3818 = vsel %vm3816, %v3817, %v3813
      %v3819 = vadd.s32 %v3814, %v3818
      %v3820 = vadd.s32 %v3819, 536870912
      %v3821 = vshrl.u32 %v3820, 30
      %v3822 = vshll.u32 %v3821, 30
      %v3823 = vsub.s32 %v3819, %v3822
      %vm3824 = vcmp.lt.s32.totalorder %v3823, 0
      %v3825 = vsub.s32 0, %v3823
      %v3826 = vsel %vm3824, %v3825, %v3823
      %v3827 = vclz %v3826
      %v3828 = vsub.s32 %v3827, 2
      %vm3829 = vcmp.gt.s32.totalorder 0, %v3828
      %v3830 = vsel %vm3829, 0, %v3828
      %v3831 = vsub.s32 32, %v3830
      %v3832 = vshll.u32 %v3823, %v3830
      %v3833 = vshrl.u32 %v3815, %v3831
      %v3834 = vor.u32 %v3832, %v3833
      %v3835 = vsub.s32 4294967266, %v3830
      %v3836 = vadd.s32 %v3835, 127
      %v3837 = vshll.u32 %v3836, 23
      %v3838 = vor.u32 4788187, %v3837
      %v3839 = vand.u32 2147483647, %v3838
      %v3841 = vcvt.s32.f32 %v3834
      %v3842 = vmul.f32 %v3841, %v3839
      %v3843 = vxor.u32 %v3842, 2147483648
      %v3844 = vsel %vm3723, %v3843, %v3842
      %v3845 = vsub.s32 4, %v3821
      %v3846 = vsel %vm3723, %v3845, %v3821
      %v3847 = vsel %vm3722, %v269, %v3844
      %v3848 = vsel %vm3722, 0, %v3846
      %v3849 = vmul.f32 %v3847, %v3847
      %v3850 = vmul.f32 %v3849, -0.001358992
      %v3851 = vadd.f32 %v3850, 0.041655596
      %v3852 = vmul.f32 %v3849, %v3851
      %v3853 = vadd.f32 %v3852, -0.4999988
      %v3854 = vmul.f32 %v3849, %v3853
      %v3855 = vadd.f32 1.0, %v3854
      %v3856 = vmul.f32 %v3847, %v3847
      %v3857 = vmul.f32 %v3856, -0.00019511016
      %v3858 = vadd.f32 %v3857, 0.008332121
      %v3859 = vmul.f32 %v3856, %v3858
      %v3860 = vadd.f32 %v3859, -0.16666654
      %v3861 = vmul.f32 %v3856, %v3860
      %v3862 = vadd.f32 %v3861, 1.0
      %v3863 = vmul.f32 %v3862, %v3847
      %vm3864 = vweird.f32 %v269
      %v3865 = vadd.s32 %v3848, 3
      %v3866 = vand.u32 %v3865, 3
      %vm3867 = vcmp.lt.s32.totalorder %v3866, 2
      %vm3868 = vcmp.eq.s32.totalorder %v3866, 0
      %v3869 = vxor.u32 %v3863, 2147483648
      %v3870 = vsel %vm3868, %v3855, %v3869
      %vm3871 = vcmp.eq.s32.totalorder %v3866, 2
      %v3872 = vxor.u32 %v3855, 2147483648
      %v3873 = vsel %vm3871, %v3872, %v3863
      %v3874 = vsel %vm3867, %v3870, %v3873
      %v3875 = vsel %vm3864, nan, %v3874
      %v3876 = vand.u32 2147483647, %v270
      %vm3877 = vcmp.le.f32.partialorder %v3876, 0.7853982
      %vm3878 = vcmp.lt.s32.totalorder %v270, 0
      %v3879 = vand.u32 %v270, 2139095040
      %v3880 = vshrl.u32 %v3879, 23
      %v3881 = vsub.s32 %v3880, 127
      %v3882 = vand.u32 2147483647, %v270
      %v3883 = vand.u32 %v3882, 8388607
      %v3884 = vor.u32 %v3883, 8388608
      %v3885 = vsub.s32 0, %v3884
      %v3886 = vadd.s32 %v3881, 1
      %vm3887 = vcmp.gt.s32.totalorder %v3886, 0
      %v3888 = vsel %vm3887, %v3886, 0
      %v3889 = vshrl.u32 %v3888, 5
      %v3890 = vand.u32 %v3888, 31
      %v3891 = vsub.s32 32, %v3890
      %v3892 = vshrl.u32 683565275, %v3891
      %v3893 = vshll.u32 683565275, %v3890
      %v3894 = vshrl.u32 2475754826, %v3891
      %v3895 = vor.u32 %v3893, %v3894
      %v3896 = vshll.u32 2475754826, %v3890
      %v3897 = vshrl.u32 2131351028, %v3891
      %v3898 = vor.u32 %v3896, %v3897
      %v3899 = vshll.u32 2131351028, %v3890
      %v3900 = vshrl.u32 2102212464, %v3891
      %v3901 = vor.u32 %v3899, %v3900
      %v3902 = vshll.u32 2102212464, %v3890
      %v3903 = vshrl.u32 920167782, %v3891
      %v3904 = vor.u32 %v3902, %v3903
      %v3905 = vshll.u32 920167782, %v3890
      %v3906 = vshrl.u32 1326507024, %v3891
      %v3907 = vor.u32 %v3905, %v3906
      %vm3908 = vcmp.lt.s32.totalorder %v3889, 1
      %vm3909 = vcmp.lt.s32.totalorder %v3889, 2
      %vm3910 = vcmp.lt.s32.totalorder %v3889, 3
      %vm3911 = vcmp.lt.s32.totalorder %v3889, 4
      %v3912 = vsel %vm3908, %v3892, %v3895
      %v3913 = vsel %vm3911, %v3901, 2102212464
      %v3914 = vsel %vm3910, %v3898, %v3913
      %v3915 = vsel %vm3909, %v3912, %v3914
      %v3916 = vsel %vm3908, %v3895, %v3898
      %v3917 = vsel %vm3911, %v3904, 920167782
      %v3918 = vsel %vm3910, %v3901, %v3917
      %v3919 = vsel %vm3909, %v3916, %v3918
      %v3920 = vsel %vm3908, %v3898, %v3901
      %v3921 = vsel %vm3911, %v3907, 1326507024
      %v3922 = vsel %vm3910, %v3904, %v3921
      %v3923 = vsel %vm3909, %v3920, %v3922
      %v3924 = vshll.u32 %v3884, 8
      %v3925 = vand.u32 %v3924, 65535
      %v3926 = vshrl.u32 %v3924, 16
      %v3927 = vand.u32 %v3923, 65535
      %v3928 = vshrl.u32 %v3923, 16
      %v3929 = vmul.u32 %v3925, %v3927
      %v3930 = vmul.u32 %v3925, %v3928
      %v3931 = vmul.u32 %v3926, %v3927
      %v3932 = vmul.u32 %v3926, %v3928
      %v3933 = vshll.u32 %v3930, 16
      %v3934 = vshrl.u32 %v3930, 16
      %v3935 = vshll.u32 %v3931, 16
      %v3936 = vshrl.u32 %v3931, 16
      %vm3937 = vc.u32 %v3929, %v3933
      %v3938 = vsel %vm3937, 1, 0
      %v3939 = vadd.s32 %v3929, %v3933
      %v3940 = vadd.s32 %v3932, %v3938
      %vm3941 = vc.u32 %v3939, %v3935
      %v3942 = vsel %vm3941, 1, 0
      %v3943 = vadd.s32 %v3939, %v3935
      %v3944 = vadd.s32 %v3940, %v3942
      %v3945 = vadd.s32 %v3944, %v3934
      %v3946 = vadd.s32 %v3945, %v3936
      %v3947 = vand.u32 %v3924, 65535
      %v3948 = vshrl.u32 %v3924, 16
      %v3949 = vand.u32 %v3919, 65535
      %v3950 = vshrl.u32 %v3919, 16
      %v3951 = vmul.u32 %v3947, %v3949
      %v3952 = vmul.u32 %v3947, %v3950
      %v3953 = vmul.u32 %v3948, %v3949
      %v3954 = vmul.u32 %v3948, %v3950
      %v3955 = vshll.u32 %v3952, 16
      %v3956 = vshrl.u32 %v3952, 16
      %v3957 = vshll.u32 %v3953, 16
      %v3958 = vshrl.u32 %v3953, 16
      %vm3959 = vc.u32 %v3951, %v3955
      %v3960 = vsel %vm3959, 1, 0
      %v3961 = vadd.s32 %v3951, %v3955
      %v3962 = vadd.s32 %v3954, %v3960
      %vm3963 = vc.u32 %v3961, %v3957
      %v3964 = vsel %vm3963, 1, 0
      %v3965 = vadd.s32 %v3961, %v3957
      %v3966 = vadd.s32 %v3962, %v3964
      %v3967 = vadd.s32 %v3966, %v3956
      %v3968 = vadd.s32 %v3967, %v3958
      %v3969 = vmul.u32 %v3924, %v3915
      %v3970 = vadd.s32 %v3946, %v3965
      %vm3971 = vc.u32 %v3946, %v3965
      %v3972 = vadd.s32 %v3968, 1
      %v3973 = vsel %vm3971, %v3972, %v3968
      %v3974 = vadd.s32 %v3969, %v3973
      %v3975 = vadd.s32 %v3974, 536870912
      %v3976 = vshrl.u32 %v3975, 30
      %v3977 = vshll.u32 %v3976, 30
      %v3978 = vsub.s32 %v3974, %v3977
      %vm3979 = vcmp.lt.s32.totalorder %v3978, 0
      %v3980 = vsub.s32 0, %v3978
      %v3981 = vsel %vm3979, %v3980, %v3978
      %v3982 = vclz %v3981
      %v3983 = vsub.s32 %v3982, 2
      %vm3984 = vcmp.gt.s32.totalorder 0, %v3983
      %v3985 = vsel %vm3984, 0, %v3983
      %v3986 = vsub.s32 32, %v3985
      %v3987 = vshll.u32 %v3978, %v3985
      %v3988 = vshrl.u32 %v3970, %v3986
      %v3989 = vor.u32 %v3987, %v3988
      %v3990 = vsub.s32 4294967266, %v3985
      %v3991 = vadd.s32 %v3990, 127
      %v3992 = vshll.u32 %v3991, 23
      %v3993 = vor.u32 4788187, %v3992
      %v3994 = vand.u32 2147483647, %v3993
      %v3996 = vcvt.s32.f32 %v3989
      %v3997 = vmul.f32 %v3996, %v3994
      %v3998 = vxor.u32 %v3997, 2147483648
      %v3999 = vsel %vm3878, %v3998, %v3997
      %v4000 = vsub.s32 4, %v3976
      %v4001 = vsel %vm3878, %v4000, %v3976
      %v4002 = vsel %vm3877, %v270, %v3999
      %v4003 = vsel %vm3877, 0, %v4001
      %v4004 = vmul.f32 %v4002, %v4002
      %v4005 = vmul.f32 %v4004, -0.001358992
      %v4006 = vadd.f32 %v4005, 0.041655596
      %v4007 = vmul.f32 %v4004, %v4006
      %v4008 = vadd.f32 %v4007, -0.4999988
      %v4009 = vmul.f32 %v4004, %v4008
      %v4010 = vadd.f32 1.0, %v4009
      %v4011 = vmul.f32 %v4002, %v4002
      %v4012 = vmul.f32 %v4011, -0.00019511016
      %v4013 = vadd.f32 %v4012, 0.008332121
      %v4014 = vmul.f32 %v4011, %v4013
      %v4015 = vadd.f32 %v4014, -0.16666654
      %v4016 = vmul.f32 %v4011, %v4015
      %v4017 = vadd.f32 %v4016, 1.0
      %v4018 = vmul.f32 %v4017, %v4002
      %vm4019 = vweird.f32 %v270
      %v4020 = vadd.s32 %v4003, 3
      %v4021 = vand.u32 %v4020, 3
      %vm4022 = vcmp.lt.s32.totalorder %v4021, 2
      %vm4023 = vcmp.eq.s32.totalorder %v4021, 0
      %v4024 = vxor.u32 %v4018, 2147483648
      %v4025 = vsel %vm4023, %v4010, %v4024
      %vm4026 = vcmp.eq.s32.totalorder %v4021, 2
      %v4027 = vxor.u32 %v4010, 2147483648
      %v4028 = vsel %vm4026, %v4027, %v4018
      %v4029 = vsel %vm4022, %v4025, %v4028
      %v4030 = vsel %vm4019, nan, %v4029
      %v4031 = vand.u32 2147483647, %v271
      %vm4032 = vcmp.le.f32.partialorder %v4031, 0.7853982
      %vm4033 = vcmp.lt.s32.totalorder %v271, 0
      %v4034 = vand.u32 %v271, 2139095040
      %v4035 = vshrl.u32 %v4034, 23
      %v4036 = vsub.s32 %v4035, 127
      %v4037 = vand.u32 2147483647, %v271
      %v4038 = vand.u32 %v4037, 8388607
      %v4039 = vor.u32 %v4038, 8388608
      %v4040 = vsub.s32 0, %v4039
      %v4041 = vadd.s32 %v4036, 1
      %vm4042 = vcmp.gt.s32.totalorder %v4041, 0
      %v4043 = vsel %vm4042, %v4041, 0
      %v4044 = vshrl.u32 %v4043, 5
      %v4045 = vand.u32 %v4043, 31
      %v4046 = vsub.s32 32, %v4045
      %v4047 = vshrl.u32 683565275, %v4046
      %v4048 = vshll.u32 683565275, %v4045
      %v4049 = vshrl.u32 2475754826, %v4046
      %v4050 = vor.u32 %v4048, %v4049
      %v4051 = vshll.u32 2475754826, %v4045
      %v4052 = vshrl.u32 2131351028, %v4046
      %v4053 = vor.u32 %v4051, %v4052
      %v4054 = vshll.u32 2131351028, %v4045
      %v4055 = vshrl.u32 2102212464, %v4046
      %v4056 = vor.u32 %v4054, %v4055
      %v4057 = vshll.u32 2102212464, %v4045
      %v4058 = vshrl.u32 920167782, %v4046
      %v4059 = vor.u32 %v4057, %v4058
      %v4060 = vshll.u32 920167782, %v4045
      %v4061 = vshrl.u32 1326507024, %v4046
      %v4062 = vor.u32 %v4060, %v4061
      %vm4063 = vcmp.lt.s32.totalorder %v4044, 1
      %vm4064 = vcmp.lt.s32.totalorder %v4044, 2
      %vm4065 = vcmp.lt.s32.totalorder %v4044, 3
      %vm4066 = vcmp.lt.s32.totalorder %v4044, 4
      %v4067 = vsel %vm4063, %v4047, %v4050
      %v4068 = vsel %vm4066, %v4056, 2102212464
      %v4069 = vsel %vm4065, %v4053, %v4068
      %v4070 = vsel %vm4064, %v4067, %v4069
      %v4071 = vsel %vm4063, %v4050, %v4053
      %v4072 = vsel %vm4066, %v4059, 920167782
      %v4073 = vsel %vm4065, %v4056, %v4072
      %v4074 = vsel %vm4064, %v4071, %v4073
      %v4075 = vsel %vm4063, %v4053, %v4056
      %v4076 = vsel %vm4066, %v4062, 1326507024
      %v4077 = vsel %vm4065, %v4059, %v4076
      %v4078 = vsel %vm4064, %v4075, %v4077
      %v4079 = vshll.u32 %v4039, 8
      %v4080 = vand.u32 %v4079, 65535
      %v4081 = vshrl.u32 %v4079, 16
      %v4082 = vand.u32 %v4078, 65535
      %v4083 = vshrl.u32 %v4078, 16
      %v4084 = vmul.u32 %v4080, %v4082
      %v4085 = vmul.u32 %v4080, %v4083
      %v4086 = vmul.u32 %v4081, %v4082
      %v4087 = vmul.u32 %v4081, %v4083
      %v4088 = vshll.u32 %v4085, 16
      %v4089 = vshrl.u32 %v4085, 16
      %v4090 = vshll.u32 %v4086, 16
      %v4091 = vshrl.u32 %v4086, 16
      %vm4092 = vc.u32 %v4084, %v4088
      %v4093 = vsel %vm4092, 1, 0
      %v4094 = vadd.s32 %v4084, %v4088
      %v4095 = vadd.s32 %v4087, %v4093
      %vm4096 = vc.u32 %v4094, %v4090
      %v4097 = vsel %vm4096, 1, 0
      %v4098 = vadd.s32 %v4094, %v4090
      %v4099 = vadd.s32 %v4095, %v4097
      %v4100 = vadd.s32 %v4099, %v4089
      %v4101 = vadd.s32 %v4100, %v4091
      %v4102 = vand.u32 %v4079, 65535
      %v4103 = vshrl.u32 %v4079, 16
      %v4104 = vand.u32 %v4074, 65535
      %v4105 = vshrl.u32 %v4074, 16
      %v4106 = vmul.u32 %v4102, %v4104
      %v4107 = vmul.u32 %v4102, %v4105
      %v4108 = vmul.u32 %v4103, %v4104
      %v4109 = vmul.u32 %v4103, %v4105
      %v4110 = vshll.u32 %v4107, 16
      %v4111 = vshrl.u32 %v4107, 16
      %v4112 = vshll.u32 %v4108, 16
      %v4113 = vshrl.u32 %v4108, 16
      %vm4114 = vc.u32 %v4106, %v4110
      %v4115 = vsel %vm4114, 1, 0
      %v4116 = vadd.s32 %v4106, %v4110
      %v4117 = vadd.s32 %v4109, %v4115
      %vm4118 = vc.u32 %v4116, %v4112
      %v4119 = vsel %vm4118, 1, 0
      %v4120 = vadd.s32 %v4116, %v4112
      %v4121 = vadd.s32 %v4117, %v4119
      %v4122 = vadd.s32 %v4121, %v4111
      %v4123 = vadd.s32 %v4122, %v4113
      %v4124 = vmul.u32 %v4079, %v4070
      %v4125 = vadd.s32 %v4101, %v4120
      %vm4126 = vc.u32 %v4101, %v4120
      %v4127 = vadd.s32 %v4123, 1
      %v4128 = vsel %vm4126, %v4127, %v4123
      %v4129 = vadd.s32 %v4124, %v4128
      %v4130 = vadd.s32 %v4129, 536870912
      %v4131 = vshrl.u32 %v4130, 30
      %v4132 = vshll.u32 %v4131, 30
      %v4133 = vsub.s32 %v4129, %v4132
      %vm4134 = vcmp.lt.s32.totalorder %v4133, 0
      %v4135 = vsub.s32 0, %v4133
      %v4136 = vsel %vm4134, %v4135, %v4133
      %v4137 = vclz %v4136
      %v4138 = vsub.s32 %v4137, 2
      %vm4139 = vcmp.gt.s32.totalorder 0, %v4138
      %v4140 = vsel %vm4139, 0, %v4138
      %v4141 = vsub.s32 32, %v4140
      %v4142 = vshll.u32 %v4133, %v4140
      %v4143 = vshrl.u32 %v4125, %v4141
      %v4144 = vor.u32 %v4142, %v4143
      %v4145 = vsub.s32 4294967266, %v4140
      %v4146 = vadd.s32 %v4145, 127
      %v4147 = vshll.u32 %v4146, 23
      %v4148 = vor.u32 4788187, %v4147
      %v4149 = vand.u32 2147483647, %v4148
      %v4151 = vcvt.s32.f32 %v4144
      %v4152 = vmul.f32 %v4151, %v4149
      %v4153 = vxor.u32 %v4152, 2147483648
      %v4154 = vsel %vm4033, %v4153, %v4152
      %v4155 = vsub.s32 4, %v4131
      %v4156 = vsel %vm4033, %v4155, %v4131
      %v4157 = vsel %vm4032, %v271, %v4154
      %v4158 = vsel %vm4032, 0, %v4156
      %v4159 = vmul.f32 %v4157, %v4157
      %v4160 = vmul.f32 %v4159, -0.001358992
      %v4161 = vadd.f32 %v4160, 0.041655596
      %v4162 = vmul.f32 %v4159, %v4161
      %v4163 = vadd.f32 %v4162, -0.4999988
      %v4164 = vmul.f32 %v4159, %v4163
      %v4165 = vadd.f32 1.0, %v4164
      %v4166 = vmul.f32 %v4157, %v4157
      %v4167 = vmul.f32 %v4166, -0.00019511016
      %v4168 = vadd.f32 %v4167, 0.008332121
      %v4169 = vmul.f32 %v4166, %v4168
      %v4170 = vadd.f32 %v4169, -0.16666654
      %v4171 = vmul.f32 %v4166, %v4170
      %v4172 = vadd.f32 %v4171, 1.0
      %v4173 = vmul.f32 %v4172, %v4157
      %vm4174 = vweird.f32 %v271
      %v4175 = vadd.s32 %v4158, 3
      %v4176 = vand.u32 %v4175, 3
      %vm4177 = vcmp.lt.s32.totalorder %v4176, 2
      %vm4178 = vcmp.eq.s32.totalorder %v4176, 0
      %v4179 = vxor.u32 %v4173, 2147483648
      %v4180 = vsel %vm4178, %v4165, %v4179
      %vm4181 = vcmp.eq.s32.totalorder %v4176, 2
      %v4182 = vxor.u32 %v4165, 2147483648
      %v4183 = vsel %vm4181, %v4182, %v4173
      %v4184 = vsel %vm4177, %v4180, %v4183
      %v4185 = vsel %vm4174, nan, %v4184
      %v4186 = vand.u32 2147483647, %v272
      %vm4187 = vcmp.le.f32.partialorder %v4186, 0.7853982
      %vm4188 = vcmp.lt.s32.totalorder %v272, 0
      %v4189 = vand.u32 %v272, 2139095040
      %v4190 = vshrl.u32 %v4189, 23
      %v4191 = vsub.s32 %v4190, 127
      %v4192 = vand.u32 2147483647, %v272
      %v4193 = vand.u32 %v4192, 8388607
      %v4194 = vor.u32 %v4193, 8388608
      %v4195 = vsub.s32 0, %v4194
      %v4196 = vadd.s32 %v4191, 1
      %vm4197 = vcmp.gt.s32.totalorder %v4196, 0
      %v4198 = vsel %vm4197, %v4196, 0
      %v4199 = vshrl.u32 %v4198, 5
      %v4200 = vand.u32 %v4198, 31
      %v4201 = vsub.s32 32, %v4200
      %v4202 = vshrl.u32 683565275, %v4201
      %v4203 = vshll.u32 683565275, %v4200
      %v4204 = vshrl.u32 2475754826, %v4201
      %v4205 = vor.u32 %v4203, %v4204
      %v4206 = vshll.u32 2475754826, %v4200
      %v4207 = vshrl.u32 2131351028, %v4201
      %v4208 = vor.u32 %v4206, %v4207
      %v4209 = vshll.u32 2131351028, %v4200
      %v4210 = vshrl.u32 2102212464, %v4201
      %v4211 = vor.u32 %v4209, %v4210
      %v4212 = vshll.u32 2102212464, %v4200
      %v4213 = vshrl.u32 920167782, %v4201
      %v4214 = vor.u32 %v4212, %v4213
      %v4215 = vshll.u32 920167782, %v4200
      %v4216 = vshrl.u32 1326507024, %v4201
      %v4217 = vor.u32 %v4215, %v4216
      %vm4218 = vcmp.lt.s32.totalorder %v4199, 1
      %vm4219 = vcmp.lt.s32.totalorder %v4199, 2
      %vm4220 = vcmp.lt.s32.totalorder %v4199, 3
      %vm4221 = vcmp.lt.s32.totalorder %v4199, 4
      %v4222 = vsel %vm4218, %v4202, %v4205
      %v4223 = vsel %vm4221, %v4211, 2102212464
      %v4224 = vsel %vm4220, %v4208, %v4223
      %v4225 = vsel %vm4219, %v4222, %v4224
      %v4226 = vsel %vm4218, %v4205, %v4208
      %v4227 = vsel %vm4221, %v4214, 920167782
      %v4228 = vsel %vm4220, %v4211, %v4227
      %v4229 = vsel %vm4219, %v4226, %v4228
      %v4230 = vsel %vm4218, %v4208, %v4211
      %v4231 = vsel %vm4221, %v4217, 1326507024
      %v4232 = vsel %vm4220, %v4214, %v4231
      %v4233 = vsel %vm4219, %v4230, %v4232
      %v4234 = vshll.u32 %v4194, 8
      %v4235 = vand.u32 %v4234, 65535
      %v4236 = vshrl.u32 %v4234, 16
      %v4237 = vand.u32 %v4233, 65535
      %v4238 = vshrl.u32 %v4233, 16
      %v4239 = vmul.u32 %v4235, %v4237
      %v4240 = vmul.u32 %v4235, %v4238
      %v4241 = vmul.u32 %v4236, %v4237
      %v4242 = vmul.u32 %v4236, %v4238
      %v4243 = vshll.u32 %v4240, 16
      %v4244 = vshrl.u32 %v4240, 16
      %v4245 = vshll.u32 %v4241, 16
      %v4246 = vshrl.u32 %v4241, 16
      %vm4247 = vc.u32 %v4239, %v4243
      %v4248 = vsel %vm4247, 1, 0
      %v4249 = vadd.s32 %v4239, %v4243
      %v4250 = vadd.s32 %v4242, %v4248
      %vm4251 = vc.u32 %v4249, %v4245
      %v4252 = vsel %vm4251, 1, 0
      %v4253 = vadd.s32 %v4249, %v4245
      %v4254 = vadd.s32 %v4250, %v4252
      %v4255 = vadd.s32 %v4254, %v4244
      %v4256 = vadd.s32 %v4255, %v4246
      %v4257 = vand.u32 %v4234, 65535
      %v4258 = vshrl.u32 %v4234, 16
      %v4259 = vand.u32 %v4229, 65535
      %v4260 = vshrl.u32 %v4229, 16
      %v4261 = vmul.u32 %v4257, %v4259
      %v4262 = vmul.u32 %v4257, %v4260
      %v4263 = vmul.u32 %v4258, %v4259
      %v4264 = vmul.u32 %v4258, %v4260
      %v4265 = vshll.u32 %v4262, 16
      %v4266 = vshrl.u32 %v4262, 16
      %v4267 = vshll.u32 %v4263, 16
      %v4268 = vshrl.u32 %v4263, 16
      %vm4269 = vc.u32 %v4261, %v4265
      %v4270 = vsel %vm4269, 1, 0
      %v4271 = vadd.s32 %v4261, %v4265
      %v4272 = vadd.s32 %v4264, %v4270
      %vm4273 = vc.u32 %v4271, %v4267
      %v4274 = vsel %vm4273, 1, 0
      %v4275 = vadd.s32 %v4271, %v4267
      %v4276 = vadd.s32 %v4272, %v4274
      %v4277 = vadd.s32 %v4276, %v4266
      %v4278 = vadd.s32 %v4277, %v4268
      %v4279 = vmul.u32 %v4234, %v4225
      %v4280 = vadd.s32 %v4256, %v4275
      %vm4281 = vc.u32 %v4256, %v4275
      %v4282 = vadd.s32 %v4278, 1
      %v4283 = vsel %vm4281, %v4282, %v4278
      %v4284 = vadd.s32 %v4279, %v4283
      %v4285 = vadd.s32 %v4284, 536870912
      %v4286 = vshrl.u32 %v4285, 30
      %v4287 = vshll.u32 %v4286, 30
      %v4288 = vsub.s32 %v4284, %v4287
      %vm4289 = vcmp.lt.s32.totalorder %v4288, 0
      %v4290 = vsub.s32 0, %v4288
      %v4291 = vsel %vm4289, %v4290, %v4288
      %v4292 = vclz %v4291
      %v4293 = vsub.s32 %v4292, 2
      %vm4294 = vcmp.gt.s32.totalorder 0, %v4293
      %v4295 = vsel %vm4294, 0, %v4293
      %v4296 = vsub.s32 32, %v4295
      %v4297 = vshll.u32 %v4288, %v4295
      %v4298 = vshrl.u32 %v4280, %v4296
      %v4299 = vor.u32 %v4297, %v4298
      %v4300 = vsub.s32 4294967266, %v4295
      %v4301 = vadd.s32 %v4300, 127
      %v4302 = vshll.u32 %v4301, 23
      %v4303 = vor.u32 4788187, %v4302
      %v4304 = vand.u32 2147483647, %v4303
      %v4306 = vcvt.s32.f32 %v4299
      %v4307 = vmul.f32 %v4306, %v4304
      %v4308 = vxor.u32 %v4307, 2147483648
      %v4309 = vsel %vm4188, %v4308, %v4307
      %v4310 = vsub.s32 4, %v4286
      %v4311 = vsel %vm4188, %v4310, %v4286
      %v4312 = vsel %vm4187, %v272, %v4309
      %v4313 = vsel %vm4187, 0, %v4311
      %v4314 = vmul.f32 %v4312, %v4312
      %v4315 = vmul.f32 %v4314, -0.001358992
      %v4316 = vadd.f32 %v4315, 0.041655596
      %v4317 = vmul.f32 %v4314, %v4316
      %v4318 = vadd.f32 %v4317, -0.4999988
      %v4319 = vmul.f32 %v4314, %v4318
      %v4320 = vadd.f32 1.0, %v4319
      %v4321 = vmul.f32 %v4312, %v4312
      %v4322 = vmul.f32 %v4321, -0.00019511016
      %v4323 = vadd.f32 %v4322, 0.008332121
      %v4324 = vmul.f32 %v4321, %v4323
      %v4325 = vadd.f32 %v4324, -0.16666654
      %v4326 = vmul.f32 %v4321, %v4325
      %v4327 = vadd.f32 %v4326, 1.0
      %v4328 = vmul.f32 %v4327, %v4312
      %vm4329 = vweird.f32 %v272
      %v4330 = vadd.s32 %v4313, 3
      %v4331 = vand.u32 %v4330, 3
      %vm4332 = vcmp.lt.s32.totalorder %v4331, 2
      %vm4333 = vcmp.eq.s32.totalorder %v4331, 0
      %v4334 = vxor.u32 %v4328, 2147483648
      %v4335 = vsel %vm4333, %v4320, %v4334
      %vm4336 = vcmp.eq.s32.totalorder %v4331, 2
      %v4337 = vxor.u32 %v4320, 2147483648
      %v4338 = vsel %vm4336, %v4337, %v4328
      %v4339 = vsel %vm4332, %v4335, %v4338
      %v4340 = vsel %vm4329, nan, %v4339
      %v4341 = vand.u32 2147483647, %v273
      %vm4342 = vcmp.le.f32.partialorder %v4341, 0.7853982
      %vm4343 = vcmp.lt.s32.totalorder %v273, 0
      %v4344 = vand.u32 %v273, 2139095040
      %v4345 = vshrl.u32 %v4344, 23
      %v4346 = vsub.s32 %v4345, 127
      %v4347 = vand.u32 2147483647, %v273
      %v4348 = vand.u32 %v4347, 8388607
      %v4349 = vor.u32 %v4348, 8388608
      %v4350 = vsub.s32 0, %v4349
      %v4351 = vadd.s32 %v4346, 1
      %vm4352 = vcmp.gt.s32.totalorder %v4351, 0
      %v4353 = vsel %vm4352, %v4351, 0
      %v4354 = vshrl.u32 %v4353, 5
      %v4355 = vand.u32 %v4353, 31
      %v4356 = vsub.s32 32, %v4355
      %v4357 = vshrl.u32 683565275, %v4356
      %v4358 = vshll.u32 683565275, %v4355
      %v4359 = vshrl.u32 2475754826, %v4356
      %v4360 = vor.u32 %v4358, %v4359
      %v4361 = vshll.u32 2475754826, %v4355
      %v4362 = vshrl.u32 2131351028, %v4356
      %v4363 = vor.u32 %v4361, %v4362
      %v4364 = vshll.u32 2131351028, %v4355
      %v4365 = vshrl.u32 2102212464, %v4356
      %v4366 = vor.u32 %v4364, %v4365
      %v4367 = vshll.u32 2102212464, %v4355
      %v4368 = vshrl.u32 920167782, %v4356
      %v4369 = vor.u32 %v4367, %v4368
      %v4370 = vshll.u32 920167782, %v4355
      %v4371 = vshrl.u32 1326507024, %v4356
      %v4372 = vor.u32 %v4370, %v4371
      %vm4373 = vcmp.lt.s32.totalorder %v4354, 1
      %vm4374 = vcmp.lt.s32.totalorder %v4354, 2
      %vm4375 = vcmp.lt.s32.totalorder %v4354, 3
      %vm4376 = vcmp.lt.s32.totalorder %v4354, 4
      %v4377 = vsel %vm4373, %v4357, %v4360
      %v4378 = vsel %vm4376, %v4366, 2102212464
      %v4379 = vsel %vm4375, %v4363, %v4378
      %v4380 = vsel %vm4374, %v4377, %v4379
      %v4381 = vsel %vm4373, %v4360, %v4363
      %v4382 = vsel %vm4376, %v4369, 920167782
      %v4383 = vsel %vm4375, %v4366, %v4382
      %v4384 = vsel %vm4374, %v4381, %v4383
      %v4385 = vsel %vm4373, %v4363, %v4366
      %v4386 = vsel %vm4376, %v4372, 1326507024
      %v4387 = vsel %vm4375, %v4369, %v4386
      %v4388 = vsel %vm4374, %v4385, %v4387
      %v4389 = vshll.u32 %v4349, 8
      %v4390 = vand.u32 %v4389, 65535
      %v4391 = vshrl.u32 %v4389, 16
      %v4392 = vand.u32 %v4388, 65535
      %v4393 = vshrl.u32 %v4388, 16
      %v4394 = vmul.u32 %v4390, %v4392
      %v4395 = vmul.u32 %v4390, %v4393
      %v4396 = vmul.u32 %v4391, %v4392
      %v4397 = vmul.u32 %v4391, %v4393
      %v4398 = vshll.u32 %v4395, 16
      %v4399 = vshrl.u32 %v4395, 16
      %v4400 = vshll.u32 %v4396, 16
      %v4401 = vshrl.u32 %v4396, 16
      %vm4402 = vc.u32 %v4394, %v4398
      %v4403 = vsel %vm4402, 1, 0
      %v4404 = vadd.s32 %v4394, %v4398
      %v4405 = vadd.s32 %v4397, %v4403
      %vm4406 = vc.u32 %v4404, %v4400
      %v4407 = vsel %vm4406, 1, 0
      %v4408 = vadd.s32 %v4404, %v4400
      %v4409 = vadd.s32 %v4405, %v4407
      %v4410 = vadd.s32 %v4409, %v4399
      %v4411 = vadd.s32 %v4410, %v4401
      %v4412 = vand.u32 %v4389, 65535
      %v4413 = vshrl.u32 %v4389, 16
      %v4414 = vand.u32 %v4384, 65535
      %v4415 = vshrl.u32 %v4384, 16
      %v4416 = vmul.u32 %v4412, %v4414
      %v4417 = vmul.u32 %v4412, %v4415
      %v4418 = vmul.u32 %v4413, %v4414
      %v4419 = vmul.u32 %v4413, %v4415
      %v4420 = vshll.u32 %v4417, 16
      %v4421 = vshrl.u32 %v4417, 16
      %v4422 = vshll.u32 %v4418, 16
      %v4423 = vshrl.u32 %v4418, 16
      %vm4424 = vc.u32 %v4416, %v4420
      %v4425 = vsel %vm4424, 1, 0
      %v4426 = vadd.s32 %v4416, %v4420
      %v4427 = vadd.s32 %v4419, %v4425
      %vm4428 = vc.u32 %v4426, %v4422
      %v4429 = vsel %vm4428, 1, 0
      %v4430 = vadd.s32 %v4426, %v4422
      %v4431 = vadd.s32 %v4427, %v4429
      %v4432 = vadd.s32 %v4431, %v4421
      %v4433 = vadd.s32 %v4432, %v4423
      %v4434 = vmul.u32 %v4389, %v4380
      %v4435 = vadd.s32 %v4411, %v4430
      %vm4436 = vc.u32 %v4411, %v4430
      %v4437 = vadd.s32 %v4433, 1
      %v4438 = vsel %vm4436, %v4437, %v4433
      %v4439 = vadd.s32 %v4434, %v4438
      %v4440 = vadd.s32 %v4439, 536870912
      %v4441 = vshrl.u32 %v4440, 30
      %v4442 = vshll.u32 %v4441, 30
      %v4443 = vsub.s32 %v4439, %v4442
      %vm4444 = vcmp.lt.s32.totalorder %v4443, 0
      %v4445 = vsub.s32 0, %v4443
      %v4446 = vsel %vm4444, %v4445, %v4443
      %v4447 = vclz %v4446
      %v4448 = vsub.s32 %v4447, 2
      %vm4449 = vcmp.gt.s32.totalorder 0, %v4448
      %v4450 = vsel %vm4449, 0, %v4448
      %v4451 = vsub.s32 32, %v4450
      %v4452 = vshll.u32 %v4443, %v4450
      %v4453 = vshrl.u32 %v4435, %v4451
      %v4454 = vor.u32 %v4452, %v4453
      %v4455 = vsub.s32 4294967266, %v4450
      %v4456 = vadd.s32 %v4455, 127
      %v4457 = vshll.u32 %v4456, 23
      %v4458 = vor.u32 4788187, %v4457
      %v4459 = vand.u32 2147483647, %v4458
      %v4461 = vcvt.s32.f32 %v4454
      %v4462 = vmul.f32 %v4461, %v4459
      %v4463 = vxor.u32 %v4462, 2147483648
      %v4464 = vsel %vm4343, %v4463, %v4462
      %v4465 = vsub.s32 4, %v4441
      %v4466 = vsel %vm4343, %v4465, %v4441
      %v4467 = vsel %vm4342, %v273, %v4464
      %v4468 = vsel %vm4342, 0, %v4466
      %v4469 = vmul.f32 %v4467, %v4467
      %v4470 = vmul.f32 %v4469, -0.001358992
      %v4471 = vadd.f32 %v4470, 0.041655596
      %v4472 = vmul.f32 %v4469, %v4471
      %v4473 = vadd.f32 %v4472, -0.4999988
      %v4474 = vmul.f32 %v4469, %v4473
      %v4475 = vadd.f32 1.0, %v4474
      %v4476 = vmul.f32 %v4467, %v4467
      %v4477 = vmul.f32 %v4476, -0.00019511016
      %v4478 = vadd.f32 %v4477, 0.008332121
      %v4479 = vmul.f32 %v4476, %v4478
      %v4480 = vadd.f32 %v4479, -0.16666654
      %v4481 = vmul.f32 %v4476, %v4480
      %v4482 = vadd.f32 %v4481, 1.0
      %v4483 = vmul.f32 %v4482, %v4467
      %vm4484 = vweird.f32 %v273
      %v4485 = vadd.s32 %v4468, 3
      %v4486 = vand.u32 %v4485, 3
      %vm4487 = vcmp.lt.s32.totalorder %v4486, 2
      %vm4488 = vcmp.eq.s32.totalorder %v4486, 0
      %v4489 = vxor.u32 %v4483, 2147483648
      %v4490 = vsel %vm4488, %v4475, %v4489
      %vm4491 = vcmp.eq.s32.totalorder %v4486, 2
      %v4492 = vxor.u32 %v4475, 2147483648
      %v4493 = vsel %vm4491, %v4492, %v4483
      %v4494 = vsel %vm4487, %v4490, %v4493
      %v4495 = vsel %vm4484, nan, %v4494
      %v4496 = vand.u32 2147483647, %v274
      %vm4497 = vcmp.le.f32.partialorder %v4496, 0.7853982
      %vm4498 = vcmp.lt.s32.totalorder %v274, 0
      %v4499 = vand.u32 %v274, 2139095040
      %v4500 = vshrl.u32 %v4499, 23
      %v4501 = vsub.s32 %v4500, 127
      %v4502 = vand.u32 2147483647, %v274
      %v4503 = vand.u32 %v4502, 8388607
      %v4504 = vor.u32 %v4503, 8388608
      %v4505 = vsub.s32 0, %v4504
      %v4506 = vadd.s32 %v4501, 1
      %vm4507 = vcmp.gt.s32.totalorder %v4506, 0
      %v4508 = vsel %vm4507, %v4506, 0
      %v4509 = vshrl.u32 %v4508, 5
      %v4510 = vand.u32 %v4508, 31
      %v4511 = vsub.s32 32, %v4510
      %v4512 = vshrl.u32 683565275, %v4511
      %v4513 = vshll.u32 683565275, %v4510
      %v4514 = vshrl.u32 2475754826, %v4511
      %v4515 = vor.u32 %v4513, %v4514
      %v4516 = vshll.u32 2475754826, %v4510
      %v4517 = vshrl.u32 2131351028, %v4511
      %v4518 = vor.u32 %v4516, %v4517
      %v4519 = vshll.u32 2131351028, %v4510
      %v4520 = vshrl.u32 2102212464, %v4511
      %v4521 = vor.u32 %v4519, %v4520
      %v4522 = vshll.u32 2102212464, %v4510
      %v4523 = vshrl.u32 920167782, %v4511
      %v4524 = vor.u32 %v4522, %v4523
      %v4525 = vshll.u32 920167782, %v4510
      %v4526 = vshrl.u32 1326507024, %v4511
      %v4527 = vor.u32 %v4525, %v4526
      %vm4528 = vcmp.lt.s32.totalorder %v4509, 1
      %vm4529 = vcmp.lt.s32.totalorder %v4509, 2
      %vm4530 = vcmp.lt.s32.totalorder %v4509, 3
      %vm4531 = vcmp.lt.s32.totalorder %v4509, 4
      %v4532 = vsel %vm4528, %v4512, %v4515
      %v4533 = vsel %vm4531, %v4521, 2102212464
      %v4534 = vsel %vm4530, %v4518, %v4533
      %v4535 = vsel %vm4529, %v4532, %v4534
      %v4536 = vsel %vm4528, %v4515, %v4518
      %v4537 = vsel %vm4531, %v4524, 920167782
      %v4538 = vsel %vm4530, %v4521, %v4537
      %v4539 = vsel %vm4529, %v4536, %v4538
      %v4540 = vsel %vm4528, %v4518, %v4521
      %v4541 = vsel %vm4531, %v4527, 1326507024
      %v4542 = vsel %vm4530, %v4524, %v4541
      %v4543 = vsel %vm4529, %v4540, %v4542
      %v4544 = vshll.u32 %v4504, 8
      %v4545 = vand.u32 %v4544, 65535
      %v4546 = vshrl.u32 %v4544, 16
      %v4547 = vand.u32 %v4543, 65535
      %v4548 = vshrl.u32 %v4543, 16
      %v4549 = vmul.u32 %v4545, %v4547
      %v4550 = vmul.u32 %v4545, %v4548
      %v4551 = vmul.u32 %v4546, %v4547
      %v4552 = vmul.u32 %v4546, %v4548
      %v4553 = vshll.u32 %v4550, 16
      %v4554 = vshrl.u32 %v4550, 16
      %v4555 = vshll.u32 %v4551, 16
      %v4556 = vshrl.u32 %v4551, 16
      %vm4557 = vc.u32 %v4549, %v4553
      %v4558 = vsel %vm4557, 1, 0
      %v4559 = vadd.s32 %v4549, %v4553
      %v4560 = vadd.s32 %v4552, %v4558
      %vm4561 = vc.u32 %v4559, %v4555
      %v4562 = vsel %vm4561, 1, 0
      %v4563 = vadd.s32 %v4559, %v4555
      %v4564 = vadd.s32 %v4560, %v4562
      %v4565 = vadd.s32 %v4564, %v4554
      %v4566 = vadd.s32 %v4565, %v4556
      %v4567 = vand.u32 %v4544, 65535
      %v4568 = vshrl.u32 %v4544, 16
      %v4569 = vand.u32 %v4539, 65535
      %v4570 = vshrl.u32 %v4539, 16
      %v4571 = vmul.u32 %v4567, %v4569
      %v4572 = vmul.u32 %v4567, %v4570
      %v4573 = vmul.u32 %v4568, %v4569
      %v4574 = vmul.u32 %v4568, %v4570
      %v4575 = vshll.u32 %v4572, 16
      %v4576 = vshrl.u32 %v4572, 16
      %v4577 = vshll.u32 %v4573, 16
      %v4578 = vshrl.u32 %v4573, 16
      %vm4579 = vc.u32 %v4571, %v4575
      %v4580 = vsel %vm4579, 1, 0
      %v4581 = vadd.s32 %v4571, %v4575
      %v4582 = vadd.s32 %v4574, %v4580
      %vm4583 = vc.u32 %v4581, %v4577
      %v4584 = vsel %vm4583, 1, 0
      %v4585 = vadd.s32 %v4581, %v4577
      %v4586 = vadd.s32 %v4582, %v4584
      %v4587 = vadd.s32 %v4586, %v4576
      %v4588 = vadd.s32 %v4587, %v4578
      %v4589 = vmul.u32 %v4544, %v4535
      %v4590 = vadd.s32 %v4566, %v4585
      %vm4591 = vc.u32 %v4566, %v4585
      %v4592 = vadd.s32 %v4588, 1
      %v4593 = vsel %vm4591, %v4592, %v4588
      %v4594 = vadd.s32 %v4589, %v4593
      %v4595 = vadd.s32 %v4594, 536870912
      %v4596 = vshrl.u32 %v4595, 30
      %v4597 = vshll.u32 %v4596, 30
      %v4598 = vsub.s32 %v4594, %v4597
      %vm4599 = vcmp.lt.s32.totalorder %v4598, 0
      %v4600 = vsub.s32 0, %v4598
      %v4601 = vsel %vm4599, %v4600, %v4598
      %v4602 = vclz %v4601
      %v4603 = vsub.s32 %v4602, 2
      %vm4604 = vcmp.gt.s32.totalorder 0, %v4603
      %v4605 = vsel %vm4604, 0, %v4603
      %v4606 = vsub.s32 32, %v4605
      %v4607 = vshll.u32 %v4598, %v4605
      %v4608 = vshrl.u32 %v4590, %v4606
      %v4609 = vor.u32 %v4607, %v4608
      %v4610 = vsub.s32 4294967266, %v4605
      %v4611 = vadd.s32 %v4610, 127
      %v4612 = vshll.u32 %v4611, 23
      %v4613 = vor.u32 4788187, %v4612
      %v4614 = vand.u32 2147483647, %v4613
      %v4616 = vcvt.s32.f32 %v4609
      %v4617 = vmul.f32 %v4616, %v4614
      %v4618 = vxor.u32 %v4617, 2147483648
      %v4619 = vsel %vm4498, %v4618, %v4617
      %v4620 = vsub.s32 4, %v4596
      %v4621 = vsel %vm4498, %v4620, %v4596
      %v4622 = vsel %vm4497, %v274, %v4619
      %v4623 = vsel %vm4497, 0, %v4621
      %v4624 = vmul.f32 %v4622, %v4622
      %v4625 = vmul.f32 %v4624, -0.001358992
      %v4626 = vadd.f32 %v4625, 0.041655596
      %v4627 = vmul.f32 %v4624, %v4626
      %v4628 = vadd.f32 %v4627, -0.4999988
      %v4629 = vmul.f32 %v4624, %v4628
      %v4630 = vadd.f32 1.0, %v4629
      %v4631 = vmul.f32 %v4622, %v4622
      %v4632 = vmul.f32 %v4631, -0.00019511016
      %v4633 = vadd.f32 %v4632, 0.008332121
      %v4634 = vmul.f32 %v4631, %v4633
      %v4635 = vadd.f32 %v4634, -0.16666654
      %v4636 = vmul.f32 %v4631, %v4635
      %v4637 = vadd.f32 %v4636, 1.0
      %v4638 = vmul.f32 %v4637, %v4622
      %vm4639 = vweird.f32 %v274
      %v4640 = vadd.s32 %v4623, 3
      %v4641 = vand.u32 %v4640, 3
      %vm4642 = vcmp.lt.s32.totalorder %v4641, 2
      %vm4643 = vcmp.eq.s32.totalorder %v4641, 0
      %v4644 = vxor.u32 %v4638, 2147483648
      %v4645 = vsel %vm4643, %v4630, %v4644
      %vm4646 = vcmp.eq.s32.totalorder %v4641, 2
      %v4647 = vxor.u32 %v4630, 2147483648
      %v4648 = vsel %vm4646, %v4647, %v4638
      %v4649 = vsel %vm4642, %v4645, %v4648
      %v4650 = vsel %vm4639, nan, %v4649
      %v4651 = vand.u32 2147483647, %v275
      %vm4652 = vcmp.le.f32.partialorder %v4651, 0.7853982
      %vm4653 = vcmp.lt.s32.totalorder %v275, 0
      %v4654 = vand.u32 %v275, 2139095040
      %v4655 = vshrl.u32 %v4654, 23
      %v4656 = vsub.s32 %v4655, 127
      %v4657 = vand.u32 2147483647, %v275
      %v4658 = vand.u32 %v4657, 8388607
      %v4659 = vor.u32 %v4658, 8388608
      %v4660 = vsub.s32 0, %v4659
      %v4661 = vadd.s32 %v4656, 1
      %vm4662 = vcmp.gt.s32.totalorder %v4661, 0
      %v4663 = vsel %vm4662, %v4661, 0
      %v4664 = vshrl.u32 %v4663, 5
      %v4665 = vand.u32 %v4663, 31
      %v4666 = vsub.s32 32, %v4665
      %v4667 = vshrl.u32 683565275, %v4666
      %v4668 = vshll.u32 683565275, %v4665
      %v4669 = vshrl.u32 2475754826, %v4666
      %v4670 = vor.u32 %v4668, %v4669
      %v4671 = vshll.u32 2475754826, %v4665
      %v4672 = vshrl.u32 2131351028, %v4666
      %v4673 = vor.u32 %v4671, %v4672
      %v4674 = vshll.u32 2131351028, %v4665
      %v4675 = vshrl.u32 2102212464, %v4666
      %v4676 = vor.u32 %v4674, %v4675
      %v4677 = vshll.u32 2102212464, %v4665
      %v4678 = vshrl.u32 920167782, %v4666
      %v4679 = vor.u32 %v4677, %v4678
      %v4680 = vshll.u32 920167782, %v4665
      %v4681 = vshrl.u32 1326507024, %v4666
      %v4682 = vor.u32 %v4680, %v4681
      %vm4683 = vcmp.lt.s32.totalorder %v4664, 1
      %vm4684 = vcmp.lt.s32.totalorder %v4664, 2
      %vm4685 = vcmp.lt.s32.totalorder %v4664, 3
      %vm4686 = vcmp.lt.s32.totalorder %v4664, 4
      %v4687 = vsel %vm4683, %v4667, %v4670
      %v4688 = vsel %vm4686, %v4676, 2102212464
      %v4689 = vsel %vm4685, %v4673, %v4688
      %v4690 = vsel %vm4684, %v4687, %v4689
      %v4691 = vsel %vm4683, %v4670, %v4673
      %v4692 = vsel %vm4686, %v4679, 920167782
      %v4693 = vsel %vm4685, %v4676, %v4692
      %v4694 = vsel %vm4684, %v4691, %v4693
      %v4695 = vsel %vm4683, %v4673, %v4676
      %v4696 = vsel %vm4686, %v4682, 1326507024
      %v4697 = vsel %vm4685, %v4679, %v4696
      %v4698 = vsel %vm4684, %v4695, %v4697
      %v4699 = vshll.u32 %v4659, 8
      %v4700 = vand.u32 %v4699, 65535
      %v4701 = vshrl.u32 %v4699, 16
      %v4702 = vand.u32 %v4698, 65535
      %v4703 = vshrl.u32 %v4698, 16
      %v4704 = vmul.u32 %v4700, %v4702
      %v4705 = vmul.u32 %v4700, %v4703
      %v4706 = vmul.u32 %v4701, %v4702
      %v4707 = vmul.u32 %v4701, %v4703
      %v4708 = vshll.u32 %v4705, 16
      %v4709 = vshrl.u32 %v4705, 16
      %v4710 = vshll.u32 %v4706, 16
      %v4711 = vshrl.u32 %v4706, 16
      %vm4712 = vc.u32 %v4704, %v4708
      %v4713 = vsel %vm4712, 1, 0
      %v4714 = vadd.s32 %v4704, %v4708
      %v4715 = vadd.s32 %v4707, %v4713
      %vm4716 = vc.u32 %v4714, %v4710
      %v4717 = vsel %vm4716, 1, 0
      %v4718 = vadd.s32 %v4714, %v4710
      %v4719 = vadd.s32 %v4715, %v4717
      %v4720 = vadd.s32 %v4719, %v4709
      %v4721 = vadd.s32 %v4720, %v4711
      %v4722 = vand.u32 %v4699, 65535
      %v4723 = vshrl.u32 %v4699, 16
      %v4724 = vand.u32 %v4694, 65535
      %v4725 = vshrl.u32 %v4694, 16
      %v4726 = vmul.u32 %v4722, %v4724
      %v4727 = vmul.u32 %v4722, %v4725
      %v4728 = vmul.u32 %v4723, %v4724
      %v4729 = vmul.u32 %v4723, %v4725
      %v4730 = vshll.u32 %v4727, 16
      %v4731 = vshrl.u32 %v4727, 16
      %v4732 = vshll.u32 %v4728, 16
      %v4733 = vshrl.u32 %v4728, 16
      %vm4734 = vc.u32 %v4726, %v4730
      %v4735 = vsel %vm4734, 1, 0
      %v4736 = vadd.s32 %v4726, %v4730
      %v4737 = vadd.s32 %v4729, %v4735
      %vm4738 = vc.u32 %v4736, %v4732
      %v4739 = vsel %vm4738, 1, 0
      %v4740 = vadd.s32 %v4736, %v4732
      %v4741 = vadd.s32 %v4737, %v4739
      %v4742 = vadd.s32 %v4741, %v4731
      %v4743 = vadd.s32 %v4742, %v4733
      %v4744 = vmul.u32 %v4699, %v4690
      %v4745 = vadd.s32 %v4721, %v4740
      %vm4746 = vc.u32 %v4721, %v4740
      %v4747 = vadd.s32 %v4743, 1
      %v4748 = vsel %vm4746, %v4747, %v4743
      %v4749 = vadd.s32 %v4744, %v4748
      %v4750 = vadd.s32 %v4749, 536870912
      %v4751 = vshrl.u32 %v4750, 30
      %v4752 = vshll.u32 %v4751, 30
      %v4753 = vsub.s32 %v4749, %v4752
      %vm4754 = vcmp.lt.s32.totalorder %v4753, 0
      %v4755 = vsub.s32 0, %v4753
      %v4756 = vsel %vm4754, %v4755, %v4753
      %v4757 = vclz %v4756
      %v4758 = vsub.s32 %v4757, 2
      %vm4759 = vcmp.gt.s32.totalorder 0, %v4758
      %v4760 = vsel %vm4759, 0, %v4758
      %v4761 = vsub.s32 32, %v4760
      %v4762 = vshll.u32 %v4753, %v4760
      %v4763 = vshrl.u32 %v4745, %v4761
      %v4764 = vor.u32 %v4762, %v4763
      %v4765 = vsub.s32 4294967266, %v4760
      %v4766 = vadd.s32 %v4765, 127
      %v4767 = vshll.u32 %v4766, 23
      %v4768 = vor.u32 4788187, %v4767
      %v4769 = vand.u32 2147483647, %v4768
      %v4771 = vcvt.s32.f32 %v4764
      %v4772 = vmul.f32 %v4771, %v4769
      %v4773 = vxor.u32 %v4772, 2147483648
      %v4774 = vsel %vm4653, %v4773, %v4772
      %v4775 = vsub.s32 4, %v4751
      %v4776 = vsel %vm4653, %v4775, %v4751
      %v4777 = vsel %vm4652, %v275, %v4774
      %v4778 = vsel %vm4652, 0, %v4776
      %v4779 = vmul.f32 %v4777, %v4777
      %v4780 = vmul.f32 %v4779, -0.001358992
      %v4781 = vadd.f32 %v4780, 0.041655596
      %v4782 = vmul.f32 %v4779, %v4781
      %v4783 = vadd.f32 %v4782, -0.4999988
      %v4784 = vmul.f32 %v4779, %v4783
      %v4785 = vadd.f32 1.0, %v4784
      %v4786 = vmul.f32 %v4777, %v4777
      %v4787 = vmul.f32 %v4786, -0.00019511016
      %v4788 = vadd.f32 %v4787, 0.008332121
      %v4789 = vmul.f32 %v4786, %v4788
      %v4790 = vadd.f32 %v4789, -0.16666654
      %v4791 = vmul.f32 %v4786, %v4790
      %v4792 = vadd.f32 %v4791, 1.0
      %v4793 = vmul.f32 %v4792, %v4777
      %vm4794 = vweird.f32 %v275
      %v4795 = vadd.s32 %v4778, 3
      %v4796 = vand.u32 %v4795, 3
      %vm4797 = vcmp.lt.s32.totalorder %v4796, 2
      %vm4798 = vcmp.eq.s32.totalorder %v4796, 0
      %v4799 = vxor.u32 %v4793, 2147483648
      %v4800 = vsel %vm4798, %v4785, %v4799
      %vm4801 = vcmp.eq.s32.totalorder %v4796, 2
      %v4802 = vxor.u32 %v4785, 2147483648
      %v4803 = vsel %vm4801, %v4802, %v4793
      %v4804 = vsel %vm4797, %v4800, %v4803
      %v4805 = vsel %vm4794, nan, %v4804
      %v4806 = vand.u32 2147483647, %v276
      %vm4807 = vcmp.le.f32.partialorder %v4806, 0.7853982
      %vm4808 = vcmp.lt.s32.totalorder %v276, 0
      %v4809 = vand.u32 %v276, 2139095040
      %v4810 = vshrl.u32 %v4809, 23
      %v4811 = vsub.s32 %v4810, 127
      %v4812 = vand.u32 2147483647, %v276
      %v4813 = vand.u32 %v4812, 8388607
      %v4814 = vor.u32 %v4813, 8388608
      %v4815 = vsub.s32 0, %v4814
      %v4816 = vadd.s32 %v4811, 1
      %vm4817 = vcmp.gt.s32.totalorder %v4816, 0
      %v4818 = vsel %vm4817, %v4816, 0
      %v4819 = vshrl.u32 %v4818, 5
      %v4820 = vand.u32 %v4818, 31
      %v4821 = vsub.s32 32, %v4820
      %v4822 = vshrl.u32 683565275, %v4821
      %v4823 = vshll.u32 683565275, %v4820
      %v4824 = vshrl.u32 2475754826, %v4821
      %v4825 = vor.u32 %v4823, %v4824
      %v4826 = vshll.u32 2475754826, %v4820
      %v4827 = vshrl.u32 2131351028, %v4821
      %v4828 = vor.u32 %v4826, %v4827
      %v4829 = vshll.u32 2131351028, %v4820
      %v4830 = vshrl.u32 2102212464, %v4821
      %v4831 = vor.u32 %v4829, %v4830
      %v4832 = vshll.u32 2102212464, %v4820
      %v4833 = vshrl.u32 920167782, %v4821
      %v4834 = vor.u32 %v4832, %v4833
      %v4835 = vshll.u32 920167782, %v4820
      %v4836 = vshrl.u32 1326507024, %v4821
      %v4837 = vor.u32 %v4835, %v4836
      %vm4838 = vcmp.lt.s32.totalorder %v4819, 1
      %vm4839 = vcmp.lt.s32.totalorder %v4819, 2
      %vm4840 = vcmp.lt.s32.totalorder %v4819, 3
      %vm4841 = vcmp.lt.s32.totalorder %v4819, 4
      %v4842 = vsel %vm4838, %v4822, %v4825
      %v4843 = vsel %vm4841, %v4831, 2102212464
      %v4844 = vsel %vm4840, %v4828, %v4843
      %v4845 = vsel %vm4839, %v4842, %v4844
      %v4846 = vsel %vm4838, %v4825, %v4828
      %v4847 = vsel %vm4841, %v4834, 920167782
      %v4848 = vsel %vm4840, %v4831, %v4847
      %v4849 = vsel %vm4839, %v4846, %v4848
      %v4850 = vsel %vm4838, %v4828, %v4831
      %v4851 = vsel %vm4841, %v4837, 1326507024
      %v4852 = vsel %vm4840, %v4834, %v4851
      %v4853 = vsel %vm4839, %v4850, %v4852
      %v4854 = vshll.u32 %v4814, 8
      %v4855 = vand.u32 %v4854, 65535
      %v4856 = vshrl.u32 %v4854, 16
      %v4857 = vand.u32 %v4853, 65535
      %v4858 = vshrl.u32 %v4853, 16
      %v4859 = vmul.u32 %v4855, %v4857
      %v4860 = vmul.u32 %v4855, %v4858
      %v4861 = vmul.u32 %v4856, %v4857
      %v4862 = vmul.u32 %v4856, %v4858
      %v4863 = vshll.u32 %v4860, 16
      %v4864 = vshrl.u32 %v4860, 16
      %v4865 = vshll.u32 %v4861, 16
      %v4866 = vshrl.u32 %v4861, 16
      %vm4867 = vc.u32 %v4859, %v4863
      %v4868 = vsel %vm4867, 1, 0
      %v4869 = vadd.s32 %v4859, %v4863
      %v4870 = vadd.s32 %v4862, %v4868
      %vm4871 = vc.u32 %v4869, %v4865
      %v4872 = vsel %vm4871, 1, 0
      %v4873 = vadd.s32 %v4869, %v4865
      %v4874 = vadd.s32 %v4870, %v4872
      %v4875 = vadd.s32 %v4874, %v4864
      %v4876 = vadd.s32 %v4875, %v4866
      %v4877 = vand.u32 %v4854, 65535
      %v4878 = vshrl.u32 %v4854, 16
      %v4879 = vand.u32 %v4849, 65535
      %v4880 = vshrl.u32 %v4849, 16
      %v4881 = vmul.u32 %v4877, %v4879
      %v4882 = vmul.u32 %v4877, %v4880
      %v4883 = vmul.u32 %v4878, %v4879
      %v4884 = vmul.u32 %v4878, %v4880
      %v4885 = vshll.u32 %v4882, 16
      %v4886 = vshrl.u32 %v4882, 16
      %v4887 = vshll.u32 %v4883, 16
      %v4888 = vshrl.u32 %v4883, 16
      %vm4889 = vc.u32 %v4881, %v4885
      %v4890 = vsel %vm4889, 1, 0
      %v4891 = vadd.s32 %v4881, %v4885
      %v4892 = vadd.s32 %v4884, %v4890
      %vm4893 = vc.u32 %v4891, %v4887
      %v4894 = vsel %vm4893, 1, 0
      %v4895 = vadd.s32 %v4891, %v4887
      %v4896 = vadd.s32 %v4892, %v4894
      %v4897 = vadd.s32 %v4896, %v4886
      %v4898 = vadd.s32 %v4897, %v4888
      %v4899 = vmul.u32 %v4854, %v4845
      %v4900 = vadd.s32 %v4876, %v4895
      %vm4901 = vc.u32 %v4876, %v4895
      %v4902 = vadd.s32 %v4898, 1
      %v4903 = vsel %vm4901, %v4902, %v4898
      %v4904 = vadd.s32 %v4899, %v4903
      %v4905 = vadd.s32 %v4904, 536870912
      %v4906 = vshrl.u32 %v4905, 30
      %v4907 = vshll.u32 %v4906, 30
      %v4908 = vsub.s32 %v4904, %v4907
      %vm4909 = vcmp.lt.s32.totalorder %v4908, 0
      %v4910 = vsub.s32 0, %v4908
      %v4911 = vsel %vm4909, %v4910, %v4908
      %v4912 = vclz %v4911
      %v4913 = vsub.s32 %v4912, 2
      %vm4914 = vcmp.gt.s32.totalorder 0, %v4913
      %v4915 = vsel %vm4914, 0, %v4913
      %v4916 = vsub.s32 32, %v4915
      %v4917 = vshll.u32 %v4908, %v4915
      %v4918 = vshrl.u32 %v4900, %v4916
      %v4919 = vor.u32 %v4917, %v4918
      %v4920 = vsub.s32 4294967266, %v4915
      %v4921 = vadd.s32 %v4920, 127
      %v4922 = vshll.u32 %v4921, 23
      %v4923 = vor.u32 4788187, %v4922
      %v4924 = vand.u32 2147483647, %v4923
      %v4926 = vcvt.s32.f32 %v4919
      %v4927 = vmul.f32 %v4926, %v4924
      %v4928 = vxor.u32 %v4927, 2147483648
      %v4929 = vsel %vm4808, %v4928, %v4927
      %v4930 = vsub.s32 4, %v4906
      %v4931 = vsel %vm4808, %v4930, %v4906
      %v4932 = vsel %vm4807, %v276, %v4929
      %v4933 = vsel %vm4807, 0, %v4931
      %v4934 = vmul.f32 %v4932, %v4932
      %v4935 = vmul.f32 %v4934, -0.001358992
      %v4936 = vadd.f32 %v4935, 0.041655596
      %v4937 = vmul.f32 %v4934, %v4936
      %v4938 = vadd.f32 %v4937, -0.4999988
      %v4939 = vmul.f32 %v4934, %v4938
      %v4940 = vadd.f32 1.0, %v4939
      %v4941 = vmul.f32 %v4932, %v4932
      %v4942 = vmul.f32 %v4941, -0.00019511016
      %v4943 = vadd.f32 %v4942, 0.008332121
      %v4944 = vmul.f32 %v4941, %v4943
      %v4945 = vadd.f32 %v4944, -0.16666654
      %v4946 = vmul.f32 %v4941, %v4945
      %v4947 = vadd.f32 %v4946, 1.0
      %v4948 = vmul.f32 %v4947, %v4932
      %vm4949 = vweird.f32 %v276
      %v4950 = vadd.s32 %v4933, 3
      %v4951 = vand.u32 %v4950, 3
      %vm4952 = vcmp.lt.s32.totalorder %v4951, 2
      %vm4953 = vcmp.eq.s32.totalorder %v4951, 0
      %v4954 = vxor.u32 %v4948, 2147483648
      %v4955 = vsel %vm4953, %v4940, %v4954
      %vm4956 = vcmp.eq.s32.totalorder %v4951, 2
      %v4957 = vxor.u32 %v4940, 2147483648
      %v4958 = vsel %vm4956, %v4957, %v4948
      %v4959 = vsel %vm4952, %v4955, %v4958
      %v4960 = vsel %vm4949, nan, %v4959
      %v4961 = vand.u32 2147483647, %v277
      %vm4962 = vcmp.le.f32.partialorder %v4961, 0.7853982
      %vm4963 = vcmp.lt.s32.totalorder %v277, 0
      %v4964 = vand.u32 %v277, 2139095040
      %v4965 = vshrl.u32 %v4964, 23
      %v4966 = vsub.s32 %v4965, 127
      %v4967 = vand.u32 2147483647, %v277
      %v4968 = vand.u32 %v4967, 8388607
      %v4969 = vor.u32 %v4968, 8388608
      %v4970 = vsub.s32 0, %v4969
      %v4971 = vadd.s32 %v4966, 1
      %vm4972 = vcmp.gt.s32.totalorder %v4971, 0
      %v4973 = vsel %vm4972, %v4971, 0
      %v4974 = vshrl.u32 %v4973, 5
      %v4975 = vand.u32 %v4973, 31
      %v4976 = vsub.s32 32, %v4975
      %v4977 = vshrl.u32 683565275, %v4976
      %v4978 = vshll.u32 683565275, %v4975
      %v4979 = vshrl.u32 2475754826, %v4976
      %v4980 = vor.u32 %v4978, %v4979
      %v4981 = vshll.u32 2475754826, %v4975
      %v4982 = vshrl.u32 2131351028, %v4976
      %v4983 = vor.u32 %v4981, %v4982
      %v4984 = vshll.u32 2131351028, %v4975
      %v4985 = vshrl.u32 2102212464, %v4976
      %v4986 = vor.u32 %v4984, %v4985
      %v4987 = vshll.u32 2102212464, %v4975
      %v4988 = vshrl.u32 920167782, %v4976
      %v4989 = vor.u32 %v4987, %v4988
      %v4990 = vshll.u32 920167782, %v4975
      %v4991 = vshrl.u32 1326507024, %v4976
      %v4992 = vor.u32 %v4990, %v4991
      %vm4993 = vcmp.lt.s32.totalorder %v4974, 1
      %vm4994 = vcmp.lt.s32.totalorder %v4974, 2
      %vm4995 = vcmp.lt.s32.totalorder %v4974, 3
      %vm4996 = vcmp.lt.s32.totalorder %v4974, 4
      %v4997 = vsel %vm4993, %v4977, %v4980
      %v4998 = vsel %vm4996, %v4986, 2102212464
      %v4999 = vsel %vm4995, %v4983, %v4998
      %v5000 = vsel %vm4994, %v4997, %v4999
      %v5001 = vsel %vm4993, %v4980, %v4983
      %v5002 = vsel %vm4996, %v4989, 920167782
      %v5003 = vsel %vm4995, %v4986, %v5002
      %v5004 = vsel %vm4994, %v5001, %v5003
      %v5005 = vsel %vm4993, %v4983, %v4986
      %v5006 = vsel %vm4996, %v4992, 1326507024
      %v5007 = vsel %vm4995, %v4989, %v5006
      %v5008 = vsel %vm4994, %v5005, %v5007
      %v5009 = vshll.u32 %v4969, 8
      %v5010 = vand.u32 %v5009, 65535
      %v5011 = vshrl.u32 %v5009, 16
      %v5012 = vand.u32 %v5008, 65535
      %v5013 = vshrl.u32 %v5008, 16
      %v5014 = vmul.u32 %v5010, %v5012
      %v5015 = vmul.u32 %v5010, %v5013
      %v5016 = vmul.u32 %v5011, %v5012
      %v5017 = vmul.u32 %v5011, %v5013
      %v5018 = vshll.u32 %v5015, 16
      %v5019 = vshrl.u32 %v5015, 16
      %v5020 = vshll.u32 %v5016, 16
      %v5021 = vshrl.u32 %v5016, 16
      %vm5022 = vc.u32 %v5014, %v5018
      %v5023 = vsel %vm5022, 1, 0
      %v5024 = vadd.s32 %v5014, %v5018
      %v5025 = vadd.s32 %v5017, %v5023
      %vm5026 = vc.u32 %v5024, %v5020
      %v5027 = vsel %vm5026, 1, 0
      %v5028 = vadd.s32 %v5024, %v5020
      %v5029 = vadd.s32 %v5025, %v5027
      %v5030 = vadd.s32 %v5029, %v5019
      %v5031 = vadd.s32 %v5030, %v5021
      %v5032 = vand.u32 %v5009, 65535
      %v5033 = vshrl.u32 %v5009, 16
      %v5034 = vand.u32 %v5004, 65535
      %v5035 = vshrl.u32 %v5004, 16
      %v5036 = vmul.u32 %v5032, %v5034
      %v5037 = vmul.u32 %v5032, %v5035
      %v5038 = vmul.u32 %v5033, %v5034
      %v5039 = vmul.u32 %v5033, %v5035
      %v5040 = vshll.u32 %v5037, 16
      %v5041 = vshrl.u32 %v5037, 16
      %v5042 = vshll.u32 %v5038, 16
      %v5043 = vshrl.u32 %v5038, 16
      %vm5044 = vc.u32 %v5036, %v5040
      %v5045 = vsel %vm5044, 1, 0
      %v5046 = vadd.s32 %v5036, %v5040
      %v5047 = vadd.s32 %v5039, %v5045
      %vm5048 = vc.u32 %v5046, %v5042
      %v5049 = vsel %vm5048, 1, 0
      %v5050 = vadd.s32 %v5046, %v5042
      %v5051 = vadd.s32 %v5047, %v5049
      %v5052 = vadd.s32 %v5051, %v5041
      %v5053 = vadd.s32 %v5052, %v5043
      %v5054 = vmul.u32 %v5009, %v5000
      %v5055 = vadd.s32 %v5031, %v5050
      %vm5056 = vc.u32 %v5031, %v5050
      %v5057 = vadd.s32 %v5053, 1
      %v5058 = vsel %vm5056, %v5057, %v5053
      %v5059 = vadd.s32 %v5054, %v5058
      %v5060 = vadd.s32 %v5059, 536870912
      %v5061 = vshrl.u32 %v5060, 30
      %v5062 = vshll.u32 %v5061, 30
      %v5063 = vsub.s32 %v5059, %v5062
      %vm5064 = vcmp.lt.s32.totalorder %v5063, 0
      %v5065 = vsub.s32 0, %v5063
      %v5066 = vsel %vm5064, %v5065, %v5063
      %v5067 = vclz %v5066
      %v5068 = vsub.s32 %v5067, 2
      %vm5069 = vcmp.gt.s32.totalorder 0, %v5068
      %v5070 = vsel %vm5069, 0, %v5068
      %v5071 = vsub.s32 32, %v5070
      %v5072 = vshll.u32 %v5063, %v5070
      %v5073 = vshrl.u32 %v5055, %v5071
      %v5074 = vor.u32 %v5072, %v5073
      %v5075 = vsub.s32 4294967266, %v5070
      %v5076 = vadd.s32 %v5075, 127
      %v5077 = vshll.u32 %v5076, 23
      %v5078 = vor.u32 4788187, %v5077
      %v5079 = vand.u32 2147483647, %v5078
      %v5081 = vcvt.s32.f32 %v5074
      %v5082 = vmul.f32 %v5081, %v5079
      %v5083 = vxor.u32 %v5082, 2147483648
      %v5084 = vsel %vm4963, %v5083, %v5082
      %v5085 = vsub.s32 4, %v5061
      %v5086 = vsel %vm4963, %v5085, %v5061
      %v5087 = vsel %vm4962, %v277, %v5084
      %v5088 = vsel %vm4962, 0, %v5086
      %v5089 = vmul.f32 %v5087, %v5087
      %v5090 = vmul.f32 %v5089, -0.001358992
      %v5091 = vadd.f32 %v5090, 0.041655596
      %v5092 = vmul.f32 %v5089, %v5091
      %v5093 = vadd.f32 %v5092, -0.4999988
      %v5094 = vmul.f32 %v5089, %v5093
      %v5095 = vadd.f32 1.0, %v5094
      %v5096 = vmul.f32 %v5087, %v5087
      %v5097 = vmul.f32 %v5096, -0.00019511016
      %v5098 = vadd.f32 %v5097, 0.008332121
      %v5099 = vmul.f32 %v5096, %v5098
      %v5100 = vadd.f32 %v5099, -0.16666654
      %v5101 = vmul.f32 %v5096, %v5100
      %v5102 = vadd.f32 %v5101, 1.0
      %v5103 = vmul.f32 %v5102, %v5087
      %vm5104 = vweird.f32 %v277
      %v5105 = vadd.s32 %v5088, 3
      %v5106 = vand.u32 %v5105, 3
      %vm5107 = vcmp.lt.s32.totalorder %v5106, 2
      %vm5108 = vcmp.eq.s32.totalorder %v5106, 0
      %v5109 = vxor.u32 %v5103, 2147483648
      %v5110 = vsel %vm5108, %v5095, %v5109
      %vm5111 = vcmp.eq.s32.totalorder %v5106, 2
      %v5112 = vxor.u32 %v5095, 2147483648
      %v5113 = vsel %vm5111, %v5112, %v5103
      %v5114 = vsel %vm5107, %v5110, %v5113
      %v5115 = vsel %vm5104, nan, %v5114
      %v5116 = vand.u32 2147483647, %v278
      %vm5117 = vcmp.le.f32.partialorder %v5116, 0.7853982
      %vm5118 = vcmp.lt.s32.totalorder %v278, 0
      %v5119 = vand.u32 %v278, 2139095040
      %v5120 = vshrl.u32 %v5119, 23
      %v5121 = vsub.s32 %v5120, 127
      %v5122 = vand.u32 2147483647, %v278
      %v5123 = vand.u32 %v5122, 8388607
      %v5124 = vor.u32 %v5123, 8388608
      %v5125 = vsub.s32 0, %v5124
      %v5126 = vadd.s32 %v5121, 1
      %vm5127 = vcmp.gt.s32.totalorder %v5126, 0
      %v5128 = vsel %vm5127, %v5126, 0
      %v5129 = vshrl.u32 %v5128, 5
      %v5130 = vand.u32 %v5128, 31
      %v5131 = vsub.s32 32, %v5130
      %v5132 = vshrl.u32 683565275, %v5131
      %v5133 = vshll.u32 683565275, %v5130
      %v5134 = vshrl.u32 2475754826, %v5131
      %v5135 = vor.u32 %v5133, %v5134
      %v5136 = vshll.u32 2475754826, %v5130
      %v5137 = vshrl.u32 2131351028, %v5131
      %v5138 = vor.u32 %v5136, %v5137
      %v5139 = vshll.u32 2131351028, %v5130
      %v5140 = vshrl.u32 2102212464, %v5131
      %v5141 = vor.u32 %v5139, %v5140
      %v5142 = vshll.u32 2102212464, %v5130
      %v5143 = vshrl.u32 920167782, %v5131
      %v5144 = vor.u32 %v5142, %v5143
      %v5145 = vshll.u32 920167782, %v5130
      %v5146 = vshrl.u32 1326507024, %v5131
      %v5147 = vor.u32 %v5145, %v5146
      %vm5148 = vcmp.lt.s32.totalorder %v5129, 1
      %vm5149 = vcmp.lt.s32.totalorder %v5129, 2
      %vm5150 = vcmp.lt.s32.totalorder %v5129, 3
      %vm5151 = vcmp.lt.s32.totalorder %v5129, 4
      %v5152 = vsel %vm5148, %v5132, %v5135
      %v5153 = vsel %vm5151, %v5141, 2102212464
      %v5154 = vsel %vm5150, %v5138, %v5153
      %v5155 = vsel %vm5149, %v5152, %v5154
      %v5156 = vsel %vm5148, %v5135, %v5138
      %v5157 = vsel %vm5151, %v5144, 920167782
      %v5158 = vsel %vm5150, %v5141, %v5157
      %v5159 = vsel %vm5149, %v5156, %v5158
      %v5160 = vsel %vm5148, %v5138, %v5141
      %v5161 = vsel %vm5151, %v5147, 1326507024
      %v5162 = vsel %vm5150, %v5144, %v5161
      %v5163 = vsel %vm5149, %v5160, %v5162
      %v5164 = vshll.u32 %v5124, 8
      %v5165 = vand.u32 %v5164, 65535
      %v5166 = vshrl.u32 %v5164, 16
      %v5167 = vand.u32 %v5163, 65535
      %v5168 = vshrl.u32 %v5163, 16
      %v5169 = vmul.u32 %v5165, %v5167
      %v5170 = vmul.u32 %v5165, %v5168
      %v5171 = vmul.u32 %v5166, %v5167
      %v5172 = vmul.u32 %v5166, %v5168
      %v5173 = vshll.u32 %v5170, 16
      %v5174 = vshrl.u32 %v5170, 16
      %v5175 = vshll.u32 %v5171, 16
      %v5176 = vshrl.u32 %v5171, 16
      %vm5177 = vc.u32 %v5169, %v5173
      %v5178 = vsel %vm5177, 1, 0
      %v5179 = vadd.s32 %v5169, %v5173
      %v5180 = vadd.s32 %v5172, %v5178
      %vm5181 = vc.u32 %v5179, %v5175
      %v5182 = vsel %vm5181, 1, 0
      %v5183 = vadd.s32 %v5179, %v5175
      %v5184 = vadd.s32 %v5180, %v5182
      %v5185 = vadd.s32 %v5184, %v5174
      %v5186 = vadd.s32 %v5185, %v5176
      %v5187 = vand.u32 %v5164, 65535
      %v5188 = vshrl.u32 %v5164, 16
      %v5189 = vand.u32 %v5159, 65535
      %v5190 = vshrl.u32 %v5159, 16
      %v5191 = vmul.u32 %v5187, %v5189
      %v5192 = vmul.u32 %v5187, %v5190
      %v5193 = vmul.u32 %v5188, %v5189
      %v5194 = vmul.u32 %v5188, %v5190
      %v5195 = vshll.u32 %v5192, 16
      %v5196 = vshrl.u32 %v5192, 16
      %v5197 = vshll.u32 %v5193, 16
      %v5198 = vshrl.u32 %v5193, 16
      %vm5199 = vc.u32 %v5191, %v5195
      %v5200 = vsel %vm5199, 1, 0
      %v5201 = vadd.s32 %v5191, %v5195
      %v5202 = vadd.s32 %v5194, %v5200
      %vm5203 = vc.u32 %v5201, %v5197
      %v5204 = vsel %vm5203, 1, 0
      %v5205 = vadd.s32 %v5201, %v5197
      %v5206 = vadd.s32 %v5202, %v5204
      %v5207 = vadd.s32 %v5206, %v5196
      %v5208 = vadd.s32 %v5207, %v5198
      %v5209 = vmul.u32 %v5164, %v5155
      %v5210 = vadd.s32 %v5186, %v5205
      %vm5211 = vc.u32 %v5186, %v5205
      %v5212 = vadd.s32 %v5208, 1
      %v5213 = vsel %vm5211, %v5212, %v5208
      %v5214 = vadd.s32 %v5209, %v5213
      %v5215 = vadd.s32 %v5214, 536870912
      %v5216 = vshrl.u32 %v5215, 30
      %v5217 = vshll.u32 %v5216, 30
      %v5218 = vsub.s32 %v5214, %v5217
      %vm5219 = vcmp.lt.s32.totalorder %v5218, 0
      %v5220 = vsub.s32 0, %v5218
      %v5221 = vsel %vm5219, %v5220, %v5218
      %v5222 = vclz %v5221
      %v5223 = vsub.s32 %v5222, 2
      %vm5224 = vcmp.gt.s32.totalorder 0, %v5223
      %v5225 = vsel %vm5224, 0, %v5223
      %v5226 = vsub.s32 32, %v5225
      %v5227 = vshll.u32 %v5218, %v5225
      %v5228 = vshrl.u32 %v5210, %v5226
      %v5229 = vor.u32 %v5227, %v5228
      %v5230 = vsub.s32 4294967266, %v5225
      %v5231 = vadd.s32 %v5230, 127
      %v5232 = vshll.u32 %v5231, 23
      %v5233 = vor.u32 4788187, %v5232
      %v5234 = vand.u32 2147483647, %v5233
      %v5236 = vcvt.s32.f32 %v5229
      %v5237 = vmul.f32 %v5236, %v5234
      %v5238 = vxor.u32 %v5237, 2147483648
      %v5239 = vsel %vm5118, %v5238, %v5237
      %v5240 = vsub.s32 4, %v5216
      %v5241 = vsel %vm5118, %v5240, %v5216
      %v5242 = vsel %vm5117, %v278, %v5239
      %v5243 = vsel %vm5117, 0, %v5241
      %v5244 = vmul.f32 %v5242, %v5242
      %v5245 = vmul.f32 %v5244, -0.001358992
      %v5246 = vadd.f32 %v5245, 0.041655596
      %v5247 = vmul.f32 %v5244, %v5246
      %v5248 = vadd.f32 %v5247, -0.4999988
      %v5249 = vmul.f32 %v5244, %v5248
      %v5250 = vadd.f32 1.0, %v5249
      %v5251 = vmul.f32 %v5242, %v5242
      %v5252 = vmul.f32 %v5251, -0.00019511016
      %v5253 = vadd.f32 %v5252, 0.008332121
      %v5254 = vmul.f32 %v5251, %v5253
      %v5255 = vadd.f32 %v5254, -0.16666654
      %v5256 = vmul.f32 %v5251, %v5255
      %v5257 = vadd.f32 %v5256, 1.0
      %v5258 = vmul.f32 %v5257, %v5242
      %vm5259 = vweird.f32 %v278
      %v5260 = vadd.s32 %v5243, 3
      %v5261 = vand.u32 %v5260, 3
      %vm5262 = vcmp.lt.s32.totalorder %v5261, 2
      %vm5263 = vcmp.eq.s32.totalorder %v5261, 0
      %v5264 = vxor.u32 %v5258, 2147483648
      %v5265 = vsel %vm5263, %v5250, %v5264
      %vm5266 = vcmp.eq.s32.totalorder %v5261, 2
      %v5267 = vxor.u32 %v5250, 2147483648
      %v5268 = vsel %vm5266, %v5267, %v5258
      %v5269 = vsel %vm5262, %v5265, %v5268
      %v5270 = vsel %vm5259, nan, %v5269
      %v5271 = vmul.f32 %v280, %v2945
      %v5272 = vmul.f32 %v282, %v3100
      %v5273 = vmul.f32 %v284, %v3255
      %v5274 = vmul.f32 %v286, %v3410
      %v5275 = vmul.f32 %v288, %v3565
      %v5276 = vmul.f32 %v290, %v3720
      %v5277 = vmul.f32 %v292, %v3875
      %v5278 = vmul.f32 %v294, %v4030
      %v5279 = vmul.f32 %v296, %v4185
      %v5280 = vmul.f32 %v298, %v4340
      %v5281 = vmul.f32 %v300, %v4495
      %v5282 = vmul.f32 %v302, %v4650
      %v5283 = vmul.f32 %v304, %v4805
      %v5284 = vmul.f32 %v306, %v4960
      %v5285 = vmul.f32 %v308, %v5115
      %v5286 = vmul.f32 %v310, %v5270
      %v5287 = vperm.slane %v36, 0
      %v5288 = vlaneseq
      %v5289 = vshrl.u32 %v5288, 7
      %5291 = vset.pattern.permute.xlu0 %v5289
      %5292 = vperm.xlu0 %5291, %v5287
      %v5293 = vpop.permute.xlu0 %5292
      %v5294 = vlaneseq
      %v5295 = vshrl.u32 %v5294, 7
      %v5296 = vadd.s32 %v5295, 8
      %5297 = vset.pattern.permute.xlu0 %v5296
      %5298 = vperm.xlu0 %5297, %v5287
      %v5299 = vpop.permute.xlu0 %5298
      %v5300 = vperm.slane %v36, 1
      %v5301 = vlaneseq
      %v5302 = vshrl.u32 %v5301, 7
      %5304 = vset.pattern.permute.xlu0 %v5302
      %5305 = vperm.xlu0 %5304, %v5300
      %v5306 = vpop.permute.xlu0 %5305
      %v5307 = vlaneseq
      %v5308 = vshrl.u32 %v5307, 7
      %v5309 = vadd.s32 %v5308, 8
      %5310 = vset.pattern.permute.xlu0 %v5309
      %5311 = vperm.xlu0 %5310, %v5300
      %v5312 = vpop.permute.xlu0 %5311
      %v5313 = vperm.slane %v36, 2
      %v5314 = vlaneseq
      %v5315 = vshrl.u32 %v5314, 7
      %5317 = vset.pattern.permute.xlu0 %v5315
      %5318 = vperm.xlu0 %5317, %v5313
      %v5319 = vpop.permute.xlu0 %5318
      %v5320 = vlaneseq
      %v5321 = vshrl.u32 %v5320, 7
      %v5322 = vadd.s32 %v5321, 8
      %5323 = vset.pattern.permute.xlu0 %v5322
      %5324 = vperm.xlu0 %5323, %v5313
      %v5325 = vpop.permute.xlu0 %5324
      %v5326 = vperm.slane %v36, 3
      %v5327 = vlaneseq
      %v5328 = vshrl.u32 %v5327, 7
      %5330 = vset.pattern.permute.xlu0 %v5328
      %5331 = vperm.xlu0 %5330, %v5326
      %v5332 = vpop.permute.xlu0 %5331
      %v5333 = vlaneseq
      %v5334 = vshrl.u32 %v5333, 7
      %v5335 = vadd.s32 %v5334, 8
      %5336 = vset.pattern.permute.xlu0 %v5335
      %5337 = vperm.xlu0 %5336, %v5326
      %v5338 = vpop.permute.xlu0 %5337
      %v5339 = vperm.slane %v36, 4
      %v5340 = vlaneseq
      %v5341 = vshrl.u32 %v5340, 7
      %5343 = vset.pattern.permute.xlu0 %v5341
      %5344 = vperm.xlu0 %5343, %v5339
      %v5345 = vpop.permute.xlu0 %5344
      %v5346 = vlaneseq
      %v5347 = vshrl.u32 %v5346, 7
      %v5348 = vadd.s32 %v5347, 8
      %5349 = vset.pattern.permute.xlu0 %v5348
      %5350 = vperm.xlu0 %5349, %v5339
      %v5351 = vpop.permute.xlu0 %5350
      %v5352 = vperm.slane %v36, 5
      %v5353 = vlaneseq
      %v5354 = vshrl.u32 %v5353, 7
      %5356 = vset.pattern.permute.xlu0 %v5354
      %5357 = vperm.xlu0 %5356, %v5352
      %v5358 = vpop.permute.xlu0 %5357
      %v5359 = vlaneseq
      %v5360 = vshrl.u32 %v5359, 7
      %v5361 = vadd.s32 %v5360, 8
      %5362 = vset.pattern.permute.xlu0 %v5361
      %5363 = vperm.xlu0 %5362, %v5352
      %v5364 = vpop.permute.xlu0 %5363
      %v5365 = vperm.slane %v36, 6
      %v5366 = vlaneseq
      %v5367 = vshrl.u32 %v5366, 7
      %5369 = vset.pattern.permute.xlu0 %v5367
      %5370 = vperm.xlu0 %5369, %v5365
      %v5371 = vpop.permute.xlu0 %5370
      %v5372 = vlaneseq
      %v5373 = vshrl.u32 %v5372, 7
      %v5374 = vadd.s32 %v5373, 8
      %5375 = vset.pattern.permute.xlu0 %v5374
      %5376 = vperm.xlu0 %5375, %v5365
      %v5377 = vpop.permute.xlu0 %5376
      %v5378 = vperm.slane %v36, 7
      %v5379 = vlaneseq
      %v5380 = vshrl.u32 %v5379, 7
      %5382 = vset.pattern.permute.xlu0 %v5380
      %5383 = vperm.xlu0 %5382, %v5378
      %v5384 = vpop.permute.xlu0 %5383
      %v5385 = vlaneseq
      %v5386 = vshrl.u32 %v5385, 7
      %v5387 = vadd.s32 %v5386, 8
      %5388 = vset.pattern.permute.xlu0 %v5387
      %5389 = vperm.xlu0 %5388, %v5378
      %v5390 = vpop.permute.xlu0 %5389
      %v5391 = vmul.f32 %v5293, %v2775
      %v5392 = vmul.f32 %v5299, %v2776
      %v5393 = vmul.f32 %v5306, %v2777
      %v5394 = vmul.f32 %v5312, %v2778
      %v5395 = vmul.f32 %v5319, %v2779
      %v5396 = vmul.f32 %v5325, %v2780
      %v5397 = vmul.f32 %v5332, %v2781
      %v5398 = vmul.f32 %v5338, %v2782
      %v5399 = vmul.f32 %v5345, %v2783
      %v5400 = vmul.f32 %v5351, %v2784
      %v5401 = vmul.f32 %v5358, %v2785
      %v5402 = vmul.f32 %v5364, %v2786
      %v5403 = vmul.f32 %v5371, %v2787
      %v5404 = vmul.f32 %v5377, %v2788
      %v5405 = vmul.f32 %v5384, %v2789
      %v5406 = vmul.f32 %v5390, %v2790
      %v5407 = vperm.slane %v38, 0
      %v5408 = vlaneseq
      %v5409 = vshrl.u32 %v5408, 7
      %5411 = vset.pattern.permute.xlu0 %v5409
      %5412 = vperm.xlu0 %5411, %v5407
      %v5413 = vpop.permute.xlu0 %5412
      %v5414 = vlaneseq
      %v5415 = vshrl.u32 %v5414, 7
      %v5416 = vadd.s32 %v5415, 8
      %5417 = vset.pattern.permute.xlu0 %v5416
      %5418 = vperm.xlu0 %5417, %v5407
      %v5419 = vpop.permute.xlu0 %5418
      %v5420 = vperm.slane %v38, 1
      %v5421 = vlaneseq
      %v5422 = vshrl.u32 %v5421, 7
      %5424 = vset.pattern.permute.xlu0 %v5422
      %5425 = vperm.xlu0 %5424, %v5420
      %v5426 = vpop.permute.xlu0 %5425
      %v5427 = vlaneseq
      %v5428 = vshrl.u32 %v5427, 7
      %v5429 = vadd.s32 %v5428, 8
      %5430 = vset.pattern.permute.xlu0 %v5429
      %5431 = vperm.xlu0 %5430, %v5420
      %v5432 = vpop.permute.xlu0 %5431
      %v5433 = vperm.slane %v38, 2
      %v5434 = vlaneseq
      %v5435 = vshrl.u32 %v5434, 7
      %5437 = vset.pattern.permute.xlu0 %v5435
      %5438 = vperm.xlu0 %5437, %v5433
      %v5439 = vpop.permute.xlu0 %5438
      %v5440 = vlaneseq
      %v5441 = vshrl.u32 %v5440, 7
      %v5442 = vadd.s32 %v5441, 8
      %5443 = vset.pattern.permute.xlu0 %v5442
      %5444 = vperm.xlu0 %5443, %v5433
      %v5445 = vpop.permute.xlu0 %5444
      %v5446 = vperm.slane %v38, 3
      %v5447 = vlaneseq
      %v5448 = vshrl.u32 %v5447, 7
      %5450 = vset.pattern.permute.xlu0 %v5448
      %5451 = vperm.xlu0 %5450, %v5446
      %v5452 = vpop.permute.xlu0 %5451
      %v5453 = vlaneseq
      %v5454 = vshrl.u32 %v5453, 7
      %v5455 = vadd.s32 %v5454, 8
      %5456 = vset.pattern.permute.xlu0 %v5455
      %5457 = vperm.xlu0 %5456, %v5446
      %v5458 = vpop.permute.xlu0 %5457
      %v5459 = vperm.slane %v38, 4
      %v5460 = vlaneseq
      %v5461 = vshrl.u32 %v5460, 7
      %5463 = vset.pattern.permute.xlu0 %v5461
      %5464 = vperm.xlu0 %5463, %v5459
      %v5465 = vpop.permute.xlu0 %5464
      %v5466 = vlaneseq
      %v5467 = vshrl.u32 %v5466, 7
      %v5468 = vadd.s32 %v5467, 8
      %5469 = vset.pattern.permute.xlu0 %v5468
      %5470 = vperm.xlu0 %5469, %v5459
      %v5471 = vpop.permute.xlu0 %5470
      %v5472 = vperm.slane %v38, 5
      %v5473 = vlaneseq
      %v5474 = vshrl.u32 %v5473, 7
      %5476 = vset.pattern.permute.xlu0 %v5474
      %5477 = vperm.xlu0 %5476, %v5472
      %v5478 = vpop.permute.xlu0 %5477
      %v5479 = vlaneseq
      %v5480 = vshrl.u32 %v5479, 7
      %v5481 = vadd.s32 %v5480, 8
      %5482 = vset.pattern.permute.xlu0 %v5481
      %5483 = vperm.xlu0 %5482, %v5472
      %v5484 = vpop.permute.xlu0 %5483
      %v5485 = vperm.slane %v38, 6
      %v5486 = vlaneseq
      %v5487 = vshrl.u32 %v5486, 7
      %5489 = vset.pattern.permute.xlu0 %v5487
      %5490 = vperm.xlu0 %5489, %v5485
      %v5491 = vpop.permute.xlu0 %5490
      %v5492 = vlaneseq
      %v5493 = vshrl.u32 %v5492, 7
      %v5494 = vadd.s32 %v5493, 8
      %5495 = vset.pattern.permute.xlu0 %v5494
      %5496 = vperm.xlu0 %5495, %v5485
      %v5497 = vpop.permute.xlu0 %5496
      %v5498 = vperm.slane %v38, 7
      %v5499 = vlaneseq
      %v5500 = vshrl.u32 %v5499, 7
      %5502 = vset.pattern.permute.xlu0 %v5500
      %5503 = vperm.xlu0 %5502, %v5498
      %v5504 = vpop.permute.xlu0 %5503
      %v5505 = vlaneseq
      %v5506 = vshrl.u32 %v5505, 7
      %v5507 = vadd.s32 %v5506, 8
      %5508 = vset.pattern.permute.xlu0 %v5507
      %5509 = vperm.xlu0 %5508, %v5498
      %v5510 = vpop.permute.xlu0 %5509
      %v5511 = vmul.f32 %v5413, %v5271
      %v5512 = vmul.f32 %v5419, %v5272
      %v5513 = vmul.f32 %v5426, %v5273
      %v5514 = vmul.f32 %v5432, %v5274
      %v5515 = vmul.f32 %v5439, %v5275
      %v5516 = vmul.f32 %v5445, %v5276
      %v5517 = vmul.f32 %v5452, %v5277
      %v5518 = vmul.f32 %v5458, %v5278
      %v5519 = vmul.f32 %v5465, %v5279
      %v5520 = vmul.f32 %v5471, %v5280
      %v5521 = vmul.f32 %v5478, %v5281
      %v5522 = vmul.f32 %v5484, %v5282
      %v5523 = vmul.f32 %v5491, %v5283
      %v5524 = vmul.f32 %v5497, %v5284
      %v5525 = vmul.f32 %v5504, %v5285
      %v5526 = vmul.f32 %v5510, %v5286
      %v5527 = vsub.f32 %v5391, %v5511
      %v5528 = vsub.f32 %v5392, %v5512
      %v5529 = vsub.f32 %v5393, %v5513
      %v5530 = vsub.f32 %v5394, %v5514
      %v5531 = vsub.f32 %v5395, %v5515
      %v5532 = vsub.f32 %v5396, %v5516
      %v5533 = vsub.f32 %v5397, %v5517
      %v5534 = vsub.f32 %v5398, %v5518
      %v5535 = vsub.f32 %v5399, %v5519
      %v5536 = vsub.f32 %v5400, %v5520
      %v5537 = vsub.f32 %v5401, %v5521
      %v5538 = vsub.f32 %v5402, %v5522
      %v5539 = vsub.f32 %v5403, %v5523
      %v5540 = vsub.f32 %v5404, %v5524
      %v5541 = vsub.f32 %v5405, %v5525
      %v5542 = vsub.f32 %v5406, %v5526
      %v5543 = vadd.f32 %v5527, %v5528
      %v5544 = vrot.slane %v5543, 4
      %v5545 = vadd.f32 %v5543, %v5544
      %v5546 = vrot.slane %v5545, 2
      %v5547 = vadd.f32 %v5545, %v5546
      %v5548 = vrot.slane %v5547, 1
      %v5549 = vadd.f32 %v5547, %v5548
      %v5550 = vadd.f32 %v5529, %v5530
      %v5551 = vrot.slane %v5550, 4
      %v5552 = vadd.f32 %v5550, %v5551
      %v5553 = vrot.slane %v5552, 2
      %v5554 = vadd.f32 %v5552, %v5553
      %v5555 = vrot.slane %v5554, 1
      %v5556 = vadd.f32 %v5554, %v5555
      %v5557 = vadd.f32 %v5531, %v5532
      %v5558 = vrot.slane %v5557, 4
      %v5559 = vadd.f32 %v5557, %v5558
      %v5560 = vrot.slane %v5559, 2
      %v5561 = vadd.f32 %v5559, %v5560
      %v5562 = vrot.slane %v5561, 1
      %v5563 = vadd.f32 %v5561, %v5562
      %v5564 = vadd.f32 %v5533, %v5534
      %v5565 = vrot.slane %v5564, 4
      %v5566 = vadd.f32 %v5564, %v5565
      %v5567 = vrot.slane %v5566, 2
      %v5568 = vadd.f32 %v5566, %v5567
      %v5569 = vrot.slane %v5568, 1
      %v5570 = vadd.f32 %v5568, %v5569
      %v5571 = vadd.f32 %v5535, %v5536
      %v5572 = vrot.slane %v5571, 4
      %v5573 = vadd.f32 %v5571, %v5572
      %v5574 = vrot.slane %v5573, 2
      %v5575 = vadd.f32 %v5573, %v5574
      %v5576 = vrot.slane %v5575, 1
      %v5577 = vadd.f32 %v5575, %v5576
      %v5578 = vadd.f32 %v5537, %v5538
      %v5579 = vrot.slane %v5578, 4
      %v5580 = vadd.f32 %v5578, %v5579
      %v5581 = vrot.slane %v5580, 2
      %v5582 = vadd.f32 %v5580, %v5581
      %v5583 = vrot.slane %v5582, 1
      %v5584 = vadd.f32 %v5582, %v5583
      %v5585 = vadd.f32 %v5539, %v5540
      %v5586 = vrot.slane %v5585, 4
      %v5587 = vadd.f32 %v5585, %v5586
      %v5588 = vrot.slane %v5587, 2
      %v5589 = vadd.f32 %v5587, %v5588
      %v5590 = vrot.slane %v5589, 1
      %v5591 = vadd.f32 %v5589, %v5590
      %v5592 = vadd.f32 %v5541, %v5542
      %v5593 = vrot.slane %v5592, 4
      %v5594 = vadd.f32 %v5592, %v5593
      %v5595 = vrot.slane %v5594, 2
      %v5596 = vadd.f32 %v5594, %v5595
      %v5597 = vrot.slane %v5596, 1
      %v5598 = vadd.f32 %v5596, %v5597
      %vm5607 = vcmask 1041409
      %v5608 = vsel %vm5607, %v5556, %v5549
      %vm5609 = vcmask 1042434
      %v5610 = vsel %vm5609, %v5563, %v5608
      %vm5611 = vcmask 1043459
      %v5612 = vsel %vm5611, %v5570, %v5610
      %vm5613 = vcmask 1044484
      %v5614 = vsel %vm5613, %v5577, %v5612
      %vm5615 = vcmask 1045509
      %v5616 = vsel %vm5615, %v5584, %v5614
      %vm5617 = vcmask 1046534
      %v5618 = vsel %vm5617, %v5591, %v5616
      %vm5619 = vcmask 1047559
      %v5620 = vsel %vm5619, %v5598, %v5618
      %s5622 = sadd.s32 0, %s30
      %s5623 = scalar_lea.vmem [#allocation2], %s5622
      %5624 = vst [vmem:[%s5623] sm:$0xff] %v5620
    $region22: #{tpu_custom_call.1} parent=1 // loop_footer
      %s29 = sadd.s32 1, %s25
    $region23: #{tpu_custom_call.1} parent=1 // loop_footer_branch
      %24 = sbr.rel target = $region19
    $region24: #{tpu_custom_call.1} parent=1 // loop_exit
      _
    // Predicated region
    $region25: #{tpu_custom_call.1} parent=1 // pred_check
      _
    $region26: #{tpu_custom_call.1} parent=1 // pred_check_branch
      %5626 = sbr.rel (0) target = $region28
    $region27: #{tpu_custom_call.1} parent=1 // pred_region
      %5628 = vsyncadd [#allocation3], 0
      %s5629 = sshll.u32 [#allocation2], 4
      %s5630 = int_to_ptr.vmem [resolvable:$true] %s5629
      %s5631 = sshll.u32 %s4, 4
      %s5632 = int_to_ptr.hbm [resolvable:$true] %s5631
      %5637 = dma.vmem_to_hbm [thread:$0]  %s5630, 512, %s5632, [#allocation3], 128, 128, 8
    $region28: #{tpu_custom_call.1} parent=1 // pred_fallthru
      _
    // Predicated region
    $region29: #{tpu_custom_call.1} parent=1 // pred_check
      _
    $region30: #{tpu_custom_call.1} parent=1 // pred_check_branch
      %5639 = sbr.rel (0) target = $region32
    $region31: #{tpu_custom_call.1} parent=1 // pred_region
      %5641 = dma.done [#allocation3], 512
    $region32: #{tpu_custom_call.1} parent=1 // pred_fallthru
      _
    %5642 = vsyncpa [#allocation3], 1

</llo_original>
